<compile_context>
chip_gen: v7x
topology: tpu7x:2x2x1
jax: 0.10.0
libtpu: 0.0.40
codegen_flags: <defaults>
</compile_context>

<pallas_src>
import functools
import numpy as np

import jax
import jax.numpy as jnp
from jax.experimental import pallas as pl
from jax.experimental.pallas import tpu as pltpu


# ----------------------------- config ---------------------------------------
class Args:
    n_layers = 2
    n_heads = 4
    d_model = 32
    d_k = 8
    d_v = 8
    d_feedforward = 64
    std_rate = 0.5


LN_EPS = 1e-5  # torch.nn.LayerNorm default


# ----------------------------- helpers ---------------------------------------
def _layernorm(x, gamma, beta):
    # torch LayerNorm: biased variance over last dim
    mean = jnp.mean(x, axis=-1, keepdims=True)
    var = jnp.mean((x - mean) ** 2, axis=-1, keepdims=True)
    return (x - mean) * jax.lax.rsqrt(var + LN_EPS) * gamma + beta


# ----------------------------- fused kernel ----------------------------------
def decoder_stack_kernel(hs_ref, maskb_ref, wqkv_ref, wo_ref, w1_ref, w2_ref,
                         ln_ref, out_ref, attn_ref,
                         *, n_layers, n_heads, d_k, d_v):
    """One grid step = one batch element; all L layers run in-body."""
    x = hs_ref[0]                                   # [T, D] float32
    mask_b = maskb_ref[0]                           # [T, T] additive bias (0 / -1e9)
    T = x.shape[0]

    k_off = n_heads * d_k
    v_off = 2 * n_heads * d_k

    for l in range(n_layers):                       # static unroll (L small)
        ln = ln_ref[l]                              # [4, D]: g1, b1, g2, b2

        # ---- fused Q/K/V projection: one fat MXU matmul (scale pre-folded
        #      into the W_Q columns in the wrapper).
        qkv = jnp.dot(x, wqkv_ref[l],
                      preferred_element_type=jnp.float32)   # [T, H*(dk+dk+dv)]

        # ---- multi-head attention (static unroll over the 4 heads)
        ctx_heads = []
        for h in range(n_heads):
            q_h = qkv[:, h * d_k:(h + 1) * d_k]                     # [T, dk]
            k_h = qkv[:, k_off + h * d_k:k_off + (h + 1) * d_k]     # [T, dk]
            v_h = qkv[:, v_off + h * d_v:v_off + (h + 1) * d_v]     # [T, dv]

            # contract q dim-1 with k dim-1 (no explicit k_h.T transpose)
            s_h = jax.lax.dot_general(
                q_h, k_h, (((1,), (1,)), ((), ())),
                preferred_element_type=jnp.float32)                 # [T, T]

            # torch's `self.attn` (scaled, pre-mask) -> store directly
            attn_ref[l, 0, h * T:(h + 1) * T, :] = s_h

            p_h = jax.nn.softmax(s_h + mask_b, axis=-1)             # masked softmax
            ctx_heads.append(jnp.dot(p_h, v_h,
                                     preferred_element_type=jnp.float32))  # [T, dv]

        # ---- single fat output projection over all heads
        ctx = jnp.concatenate(ctx_heads, axis=1)                    # [T, H*dv]
        proj = jnp.dot(ctx, wo_ref[l],
                       preferred_element_type=jnp.float32)          # [T, D]
        attn_out = _layernorm(proj + x, ln[0:1, :], ln[1:2, :])     # [T, D]

        # ---- position-wise feed-forward ----
        hmid = jnp.maximum(jnp.dot(attn_out, w1_ref[l],
                                   preferred_element_type=jnp.float32), 0.0)
        ffn = jnp.dot(hmid, w2_ref[l], preferred_element_type=jnp.float32)
        x = _layernorm(ffn + attn_out, ln[2:3, :], ln[3:4, :])

    out_ref[0] = x


def decoder_forward(hs, mask, layer_params, args):
    """Mirrors Decoder.forward: returns (hidden_state, [attn per layer])."""
    B, T, D = hs.shape
    H, dk, dv, F = args.n_heads, args.d_k, args.d_v, args.d_feedforward
    L = len(layer_params)
    qkv_w = H * (2 * dk + dv)
    inv_sqrt_dk = jnp.float32(1.0 / np.sqrt(dk))

    # ---- pack per-layer weights with a leading layer axis (all-L resident) ---
    wqkv = jnp.stack([
        jnp.concatenate([
            (p['wq'] * inv_sqrt_dk).transpose(1, 0, 2).reshape(D, H * dk),
            p['wk'].transpose(1, 0, 2).reshape(D, H * dk),
            p['wv'].transpose(1, 0, 2).reshape(D, H * dv)], axis=1)
        for p in layer_params])                                    # [L, D, qkv_w]
    wo = jnp.stack([p['wo'].reshape(H * dv, D) for p in layer_params])  # [L, H*dv, D]
    w1 = jnp.stack([p['w1'] for p in layer_params])                # [L, D, F]
    w2 = jnp.stack([p['w2'] for p in layer_params])                # [L, F, D]
    ln = jnp.stack([jnp.stack([p['ln1_g'], p['ln1_b'],
                               p['ln2_g'], p['ln2_b']], axis=0)
                    for p in layer_params])                        # [L, 4, D]

    # additive attention-mask bias, computed once for all layers
    mask_bias = mask.astype(jnp.float32) * jnp.float32(-1e9)       # [B, T, T]

    # advisory cost hint for XLA scheduling around this latency-bound call
    flops = B * L * 2 * (T * D * qkv_w + H * (T * T * dk + T * T * dv)
                         + T * (H * dv) * D + T * D * F + T * F * D)
    transcendentals = B * L * (H * T * T + 4 * T)
    bytes_accessed = 4 * (hs.size + mask_bias.size + wqkv.size + wo.size
                          + w1.size + w2.size + ln.size
                          + B * T * D + L * B * H * T * T)

    kernel = functools.partial(decoder_stack_kernel,
                               n_layers=L, n_heads=H, d_k=dk, d_v=dv)

    out, attn = pl.pallas_call(
        kernel,
        out_shape=(jax.ShapeDtypeStruct((B, T, D), jnp.float32),
                   jax.ShapeDtypeStruct((L, B, H * T, T), jnp.float32)),
        grid=(B,),
        in_specs=[
            pl.BlockSpec((1, T, D), lambda b: (b, 0, 0)),          # hidden_state
            pl.BlockSpec((1, T, T), lambda b: (b, 0, 0)),          # mask bias
            pl.BlockSpec((L, D, qkv_w), lambda b: (0, 0, 0)),      # fused W_QKV (all L)
            pl.BlockSpec((L, H * dv, D), lambda b: (0, 0, 0)),     # W_O (all L)
            pl.BlockSpec((L, D, F), lambda b: (0, 0, 0)),          # FFN W1 (all L)
            pl.BlockSpec((L, F, D), lambda b: (0, 0, 0)),          # FFN W2 (all L)
            pl.BlockSpec((L, 4, D), lambda b: (0, 0, 0)),          # LN params (all L)
        ],
        out_specs=[
            pl.BlockSpec((1, T, D), lambda b: (b, 0, 0)),              # final hidden
            pl.BlockSpec((L, 1, H * T, T), lambda b: (0, b, 0, 0)),    # attn, all L
        ],
        compiler_params=pltpu.CompilerParams(
            dimension_semantics=("parallel",)),    # v7x: one batch elem per TC
        cost_estimate=pl.CostEstimate(flops=flops,
                                      transcendentals=transcendentals,
                                      bytes_accessed=bytes_accessed),
    )(hs, mask_bias, wqkv, wo, w1, w2, ln)

    attn = attn.reshape(L, B, H, T, T)
    return out, [attn[i] for i in range(L)]


# ------------------------- mask construction (glue) -------------------------
def attn_mask_jax(token_ids):
    """token_ids: [B, T] int32.  Returns [B, T, T] float32 (>0 == masked)."""
    B, T = token_ids.shape
    pad = (token_ids == 0)[:, None, :]                          # [B, 1, T]
    pad = jnp.broadcast_to(pad, (B, T, T))
    subseq = jnp.triu(jnp.ones((T, T), jnp.int32), k=1)[None]   # [1, T, T]
    return ((pad.astype(jnp.int32) + subseq) > 0).astype(jnp.float32)


# ------------------------- deterministic parameter init ---------------------
def init_layer_params(key, args):
    D, H, dk, dv, dff = (args.d_model, args.n_heads, args.d_k, args.d_v,
                         args.d_feedforward)
    std_attn = D ** (-args.std_rate)
    std_fc = (H * dv) ** (-args.std_rate)
    std_ff1 = D ** (-args.std_rate)
    std_ff2 = dff ** (-args.std_rate)
    ks = jax.random.split(key, 6)
    return dict(
        wq=jax.random.normal(ks[0], (H, D, dk), jnp.float32) * std_attn,
        wk=jax.random.normal(ks[1], (H, D, dk), jnp.float32) * std_attn,
        wv=jax.random.normal(ks[2], (H, D, dv), jnp.float32) * std_attn,
        wo=jax.random.normal(ks[3], (H, dv, D), jnp.float32) * std_fc,
        ln1_g=jnp.ones((D,), jnp.float32),
        ln1_b=jnp.zeros((D,), jnp.float32),
        w1=jax.random.normal(ks[4], (D, dff), jnp.float32) * std_ff1,
        w2=jax.random.normal(ks[5], (dff, D), jnp.float32) * std_ff2,
        ln2_g=jnp.ones((D,), jnp.float32),
        ln2_b=jnp.zeros((D,), jnp.float32),
    )


# ------------------------- pure-JAX reference (for sanity) ------------------
def ref_layer(hs, mask, p):
    q = jnp.einsum('btd,hdk->bhtk', hs, p['wq'])
    k = jnp.einsum('btd,hdk->bhtk', hs, p['wk'])
    v = jnp.einsum('btd,hdv->bhtv', hs, p['wv'])
    scores = jnp.einsum('bhtk,bhsk->bhts', q, k) / np.sqrt(p['wq'].shape[-1])
    masked = jnp.where(mask[:, None] > 0, -1e9, scores)
    probs = jax.nn.softmax(masked, -1)
    ctx = jnp.einsum('bhts,bhsv->bhtv', probs, v)
    proj = jnp.einsum('bhtv,hvd->btd', ctx, p['wo'])
    x = _layernorm(proj + hs, p['ln1_g'], p['ln1_b'])
    h = jnp.maximum(jnp.einsum('btd,df->btf', x, p['w1']), 0.0)
    f = jnp.einsum('btf,fd->btd', h, p['w2'])
    return _layernorm(f + x, p['ln2_g'], p['ln2_b']), scores


# --------------------------------- main --------------------------------------
if __name__ == "__main__":
    args = Args()
    B, T = 2, 8

    key = jax.random.PRNGKey(0)
    k_hs, k_tok, k_par = jax.random.split(key, 3)

    hidden_state = jax.random.normal(k_hs, (B, T, args.d_model), jnp.float32)
    # synthetic token ids (trailing zeros exercise the pad mask)
    token_ids = jnp.array([[5, 3, 7, 2, 9, 0, 0, 0],
                           [1, 4, 6, 8, 2, 3, 5, 0]], jnp.int32)
    dec_self_attn_mask = attn_mask_jax(token_ids)               # [B, T, T]

    layer_keys = jax.random.split(k_par, args.n_layers)
    layer_params = [init_layer_params(k, args) for k in layer_keys]

    out, attns = decoder_forward(hidden_state, dec_self_attn_mask,
                                 layer_params, args)
    out = jax.block_until_ready(out)
    attns = [jax.block_until_ready(a) for a in attns]

    # lightweight correctness check against a pure-JAX reference
    hs_ref = hidden_state
    for i, p in enumerate(layer_params):
        hs_ref, attn_ref_i = ref_layer(hs_ref, dec_self_attn_mask, p)
        np.testing.assert_allclose(np.asarray(attns[i]), np.asarray(attn_ref_i),
                                   rtol=2e-4, atol=2e-4)
    np.testing.assert_allclose(np.asarray(out), np.asarray(hs_ref),
                               rtol=2e-4, atol=2e-4)

    print("KERNEL_OK")
</pallas_src>

<mosaic_0001>
module attributes {stable_mosaic.version = 11 : i64} {
  func.func @decoder_stack_kernel(%arg0: i32, %arg1: memref<1x8x32xf32, #tpu.memory_space<vmem>>, %arg2: memref<1x8x8xf32, #tpu.memory_space<vmem>>, %arg3: memref<2x32x96xf32, #tpu.memory_space<vmem>>, %arg4: memref<2x32x32xf32, #tpu.memory_space<vmem>>, %arg5: memref<2x32x64xf32, #tpu.memory_space<vmem>>, %arg6: memref<2x64x32xf32, #tpu.memory_space<vmem>>, %arg7: memref<2x4x32xf32, #tpu.memory_space<vmem>>, %arg8: memref<1x8x32xf32, #tpu.memory_space<vmem>>, %arg9: memref<2x1x32x8xf32, #tpu.memory_space<vmem>>) attributes {dimension_semantics = [#tpu.dimension_semantics<parallel>], iteration_bounds = array<i64: 2>, scalar_prefetch = 0 : i64, scratch_operands = 0 : i64, tpu.core_type = #tpu.core_type<tc>, window_params = [{transform_indices = @transform_0, window_bounds = array<i64: 1, 8, 32>}, {transform_indices = @transform_1, window_bounds = array<i64: 1, 8, 8>}, {pipeline_mode = #tpu.pipeline_mode<synchronous>, transform_indices = @transform_2, window_bounds = array<i64: 2, 32, 96>}, {pipeline_mode = #tpu.pipeline_mode<synchronous>, transform_indices = @transform_3, window_bounds = array<i64: 2, 32, 32>}, {pipeline_mode = #tpu.pipeline_mode<synchronous>, transform_indices = @transform_4, window_bounds = array<i64: 2, 32, 64>}, {pipeline_mode = #tpu.pipeline_mode<synchronous>, transform_indices = @transform_5, window_bounds = array<i64: 2, 64, 32>}, {pipeline_mode = #tpu.pipeline_mode<synchronous>, transform_indices = @transform_6, window_bounds = array<i64: 2, 4, 32>}, {transform_indices = @transform_7, window_bounds = array<i64: 1, 8, 32>}, {transform_indices = @transform_8, window_bounds = array<i64: 2, 1, 32, 8>}]} {
    %c0 = arith.constant 0 : index
    %c0_0 = arith.constant 0 : index
    %c0_1 = arith.constant 0 : index
    %0 = vector.load %arg1[%c0, %c0_0, %c0_1] : memref<1x8x32xf32, #tpu.memory_space<vmem>>, vector<1x8x32xf32>
    %1 = vector.shape_cast %0 : vector<1x8x32xf32> to vector<8x32xf32>
    %c0_2 = arith.constant 0 : index
    %c0_3 = arith.constant 0 : index
    %c0_4 = arith.constant 0 : index
    %2 = vector.load %arg2[%c0_2, %c0_3, %c0_4] : memref<1x8x8xf32, #tpu.memory_space<vmem>>, vector<1x8x8xf32>
    %3 = vector.shape_cast %2 : vector<1x8x8xf32> to vector<8x8xf32>
    %c0_5 = arith.constant 0 : index
    %c0_6 = arith.constant 0 : index
    %c0_7 = arith.constant 0 : index
    %4 = vector.load %arg7[%c0_5, %c0_6, %c0_7] : memref<2x4x32xf32, #tpu.memory_space<vmem>>, vector<1x4x32xf32>
    %5 = vector.shape_cast %4 : vector<1x4x32xf32> to vector<4x32xf32>
    %c0_8 = arith.constant 0 : index
    %c0_9 = arith.constant 0 : index
    %c0_10 = arith.constant 0 : index
    %6 = vector.load %arg3[%c0_8, %c0_9, %c0_10] : memref<2x32x96xf32, #tpu.memory_space<vmem>>, vector<1x32x96xf32>
    %7 = vector.shape_cast %6 : vector<1x32x96xf32> to vector<32x96xf32>
    %cst = arith.constant dense<0.000000e+00> : vector<8x96xf32>
    %8 = tpu.matmul %1, %7, %cst {dimension_numbers = #tpu.dot_dimension_numbers<[1], [0], [0], [1], [0, 0, 1, 1], [], []>} : vector<8x32xf32>, vector<32x96xf32>, vector<8x96xf32> -> vector<8x96xf32>
    %9 = vector.extract_strided_slice %8 {offsets = [0, 0], sizes = [8, 8], strides = [1, 1]} : vector<8x96xf32> to vector<8x8xf32>
    %10 = vector.extract_strided_slice %8 {offsets = [0, 32], sizes = [8, 8], strides = [1, 1]} : vector<8x96xf32> to vector<8x8xf32>
    %11 = vector.extract_strided_slice %8 {offsets = [0, 64], sizes = [8, 8], strides = [1, 1]} : vector<8x96xf32> to vector<8x8xf32>
    %cst_11 = arith.constant dense<0.000000e+00> : vector<8x8xf32>
    %12 = tpu.matmul %9, %10, %cst_11 {dimension_numbers = #tpu.dot_dimension_numbers<[1], [1], [0], [0], [0, 0, 1, 0], [], []>} : vector<8x8xf32>, vector<8x8xf32>, vector<8x8xf32> -> vector<8x8xf32>
    %c0_12 = arith.constant 0 : index
    %c0_13 = arith.constant 0 : index
    %c0_14 = arith.constant 0 : index
    %c0_15 = arith.constant 0 : index
    %13 = vector.load %arg9[%c0_12, %c0_13, %c0_14, %c0_15] : memref<2x1x32x8xf32, #tpu.memory_space<vmem>>, vector<1x1x8x8xf32>
    %14 = vector.shape_cast %13 : vector<1x1x8x8xf32> to vector<8x8xf32>
    %15 = vector.shape_cast %12 : vector<8x8xf32> to vector<1x1x8x8xf32>
    tpu.vector_store %arg9[%c0_12, %c0_13, %c0_14, %c0_15], %15 {strides = array<i32>} : memref<2x1x32x8xf32, #tpu.memory_space<vmem>>, vector<1x1x8x8xf32>,
    %16 = arith.addf %12, %3 : vector<8x8xf32>
    %cst_16 = arith.constant dense<0xFF800000> : vector<8xf32>
    %17 = vector.multi_reduction <maximumf>, %16, %cst_16 [1] : vector<8x8xf32> to vector<8xf32>
    %cst_17 = arith.constant 0xFF800000 : f32
    %18 = vector.broadcast %cst_17 : f32 to vector<8xf32>
    %19 = arith.maximumf %18, %17 : vector<8xf32>
    %20 = vector.shape_cast %19 : vector<8xf32> to vector<8x1xf32>
    %21 = vector.broadcast %20 : vector<8x1xf32> to vector<8x8xf32>
    %22 = arith.subf %16, %21 : vector<8x8xf32>
    %23 = math.exp %22 : vector<8x8xf32>
    %cst_18 = arith.constant dense<0.000000e+00> : vector<8xf32>
    %24 = vector.multi_reduction <add>, %23, %cst_18 [1] : vector<8x8xf32> to vector<8xf32>
    %25 = vector.shape_cast %24 : vector<8xf32> to vector<8x1xf32>
    %26 = vector.broadcast %25 : vector<8x1xf32> to vector<8x8xf32>
    %27 = arith.divf %23, %26 : vector<8x8xf32>
    %cst_19 = arith.constant dense<0.000000e+00> : vector<8x8xf32>
    %28 = tpu.matmul %27, %11, %cst_19 {dimension_numbers = #tpu.dot_dimension_numbers<[1], [0], [0], [1], [0, 0, 1, 1], [], []>} : vector<8x8xf32>, vector<8x8xf32>, vector<8x8xf32> -> vector<8x8xf32>
    %29 = vector.extract_strided_slice %8 {offsets = [0, 8], sizes = [8, 8], strides = [1, 1]} : vector<8x96xf32> to vector<8x8xf32>
    %30 = vector.extract_strided_slice %8 {offsets = [0, 40], sizes = [8, 8], strides = [1, 1]} : vector<8x96xf32> to vector<8x8xf32>
    %31 = vector.extract_strided_slice %8 {offsets = [0, 72], sizes = [8, 8], strides = [1, 1]} : vector<8x96xf32> to vector<8x8xf32>
    %cst_20 = arith.constant dense<0.000000e+00> : vector<8x8xf32>
    %32 = tpu.matmul %29, %30, %cst_20 {dimension_numbers = #tpu.dot_dimension_numbers<[1], [1], [0], [0], [0, 0, 1, 0], [], []>} : vector<8x8xf32>, vector<8x8xf32>, vector<8x8xf32> -> vector<8x8xf32>
    %c0_21 = arith.constant 0 : index
    %c0_22 = arith.constant 0 : index
    %c8 = arith.constant 8 : index
    %c0_23 = arith.constant 0 : index
    %33 = vector.load %arg9[%c0_21, %c0_22, %c8, %c0_23] : memref<2x1x32x8xf32, #tpu.memory_space<vmem>>, vector<1x1x8x8xf32>
    %34 = vector.shape_cast %33 : vector<1x1x8x8xf32> to vector<8x8xf32>
    %35 = vector.shape_cast %32 : vector<8x8xf32> to vector<1x1x8x8xf32>
    tpu.vector_store %arg9[%c0_21, %c0_22, %c8, %c0_23], %35 {strides = array<i32>} : memref<2x1x32x8xf32, #tpu.memory_space<vmem>>, vector<1x1x8x8xf32>,
    %36 = arith.addf %32, %3 : vector<8x8xf32>
    %cst_24 = arith.constant dense<0xFF800000> : vector<8xf32>
    %37 = vector.multi_reduction <maximumf>, %36, %cst_24 [1] : vector<8x8xf32> to vector<8xf32>
    %cst_25 = arith.constant 0xFF800000 : f32
    %38 = vector.broadcast %cst_25 : f32 to vector<8xf32>
    %39 = arith.maximumf %38, %37 : vector<8xf32>
    %40 = vector.shape_cast %39 : vector<8xf32> to vector<8x1xf32>
    %41 = vector.broadcast %40 : vector<8x1xf32> to vector<8x8xf32>
    %42 = arith.subf %36, %41 : vector<8x8xf32>
    %43 = math.exp %42 : vector<8x8xf32>
    %cst_26 = arith.constant dense<0.000000e+00> : vector<8xf32>
    %44 = vector.multi_reduction <add>, %43, %cst_26 [1] : vector<8x8xf32> to vector<8xf32>
    %45 = vector.shape_cast %44 : vector<8xf32> to vector<8x1xf32>
    %46 = vector.broadcast %45 : vector<8x1xf32> to vector<8x8xf32>
    %47 = arith.divf %43, %46 : vector<8x8xf32>
    %cst_27 = arith.constant dense<0.000000e+00> : vector<8x8xf32>
    %48 = tpu.matmul %47, %31, %cst_27 {dimension_numbers = #tpu.dot_dimension_numbers<[1], [0], [0], [1], [0, 0, 1, 1], [], []>} : vector<8x8xf32>, vector<8x8xf32>, vector<8x8xf32> -> vector<8x8xf32>
    %49 = vector.extract_strided_slice %8 {offsets = [0, 16], sizes = [8, 8], strides = [1, 1]} : vector<8x96xf32> to vector<8x8xf32>
    %50 = vector.extract_strided_slice %8 {offsets = [0, 48], sizes = [8, 8], strides = [1, 1]} : vector<8x96xf32> to vector<8x8xf32>
    %51 = vector.extract_strided_slice %8 {offsets = [0, 80], sizes = [8, 8], strides = [1, 1]} : vector<8x96xf32> to vector<8x8xf32>
    %cst_28 = arith.constant dense<0.000000e+00> : vector<8x8xf32>
    %52 = tpu.matmul %49, %50, %cst_28 {dimension_numbers = #tpu.dot_dimension_numbers<[1], [1], [0], [0], [0, 0, 1, 0], [], []>} : vector<8x8xf32>, vector<8x8xf32>, vector<8x8xf32> -> vector<8x8xf32>
    %c0_29 = arith.constant 0 : index
    %c0_30 = arith.constant 0 : index
    %c16 = arith.constant 16 : index
    %c0_31 = arith.constant 0 : index
    %53 = vector.load %arg9[%c0_29, %c0_30, %c16, %c0_31] : memref<2x1x32x8xf32, #tpu.memory_space<vmem>>, vector<1x1x8x8xf32>
    %54 = vector.shape_cast %53 : vector<1x1x8x8xf32> to vector<8x8xf32>
    %55 = vector.shape_cast %52 : vector<8x8xf32> to vector<1x1x8x8xf32>
    tpu.vector_store %arg9[%c0_29, %c0_30, %c16, %c0_31], %55 {strides = array<i32>} : memref<2x1x32x8xf32, #tpu.memory_space<vmem>>, vector<1x1x8x8xf32>,
    %56 = arith.addf %52, %3 : vector<8x8xf32>
    %cst_32 = arith.constant dense<0xFF800000> : vector<8xf32>
    %57 = vector.multi_reduction <maximumf>, %56, %cst_32 [1] : vector<8x8xf32> to vector<8xf32>
    %cst_33 = arith.constant 0xFF800000 : f32
    %58 = vector.broadcast %cst_33 : f32 to vector<8xf32>
    %59 = arith.maximumf %58, %57 : vector<8xf32>
    %60 = vector.shape_cast %59 : vector<8xf32> to vector<8x1xf32>
    %61 = vector.broadcast %60 : vector<8x1xf32> to vector<8x8xf32>
    %62 = arith.subf %56, %61 : vector<8x8xf32>
    %63 = math.exp %62 : vector<8x8xf32>
    %cst_34 = arith.constant dense<0.000000e+00> : vector<8xf32>
    %64 = vector.multi_reduction <add>, %63, %cst_34 [1] : vector<8x8xf32> to vector<8xf32>
    %65 = vector.shape_cast %64 : vector<8xf32> to vector<8x1xf32>
    %66 = vector.broadcast %65 : vector<8x1xf32> to vector<8x8xf32>
    %67 = arith.divf %63, %66 : vector<8x8xf32>
    %cst_35 = arith.constant dense<0.000000e+00> : vector<8x8xf32>
    %68 = tpu.matmul %67, %51, %cst_35 {dimension_numbers = #tpu.dot_dimension_numbers<[1], [0], [0], [1], [0, 0, 1, 1], [], []>} : vector<8x8xf32>, vector<8x8xf32>, vector<8x8xf32> -> vector<8x8xf32>
    %69 = vector.extract_strided_slice %8 {offsets = [0, 24], sizes = [8, 8], strides = [1, 1]} : vector<8x96xf32> to vector<8x8xf32>
    %70 = vector.extract_strided_slice %8 {offsets = [0, 56], sizes = [8, 8], strides = [1, 1]} : vector<8x96xf32> to vector<8x8xf32>
    %71 = vector.extract_strided_slice %8 {offsets = [0, 88], sizes = [8, 8], strides = [1, 1]} : vector<8x96xf32> to vector<8x8xf32>
    %cst_36 = arith.constant dense<0.000000e+00> : vector<8x8xf32>
    %72 = tpu.matmul %69, %70, %cst_36 {dimension_numbers = #tpu.dot_dimension_numbers<[1], [1], [0], [0], [0, 0, 1, 0], [], []>} : vector<8x8xf32>, vector<8x8xf32>, vector<8x8xf32> -> vector<8x8xf32>
    %c0_37 = arith.constant 0 : index
    %c0_38 = arith.constant 0 : index
    %c24 = arith.constant 24 : index
    %c0_39 = arith.constant 0 : index
    %73 = vector.load %arg9[%c0_37, %c0_38, %c24, %c0_39] : memref<2x1x32x8xf32, #tpu.memory_space<vmem>>, vector<1x1x8x8xf32>
    %74 = vector.shape_cast %73 : vector<1x1x8x8xf32> to vector<8x8xf32>
    %75 = vector.shape_cast %72 : vector<8x8xf32> to vector<1x1x8x8xf32>
    tpu.vector_store %arg9[%c0_37, %c0_38, %c24, %c0_39], %75 {strides = array<i32>} : memref<2x1x32x8xf32, #tpu.memory_space<vmem>>, vector<1x1x8x8xf32>,
    %76 = arith.addf %72, %3 : vector<8x8xf32>
    %cst_40 = arith.constant dense<0xFF800000> : vector<8xf32>
    %77 = vector.multi_reduction <maximumf>, %76, %cst_40 [1] : vector<8x8xf32> to vector<8xf32>
    %cst_41 = arith.constant 0xFF800000 : f32
    %78 = vector.broadcast %cst_41 : f32 to vector<8xf32>
    %79 = arith.maximumf %78, %77 : vector<8xf32>
    %80 = vector.shape_cast %79 : vector<8xf32> to vector<8x1xf32>
    %81 = vector.broadcast %80 : vector<8x1xf32> to vector<8x8xf32>
    %82 = arith.subf %76, %81 : vector<8x8xf32>
    %83 = math.exp %82 : vector<8x8xf32>
    %cst_42 = arith.constant dense<0.000000e+00> : vector<8xf32>
    %84 = vector.multi_reduction <add>, %83, %cst_42 [1] : vector<8x8xf32> to vector<8xf32>
    %85 = vector.shape_cast %84 : vector<8xf32> to vector<8x1xf32>
    %86 = vector.broadcast %85 : vector<8x1xf32> to vector<8x8xf32>
    %87 = arith.divf %83, %86 : vector<8x8xf32>
    %cst_43 = arith.constant dense<0.000000e+00> : vector<8x8xf32>
    %88 = tpu.matmul %87, %71, %cst_43 {dimension_numbers = #tpu.dot_dimension_numbers<[1], [0], [0], [1], [0, 0, 1, 1], [], []>} : vector<8x8xf32>, vector<8x8xf32>, vector<8x8xf32> -> vector<8x8xf32>
    %89 = tpu.concatenate %28, %48, %68, %88 in 1 : vector<8x8xf32>, vector<8x8xf32>, vector<8x8xf32>, vector<8x8xf32> -> vector<8x32xf32>
    %c0_44 = arith.constant 0 : index
    %c0_45 = arith.constant 0 : index
    %c0_46 = arith.constant 0 : index
    %90 = vector.load %arg4[%c0_44, %c0_45, %c0_46] : memref<2x32x32xf32, #tpu.memory_space<vmem>>, vector<1x32x32xf32>
    %91 = vector.shape_cast %90 : vector<1x32x32xf32> to vector<32x32xf32>
    %cst_47 = arith.constant dense<0.000000e+00> : vector<8x32xf32>
    %92 = tpu.matmul %89, %91, %cst_47 {dimension_numbers = #tpu.dot_dimension_numbers<[1], [0], [0], [1], [0, 0, 1, 1], [], []>} : vector<8x32xf32>, vector<32x32xf32>, vector<8x32xf32> -> vector<8x32xf32>
    %93 = arith.addf %92, %1 : vector<8x32xf32>
    %94 = vector.extract_strided_slice %5 {offsets = [0, 0], sizes = [1, 32], strides = [1, 1]} : vector<4x32xf32> to vector<1x32xf32>
    %95 = vector.extract_strided_slice %5 {offsets = [1, 0], sizes = [1, 32], strides = [1, 1]} : vector<4x32xf32> to vector<1x32xf32>
    %cst_48 = arith.constant dense<0.000000e+00> : vector<8xf32>
    %96 = vector.multi_reduction <add>, %93, %cst_48 [1] : vector<8x32xf32> to vector<8xf32>
    %97 = vector.shape_cast %96 : vector<8xf32> to vector<8x1xf32>
    %cst_49 = arith.constant 3.200000e+01 : f32
    %98 = vector.broadcast %cst_49 : f32 to vector<8x1xf32>
    %99 = arith.divf %97, %98 : vector<8x1xf32>
    %100 = vector.broadcast %99 : vector<8x1xf32> to vector<8x32xf32>
    %101 = arith.subf %93, %100 : vector<8x32xf32>
    %102 = arith.mulf %101, %101 : vector<8x32xf32>
    %cst_50 = arith.constant dense<0.000000e+00> : vector<8xf32>
    %103 = vector.multi_reduction <add>, %102, %cst_50 [1] : vector<8x32xf32> to vector<8xf32>
    %104 = vector.shape_cast %103 : vector<8xf32> to vector<8x1xf32>
    %cst_51 = arith.constant 3.200000e+01 : f32
    %105 = vector.broadcast %cst_51 : f32 to vector<8x1xf32>
    %106 = arith.divf %104, %105 : vector<8x1xf32>
    %107 = vector.broadcast %99 : vector<8x1xf32> to vector<8x32xf32>
    %108 = arith.subf %93, %107 : vector<8x32xf32>
    %cst_52 = arith.constant 9.99999974E-6 : f32
    %109 = vector.broadcast %cst_52 : f32 to vector<8x1xf32>
    %110 = arith.addf %106, %109 : vector<8x1xf32>
    %111 = math.rsqrt %110 : vector<8x1xf32>
    %112 = vector.broadcast %111 : vector<8x1xf32> to vector<8x32xf32>
    %113 = arith.mulf %108, %112 : vector<8x32xf32>
    %114 = vector.broadcast %94 : vector<1x32xf32> to vector<8x32xf32>
    %115 = arith.mulf %113, %114 : vector<8x32xf32>
    %116 = vector.broadcast %95 : vector<1x32xf32> to vector<8x32xf32>
    %117 = arith.addf %115, %116 : vector<8x32xf32>
    %c0_53 = arith.constant 0 : index
    %c0_54 = arith.constant 0 : index
    %c0_55 = arith.constant 0 : index
    %118 = vector.load %arg5[%c0_53, %c0_54, %c0_55] : memref<2x32x64xf32, #tpu.memory_space<vmem>>, vector<1x32x64xf32>
    %119 = vector.shape_cast %118 : vector<1x32x64xf32> to vector<32x64xf32>
    %cst_56 = arith.constant dense<0.000000e+00> : vector<8x64xf32>
    %120 = tpu.matmul %117, %119, %cst_56 {dimension_numbers = #tpu.dot_dimension_numbers<[1], [0], [0], [1], [0, 0, 1, 1], [], []>} : vector<8x32xf32>, vector<32x64xf32>, vector<8x64xf32> -> vector<8x64xf32>
    %cst_57 = arith.constant 0.000000e+00 : f32
    %121 = vector.broadcast %cst_57 : f32 to vector<8x64xf32>
    %122 = arith.maximumf %120, %121 : vector<8x64xf32>
    %c0_58 = arith.constant 0 : index
    %c0_59 = arith.constant 0 : index
    %c0_60 = arith.constant 0 : index
    %123 = vector.load %arg6[%c0_58, %c0_59, %c0_60] : memref<2x64x32xf32, #tpu.memory_space<vmem>>, vector<1x64x32xf32>
    %124 = vector.shape_cast %123 : vector<1x64x32xf32> to vector<64x32xf32>
    %cst_61 = arith.constant dense<0.000000e+00> : vector<8x32xf32>
    %125 = tpu.matmul %122, %124, %cst_61 {dimension_numbers = #tpu.dot_dimension_numbers<[1], [0], [0], [1], [0, 0, 1, 1], [], []>} : vector<8x64xf32>, vector<64x32xf32>, vector<8x32xf32> -> vector<8x32xf32>
    %126 = arith.addf %125, %117 : vector<8x32xf32>
    %127 = vector.extract_strided_slice %5 {offsets = [2, 0], sizes = [1, 32], strides = [1, 1]} : vector<4x32xf32> to vector<1x32xf32>
    %128 = vector.extract_strided_slice %5 {offsets = [3, 0], sizes = [1, 32], strides = [1, 1]} : vector<4x32xf32> to vector<1x32xf32>
    %cst_62 = arith.constant dense<0.000000e+00> : vector<8xf32>
    %129 = vector.multi_reduction <add>, %126, %cst_62 [1] : vector<8x32xf32> to vector<8xf32>
    %130 = vector.shape_cast %129 : vector<8xf32> to vector<8x1xf32>
    %cst_63 = arith.constant 3.200000e+01 : f32
    %131 = vector.broadcast %cst_63 : f32 to vector<8x1xf32>
    %132 = arith.divf %130, %131 : vector<8x1xf32>
    %133 = vector.broadcast %132 : vector<8x1xf32> to vector<8x32xf32>
    %134 = arith.subf %126, %133 : vector<8x32xf32>
    %135 = arith.mulf %134, %134 : vector<8x32xf32>
    %cst_64 = arith.constant dense<0.000000e+00> : vector<8xf32>
    %136 = vector.multi_reduction <add>, %135, %cst_64 [1] : vector<8x32xf32> to vector<8xf32>
    %137 = vector.shape_cast %136 : vector<8xf32> to vector<8x1xf32>
    %cst_65 = arith.constant 3.200000e+01 : f32
    %138 = vector.broadcast %cst_65 : f32 to vector<8x1xf32>
    %139 = arith.divf %137, %138 : vector<8x1xf32>
    %140 = vector.broadcast %132 : vector<8x1xf32> to vector<8x32xf32>
    %141 = arith.subf %126, %140 : vector<8x32xf32>
    %cst_66 = arith.constant 9.99999974E-6 : f32
    %142 = vector.broadcast %cst_66 : f32 to vector<8x1xf32>
    %143 = arith.addf %139, %142 : vector<8x1xf32>
    %144 = math.rsqrt %143 : vector<8x1xf32>
    %145 = vector.broadcast %144 : vector<8x1xf32> to vector<8x32xf32>
    %146 = arith.mulf %141, %145 : vector<8x32xf32>
    %147 = vector.broadcast %127 : vector<1x32xf32> to vector<8x32xf32>
    %148 = arith.mulf %146, %147 : vector<8x32xf32>
    %149 = vector.broadcast %128 : vector<1x32xf32> to vector<8x32xf32>
    %150 = arith.addf %148, %149 : vector<8x32xf32>
    %c1 = arith.constant 1 : index
    %c0_67 = arith.constant 0 : index
    %c0_68 = arith.constant 0 : index
    %151 = vector.load %arg7[%c1, %c0_67, %c0_68] : memref<2x4x32xf32, #tpu.memory_space<vmem>>, vector<1x4x32xf32>
    %152 = vector.shape_cast %151 : vector<1x4x32xf32> to vector<4x32xf32>
    %c1_69 = arith.constant 1 : index
    %c0_70 = arith.constant 0 : index
    %c0_71 = arith.constant 0 : index
    %153 = vector.load %arg3[%c1_69, %c0_70, %c0_71] : memref<2x32x96xf32, #tpu.memory_space<vmem>>, vector<1x32x96xf32>
    %154 = vector.shape_cast %153 : vector<1x32x96xf32> to vector<32x96xf32>
    %cst_72 = arith.constant dense<0.000000e+00> : vector<8x96xf32>
    %155 = tpu.matmul %150, %154, %cst_72 {dimension_numbers = #tpu.dot_dimension_numbers<[1], [0], [0], [1], [0, 0, 1, 1], [], []>} : vector<8x32xf32>, vector<32x96xf32>, vector<8x96xf32> -> vector<8x96xf32>
    %156 = vector.extract_strided_slice %155 {offsets = [0, 0], sizes = [8, 8], strides = [1, 1]} : vector<8x96xf32> to vector<8x8xf32>
    %157 = vector.extract_strided_slice %155 {offsets = [0, 32], sizes = [8, 8], strides = [1, 1]} : vector<8x96xf32> to vector<8x8xf32>
    %158 = vector.extract_strided_slice %155 {offsets = [0, 64], sizes = [8, 8], strides = [1, 1]} : vector<8x96xf32> to vector<8x8xf32>
    %cst_73 = arith.constant dense<0.000000e+00> : vector<8x8xf32>
    %159 = tpu.matmul %156, %157, %cst_73 {dimension_numbers = #tpu.dot_dimension_numbers<[1], [1], [0], [0], [0, 0, 1, 0], [], []>} : vector<8x8xf32>, vector<8x8xf32>, vector<8x8xf32> -> vector<8x8xf32>
    %c1_74 = arith.constant 1 : index
    %c0_75 = arith.constant 0 : index
    %c0_76 = arith.constant 0 : index
    %c0_77 = arith.constant 0 : index
    %160 = vector.load %arg9[%c1_74, %c0_75, %c0_76, %c0_77] : memref<2x1x32x8xf32, #tpu.memory_space<vmem>>, vector<1x1x8x8xf32>
    %161 = vector.shape_cast %160 : vector<1x1x8x8xf32> to vector<8x8xf32>
    %162 = vector.shape_cast %159 : vector<8x8xf32> to vector<1x1x8x8xf32>
    tpu.vector_store %arg9[%c1_74, %c0_75, %c0_76, %c0_77], %162 {strides = array<i32>} : memref<2x1x32x8xf32, #tpu.memory_space<vmem>>, vector<1x1x8x8xf32>,
    %163 = arith.addf %159, %3 : vector<8x8xf32>
    %cst_78 = arith.constant dense<0xFF800000> : vector<8xf32>
    %164 = vector.multi_reduction <maximumf>, %163, %cst_78 [1] : vector<8x8xf32> to vector<8xf32>
    %cst_79 = arith.constant 0xFF800000 : f32
    %165 = vector.broadcast %cst_79 : f32 to vector<8xf32>
    %166 = arith.maximumf %165, %164 : vector<8xf32>
    %167 = vector.shape_cast %166 : vector<8xf32> to vector<8x1xf32>
    %168 = vector.broadcast %167 : vector<8x1xf32> to vector<8x8xf32>
    %169 = arith.subf %163, %168 : vector<8x8xf32>
    %170 = math.exp %169 : vector<8x8xf32>
    %cst_80 = arith.constant dense<0.000000e+00> : vector<8xf32>
    %171 = vector.multi_reduction <add>, %170, %cst_80 [1] : vector<8x8xf32> to vector<8xf32>
    %172 = vector.shape_cast %171 : vector<8xf32> to vector<8x1xf32>
    %173 = vector.broadcast %172 : vector<8x1xf32> to vector<8x8xf32>
    %174 = arith.divf %170, %173 : vector<8x8xf32>
    %cst_81 = arith.constant dense<0.000000e+00> : vector<8x8xf32>
    %175 = tpu.matmul %174, %158, %cst_81 {dimension_numbers = #tpu.dot_dimension_numbers<[1], [0], [0], [1], [0, 0, 1, 1], [], []>} : vector<8x8xf32>, vector<8x8xf32>, vector<8x8xf32> -> vector<8x8xf32>
    %176 = vector.extract_strided_slice %155 {offsets = [0, 8], sizes = [8, 8], strides = [1, 1]} : vector<8x96xf32> to vector<8x8xf32>
    %177 = vector.extract_strided_slice %155 {offsets = [0, 40], sizes = [8, 8], strides = [1, 1]} : vector<8x96xf32> to vector<8x8xf32>
    %178 = vector.extract_strided_slice %155 {offsets = [0, 72], sizes = [8, 8], strides = [1, 1]} : vector<8x96xf32> to vector<8x8xf32>
    %cst_82 = arith.constant dense<0.000000e+00> : vector<8x8xf32>
    %179 = tpu.matmul %176, %177, %cst_82 {dimension_numbers = #tpu.dot_dimension_numbers<[1], [1], [0], [0], [0, 0, 1, 0], [], []>} : vector<8x8xf32>, vector<8x8xf32>, vector<8x8xf32> -> vector<8x8xf32>
    %c1_83 = arith.constant 1 : index
    %c0_84 = arith.constant 0 : index
    %c8_85 = arith.constant 8 : index
    %c0_86 = arith.constant 0 : index
    %180 = vector.load %arg9[%c1_83, %c0_84, %c8_85, %c0_86] : memref<2x1x32x8xf32, #tpu.memory_space<vmem>>, vector<1x1x8x8xf32>
    %181 = vector.shape_cast %180 : vector<1x1x8x8xf32> to vector<8x8xf32>
    %182 = vector.shape_cast %179 : vector<8x8xf32> to vector<1x1x8x8xf32>
    tpu.vector_store %arg9[%c1_83, %c0_84, %c8_85, %c0_86], %182 {strides = array<i32>} : memref<2x1x32x8xf32, #tpu.memory_space<vmem>>, vector<1x1x8x8xf32>,
    %183 = arith.addf %179, %3 : vector<8x8xf32>
    %cst_87 = arith.constant dense<0xFF800000> : vector<8xf32>
    %184 = vector.multi_reduction <maximumf>, %183, %cst_87 [1] : vector<8x8xf32> to vector<8xf32>
    %cst_88 = arith.constant 0xFF800000 : f32
    %185 = vector.broadcast %cst_88 : f32 to vector<8xf32>
    %186 = arith.maximumf %185, %184 : vector<8xf32>
    %187 = vector.shape_cast %186 : vector<8xf32> to vector<8x1xf32>
    %188 = vector.broadcast %187 : vector<8x1xf32> to vector<8x8xf32>
    %189 = arith.subf %183, %188 : vector<8x8xf32>
    %190 = math.exp %189 : vector<8x8xf32>
    %cst_89 = arith.constant dense<0.000000e+00> : vector<8xf32>
    %191 = vector.multi_reduction <add>, %190, %cst_89 [1] : vector<8x8xf32> to vector<8xf32>
    %192 = vector.shape_cast %191 : vector<8xf32> to vector<8x1xf32>
    %193 = vector.broadcast %192 : vector<8x1xf32> to vector<8x8xf32>
    %194 = arith.divf %190, %193 : vector<8x8xf32>
    %cst_90 = arith.constant dense<0.000000e+00> : vector<8x8xf32>
    %195 = tpu.matmul %194, %178, %cst_90 {dimension_numbers = #tpu.dot_dimension_numbers<[1], [0], [0], [1], [0, 0, 1, 1], [], []>} : vector<8x8xf32>, vector<8x8xf32>, vector<8x8xf32> -> vector<8x8xf32>
    %196 = vector.extract_strided_slice %155 {offsets = [0, 16], sizes = [8, 8], strides = [1, 1]} : vector<8x96xf32> to vector<8x8xf32>
    %197 = vector.extract_strided_slice %155 {offsets = [0, 48], sizes = [8, 8], strides = [1, 1]} : vector<8x96xf32> to vector<8x8xf32>
    %198 = vector.extract_strided_slice %155 {offsets = [0, 80], sizes = [8, 8], strides = [1, 1]} : vector<8x96xf32> to vector<8x8xf32>
    %cst_91 = arith.constant dense<0.000000e+00> : vector<8x8xf32>
    %199 = tpu.matmul %196, %197, %cst_91 {dimension_numbers = #tpu.dot_dimension_numbers<[1], [1], [0], [0], [0, 0, 1, 0], [], []>} : vector<8x8xf32>, vector<8x8xf32>, vector<8x8xf32> -> vector<8x8xf32>
    %c1_92 = arith.constant 1 : index
    %c0_93 = arith.constant 0 : index
    %c16_94 = arith.constant 16 : index
    %c0_95 = arith.constant 0 : index
    %200 = vector.load %arg9[%c1_92, %c0_93, %c16_94, %c0_95] : memref<2x1x32x8xf32, #tpu.memory_space<vmem>>, vector<1x1x8x8xf32>
    %201 = vector.shape_cast %200 : vector<1x1x8x8xf32> to vector<8x8xf32>
    %202 = vector.shape_cast %199 : vector<8x8xf32> to vector<1x1x8x8xf32>
    tpu.vector_store %arg9[%c1_92, %c0_93, %c16_94, %c0_95], %202 {strides = array<i32>} : memref<2x1x32x8xf32, #tpu.memory_space<vmem>>, vector<1x1x8x8xf32>,
    %203 = arith.addf %199, %3 : vector<8x8xf32>
    %cst_96 = arith.constant dense<0xFF800000> : vector<8xf32>
    %204 = vector.multi_reduction <maximumf>, %203, %cst_96 [1] : vector<8x8xf32> to vector<8xf32>
    %cst_97 = arith.constant 0xFF800000 : f32
    %205 = vector.broadcast %cst_97 : f32 to vector<8xf32>
    %206 = arith.maximumf %205, %204 : vector<8xf32>
    %207 = vector.shape_cast %206 : vector<8xf32> to vector<8x1xf32>
    %208 = vector.broadcast %207 : vector<8x1xf32> to vector<8x8xf32>
    %209 = arith.subf %203, %208 : vector<8x8xf32>
    %210 = math.exp %209 : vector<8x8xf32>
    %cst_98 = arith.constant dense<0.000000e+00> : vector<8xf32>
    %211 = vector.multi_reduction <add>, %210, %cst_98 [1] : vector<8x8xf32> to vector<8xf32>
    %212 = vector.shape_cast %211 : vector<8xf32> to vector<8x1xf32>
    %213 = vector.broadcast %212 : vector<8x1xf32> to vector<8x8xf32>
    %214 = arith.divf %210, %213 : vector<8x8xf32>
    %cst_99 = arith.constant dense<0.000000e+00> : vector<8x8xf32>
    %215 = tpu.matmul %214, %198, %cst_99 {dimension_numbers = #tpu.dot_dimension_numbers<[1], [0], [0], [1], [0, 0, 1, 1], [], []>} : vector<8x8xf32>, vector<8x8xf32>, vector<8x8xf32> -> vector<8x8xf32>
    %216 = vector.extract_strided_slice %155 {offsets = [0, 24], sizes = [8, 8], strides = [1, 1]} : vector<8x96xf32> to vector<8x8xf32>
    %217 = vector.extract_strided_slice %155 {offsets = [0, 56], sizes = [8, 8], strides = [1, 1]} : vector<8x96xf32> to vector<8x8xf32>
    %218 = vector.extract_strided_slice %155 {offsets = [0, 88], sizes = [8, 8], strides = [1, 1]} : vector<8x96xf32> to vector<8x8xf32>
    %cst_100 = arith.constant dense<0.000000e+00> : vector<8x8xf32>
    %219 = tpu.matmul %216, %217, %cst_100 {dimension_numbers = #tpu.dot_dimension_numbers<[1], [1], [0], [0], [0, 0, 1, 0], [], []>} : vector<8x8xf32>, vector<8x8xf32>, vector<8x8xf32> -> vector<8x8xf32>
    %c1_101 = arith.constant 1 : index
    %c0_102 = arith.constant 0 : index
    %c24_103 = arith.constant 24 : index
    %c0_104 = arith.constant 0 : index
    %220 = vector.load %arg9[%c1_101, %c0_102, %c24_103, %c0_104] : memref<2x1x32x8xf32, #tpu.memory_space<vmem>>, vector<1x1x8x8xf32>
    %221 = vector.shape_cast %220 : vector<1x1x8x8xf32> to vector<8x8xf32>
    %222 = vector.shape_cast %219 : vector<8x8xf32> to vector<1x1x8x8xf32>
    tpu.vector_store %arg9[%c1_101, %c0_102, %c24_103, %c0_104], %222 {strides = array<i32>} : memref<2x1x32x8xf32, #tpu.memory_space<vmem>>, vector<1x1x8x8xf32>,
    %223 = arith.addf %219, %3 : vector<8x8xf32>
    %cst_105 = arith.constant dense<0xFF800000> : vector<8xf32>
    %224 = vector.multi_reduction <maximumf>, %223, %cst_105 [1] : vector<8x8xf32> to vector<8xf32>
    %cst_106 = arith.constant 0xFF800000 : f32
    %225 = vector.broadcast %cst_106 : f32 to vector<8xf32>
    %226 = arith.maximumf %225, %224 : vector<8xf32>
    %227 = vector.shape_cast %226 : vector<8xf32> to vector<8x1xf32>
    %228 = vector.broadcast %227 : vector<8x1xf32> to vector<8x8xf32>
    %229 = arith.subf %223, %228 : vector<8x8xf32>
    %230 = math.exp %229 : vector<8x8xf32>
    %cst_107 = arith.constant dense<0.000000e+00> : vector<8xf32>
    %231 = vector.multi_reduction <add>, %230, %cst_107 [1] : vector<8x8xf32> to vector<8xf32>
    %232 = vector.shape_cast %231 : vector<8xf32> to vector<8x1xf32>
    %233 = vector.broadcast %232 : vector<8x1xf32> to vector<8x8xf32>
    %234 = arith.divf %230, %233 : vector<8x8xf32>
    %cst_108 = arith.constant dense<0.000000e+00> : vector<8x8xf32>
    %235 = tpu.matmul %234, %218, %cst_108 {dimension_numbers = #tpu.dot_dimension_numbers<[1], [0], [0], [1], [0, 0, 1, 1], [], []>} : vector<8x8xf32>, vector<8x8xf32>, vector<8x8xf32> -> vector<8x8xf32>
    %236 = tpu.concatenate %175, %195, %215, %235 in 1 : vector<8x8xf32>, vector<8x8xf32>, vector<8x8xf32>, vector<8x8xf32> -> vector<8x32xf32>
    %c1_109 = arith.constant 1 : index
    %c0_110 = arith.constant 0 : index
    %c0_111 = arith.constant 0 : index
    %237 = vector.load %arg4[%c1_109, %c0_110, %c0_111] : memref<2x32x32xf32, #tpu.memory_space<vmem>>, vector<1x32x32xf32>
    %238 = vector.shape_cast %237 : vector<1x32x32xf32> to vector<32x32xf32>
    %cst_112 = arith.constant dense<0.000000e+00> : vector<8x32xf32>
    %239 = tpu.matmul %236, %238, %cst_112 {dimension_numbers = #tpu.dot_dimension_numbers<[1], [0], [0], [1], [0, 0, 1, 1], [], []>} : vector<8x32xf32>, vector<32x32xf32>, vector<8x32xf32> -> vector<8x32xf32>
    %240 = arith.addf %239, %150 : vector<8x32xf32>
    %241 = vector.extract_strided_slice %152 {offsets = [0, 0], sizes = [1, 32], strides = [1, 1]} : vector<4x32xf32> to vector<1x32xf32>
    %242 = vector.extract_strided_slice %152 {offsets = [1, 0], sizes = [1, 32], strides = [1, 1]} : vector<4x32xf32> to vector<1x32xf32>
    %cst_113 = arith.constant dense<0.000000e+00> : vector<8xf32>
    %243 = vector.multi_reduction <add>, %240, %cst_113 [1] : vector<8x32xf32> to vector<8xf32>
    %244 = vector.shape_cast %243 : vector<8xf32> to vector<8x1xf32>
    %cst_114 = arith.constant 3.200000e+01 : f32
    %245 = vector.broadcast %cst_114 : f32 to vector<8x1xf32>
    %246 = arith.divf %244, %245 : vector<8x1xf32>
    %247 = vector.broadcast %246 : vector<8x1xf32> to vector<8x32xf32>
    %248 = arith.subf %240, %247 : vector<8x32xf32>
    %249 = arith.mulf %248, %248 : vector<8x32xf32>
    %cst_115 = arith.constant dense<0.000000e+00> : vector<8xf32>
    %250 = vector.multi_reduction <add>, %249, %cst_115 [1] : vector<8x32xf32> to vector<8xf32>
    %251 = vector.shape_cast %250 : vector<8xf32> to vector<8x1xf32>
    %cst_116 = arith.constant 3.200000e+01 : f32
    %252 = vector.broadcast %cst_116 : f32 to vector<8x1xf32>
    %253 = arith.divf %251, %252 : vector<8x1xf32>
    %254 = vector.broadcast %246 : vector<8x1xf32> to vector<8x32xf32>
    %255 = arith.subf %240, %254 : vector<8x32xf32>
    %cst_117 = arith.constant 9.99999974E-6 : f32
    %256 = vector.broadcast %cst_117 : f32 to vector<8x1xf32>
    %257 = arith.addf %253, %256 : vector<8x1xf32>
    %258 = math.rsqrt %257 : vector<8x1xf32>
    %259 = vector.broadcast %258 : vector<8x1xf32> to vector<8x32xf32>
    %260 = arith.mulf %255, %259 : vector<8x32xf32>
    %261 = vector.broadcast %241 : vector<1x32xf32> to vector<8x32xf32>
    %262 = arith.mulf %260, %261 : vector<8x32xf32>
    %263 = vector.broadcast %242 : vector<1x32xf32> to vector<8x32xf32>
    %264 = arith.addf %262, %263 : vector<8x32xf32>
    %c1_118 = arith.constant 1 : index
    %c0_119 = arith.constant 0 : index
    %c0_120 = arith.constant 0 : index
    %265 = vector.load %arg5[%c1_118, %c0_119, %c0_120] : memref<2x32x64xf32, #tpu.memory_space<vmem>>, vector<1x32x64xf32>
    %266 = vector.shape_cast %265 : vector<1x32x64xf32> to vector<32x64xf32>
    %cst_121 = arith.constant dense<0.000000e+00> : vector<8x64xf32>
    %267 = tpu.matmul %264, %266, %cst_121 {dimension_numbers = #tpu.dot_dimension_numbers<[1], [0], [0], [1], [0, 0, 1, 1], [], []>} : vector<8x32xf32>, vector<32x64xf32>, vector<8x64xf32> -> vector<8x64xf32>
    %cst_122 = arith.constant 0.000000e+00 : f32
    %268 = vector.broadcast %cst_122 : f32 to vector<8x64xf32>
    %269 = arith.maximumf %267, %268 : vector<8x64xf32>
    %c1_123 = arith.constant 1 : index
    %c0_124 = arith.constant 0 : index
    %c0_125 = arith.constant 0 : index
    %270 = vector.load %arg6[%c1_123, %c0_124, %c0_125] : memref<2x64x32xf32, #tpu.memory_space<vmem>>, vector<1x64x32xf32>
    %271 = vector.shape_cast %270 : vector<1x64x32xf32> to vector<64x32xf32>
    %cst_126 = arith.constant dense<0.000000e+00> : vector<8x32xf32>
    %272 = tpu.matmul %269, %271, %cst_126 {dimension_numbers = #tpu.dot_dimension_numbers<[1], [0], [0], [1], [0, 0, 1, 1], [], []>} : vector<8x64xf32>, vector<64x32xf32>, vector<8x32xf32> -> vector<8x32xf32>
    %273 = arith.addf %272, %264 : vector<8x32xf32>
    %274 = vector.extract_strided_slice %152 {offsets = [2, 0], sizes = [1, 32], strides = [1, 1]} : vector<4x32xf32> to vector<1x32xf32>
    %275 = vector.extract_strided_slice %152 {offsets = [3, 0], sizes = [1, 32], strides = [1, 1]} : vector<4x32xf32> to vector<1x32xf32>
    %cst_127 = arith.constant dense<0.000000e+00> : vector<8xf32>
    %276 = vector.multi_reduction <add>, %273, %cst_127 [1] : vector<8x32xf32> to vector<8xf32>
    %277 = vector.shape_cast %276 : vector<8xf32> to vector<8x1xf32>
    %cst_128 = arith.constant 3.200000e+01 : f32
    %278 = vector.broadcast %cst_128 : f32 to vector<8x1xf32>
    %279 = arith.divf %277, %278 : vector<8x1xf32>
    %280 = vector.broadcast %279 : vector<8x1xf32> to vector<8x32xf32>
    %281 = arith.subf %273, %280 : vector<8x32xf32>
    %282 = arith.mulf %281, %281 : vector<8x32xf32>
    %cst_129 = arith.constant dense<0.000000e+00> : vector<8xf32>
    %283 = vector.multi_reduction <add>, %282, %cst_129 [1] : vector<8x32xf32> to vector<8xf32>
    %284 = vector.shape_cast %283 : vector<8xf32> to vector<8x1xf32>
    %cst_130 = arith.constant 3.200000e+01 : f32
    %285 = vector.broadcast %cst_130 : f32 to vector<8x1xf32>
    %286 = arith.divf %284, %285 : vector<8x1xf32>
    %287 = vector.broadcast %279 : vector<8x1xf32> to vector<8x32xf32>
    %288 = arith.subf %273, %287 : vector<8x32xf32>
    %cst_131 = arith.constant 9.99999974E-6 : f32
    %289 = vector.broadcast %cst_131 : f32 to vector<8x1xf32>
    %290 = arith.addf %286, %289 : vector<8x1xf32>
    %291 = math.rsqrt %290 : vector<8x1xf32>
    %292 = vector.broadcast %291 : vector<8x1xf32> to vector<8x32xf32>
    %293 = arith.mulf %288, %292 : vector<8x32xf32>
    %294 = vector.broadcast %274 : vector<1x32xf32> to vector<8x32xf32>
    %295 = arith.mulf %293, %294 : vector<8x32xf32>
    %296 = vector.broadcast %275 : vector<1x32xf32> to vector<8x32xf32>
    %297 = arith.addf %295, %296 : vector<8x32xf32>
    %c0_132 = arith.constant 0 : index
    %c0_133 = arith.constant 0 : index
    %c0_134 = arith.constant 0 : index
    %298 = vector.load %arg8[%c0_132, %c0_133, %c0_134] : memref<1x8x32xf32, #tpu.memory_space<vmem>>, vector<1x8x32xf32>
    %299 = vector.shape_cast %298 : vector<1x8x32xf32> to vector<8x32xf32>
    %300 = vector.shape_cast %297 : vector<8x32xf32> to vector<1x8x32xf32>
    tpu.vector_store %arg8[%c0_132, %c0_133, %c0_134], %300 {strides = array<i32>} : memref<1x8x32xf32, #tpu.memory_space<vmem>>, vector<1x8x32xf32>,
    return
  }
  func.func @transform_0(%arg0: i32) -> (i32, i32, i32) {
    %c0_i32 = arith.constant 0 : i32
    %c0_i32_0 = arith.constant 0 : i32
    %c0_i32_1 = arith.constant 0 : i32
    return %arg0, %c0_i32, %c0_i32_0 : i32, i32, i32
  }
  func.func @transform_1(%arg0: i32) -> (i32, i32, i32) {
    %c0_i32 = arith.constant 0 : i32
    %c0_i32_0 = arith.constant 0 : i32
    %c0_i32_1 = arith.constant 0 : i32
    return %arg0, %c0_i32, %c0_i32_0 : i32, i32, i32
  }
  func.func @transform_2(%arg0: i32) -> (i32, i32, i32) {
    %c0_i32 = arith.constant 0 : i32
    %c0_i32_0 = arith.constant 0 : i32
    %c0_i32_1 = arith.constant 0 : i32
    %c0_i32_2 = arith.constant 0 : i32
    return %c0_i32, %c0_i32_0, %c0_i32_1 : i32, i32, i32
  }
  func.func @transform_3(%arg0: i32) -> (i32, i32, i32) {
    %c0_i32 = arith.constant 0 : i32
    %c0_i32_0 = arith.constant 0 : i32
    %c0_i32_1 = arith.constant 0 : i32
    %c0_i32_2 = arith.constant 0 : i32
    return %c0_i32, %c0_i32_0, %c0_i32_1 : i32, i32, i32
  }
  func.func @transform_4(%arg0: i32) -> (i32, i32, i32) {
    %c0_i32 = arith.constant 0 : i32
    %c0_i32_0 = arith.constant 0 : i32
    %c0_i32_1 = arith.constant 0 : i32
    %c0_i32_2 = arith.constant 0 : i32
    return %c0_i32, %c0_i32_0, %c0_i32_1 : i32, i32, i32
  }
  func.func @transform_5(%arg0: i32) -> (i32, i32, i32) {
    %c0_i32 = arith.constant 0 : i32
    %c0_i32_0 = arith.constant 0 : i32
    %c0_i32_1 = arith.constant 0 : i32
    %c0_i32_2 = arith.constant 0 : i32
    return %c0_i32, %c0_i32_0, %c0_i32_1 : i32, i32, i32
  }
  func.func @transform_6(%arg0: i32) -> (i32, i32, i32) {
    %c0_i32 = arith.constant 0 : i32
    %c0_i32_0 = arith.constant 0 : i32
    %c0_i32_1 = arith.constant 0 : i32
    %c0_i32_2 = arith.constant 0 : i32
    return %c0_i32, %c0_i32_0, %c0_i32_1 : i32, i32, i32
  }
  func.func @transform_7(%arg0: i32) -> (i32, i32, i32) {
    %c0_i32 = arith.constant 0 : i32
    %c0_i32_0 = arith.constant 0 : i32
    %c0_i32_1 = arith.constant 0 : i32
    return %arg0, %c0_i32, %c0_i32_0 : i32, i32, i32
  }
  func.func @transform_8(%arg0: i32) -> (i32, i32, i32, i32) {
    %c0_i32 = arith.constant 0 : i32
    %c0_i32_0 = arith.constant 0 : i32
    %c0_i32_1 = arith.constant 0 : i32
    %c0_i32_2 = arith.constant 0 : i32
    return %c0_i32, %arg0, %c0_i32_0, %c0_i32_1 : i32, i32, i32, i32
  }
}

</mosaic_0001>

<llo_original>
// kernel: tpu_custom_call.1
$region0: #{tpu_custom_call.1}
  #allocation0 [shape = 'u32[]', space=smem, size = 0x4, offset = 0x4, fixed_abs, tag = 'smem constant byte address 0x4 - core index']
  #allocation1 [shape = 'u32[144,128]{1,0:T(1,128)}', space=vmem, size = 0x12000, scoped, tag = 'internal scratch']
  %s0 = inlined_call_operand.hbm [shape: f32[2,8,32], index: 0, kind: input, shape index: {}]
  %s1 = inlined_call_operand.hbm [shape: f32[2,8,8], index: 1, kind: input, shape index: {}]
  %s2 = inlined_call_operand.vmem [shape: f32[2,32,96], index: 2, kind: input, shape index: {}]
  %s3 = inlined_call_operand.vmem [shape: f32[2,32,32], index: 3, kind: input, shape index: {}]
  %s4 = inlined_call_operand.vmem [shape: f32[2,32,64], index: 4, kind: input, shape index: {}]
  %s5 = inlined_call_operand.vmem [shape: f32[2,64,32], index: 5, kind: input, shape index: {}]
  %s6 = inlined_call_operand.vmem [shape: f32[2,4,32], index: 6, kind: input, shape index: {}]
  %s7 = inlined_call_operand.hbm [shape: f32[2,8,32], index: 7, kind: output, shape index: {0}]
  %s8 = inlined_call_operand.vmem [shape: f32[2,2,32,8], index: 8, kind: output, shape index: {1}]
  %9 = xla_tuple %s7, %s8
  %s10 = sld [smem:[#allocation0]]
  $region111: #{tpu_custom_call.1} parent=0
    _
  %s12 = ssub.s32 1, %s10
  %s13 = scalar_select 0, %s12, %s10
  $region1: #{tpu_custom_call.1} parent=0
    #allocation2 [shape = 'u8[8192]{0}', space=vmem, size = 0x2000, scoped, tag = 'input window, operand 0']
    #allocation3 [shape = 's32[2]{0}', space=sflag, size = 0x8, scoped, tag = 'scoped memory for tpu_custom_call.1']
    #allocation4 [shape = 's32[2]{0}', space=sflag, size = 0x8, scoped, tag = 'scoped memory for tpu_custom_call.1']
    #allocation5 [shape = 'u8[8192]{0}', space=vmem, size = 0x2000, scoped, tag = 'input window, operand 1']
    #allocation6 [shape = 's32[2]{0}', space=sflag, size = 0x8, scoped, tag = 'scoped memory for tpu_custom_call.1']
    #allocation7 [shape = 'u8[8192]{0}', space=vmem, size = 0x2000, scoped, tag = 'output window, operand 0']
    #allocation8 [shape = 'u8[65536]{0}', space=vmem, size = 0x10000, scoped, tag = 'output window, operand 1']
    %14 = vsyncpa [#allocation3], 0
    %s15 = scalar_lea.sflag [#allocation3], 1
    %16 = vsyncpa %s15, 0
    %17 = vsyncpa [#allocation6], 0
    %s18 = scalar_lea.sflag [#allocation6], 1
    %19 = vsyncpa %s18, 0
    %20 = vsyncpa [#allocation4], 0
    %s21 = scalar_lea.sflag [#allocation4], 1
    %22 = vsyncpa %s21, 0
    loop: start=0, step=1, limit=4
    $region2: #{tpu_custom_call.1} parent=1 // loop_pre_header
      _
    $region3: #{tpu_custom_call.1} parent=1 // loop_header
      %s24 = sphi 0, %s28
      %p25 = scmp.ge.s32.totalorder %s24, 4
      %s34 = sphi 0, %s36
      %s37 = sphi 0, %s34
      %s38 = sphi 0, %s37
      %s54 = sphi 0, %s38
      %s60 = sphi 0, %s62
      %s63 = sphi 0, %s60
      %s64 = sphi 0, %s63
      %s80 = sphi 0, %s64
      %s84 = sphi 0, %s84
      %s86 = sphi 0, %s84
      %s87 = sphi 0, %s86
      %s101 = sphi 0, %s87
      %s105 = sphi 0, %s105
      %s107 = sphi 0, %s105
      %s108 = sphi 0, %s107
      %s122 = sphi 0, %s108
      %s126 = sphi 0, %s126
      %s128 = sphi 0, %s126
      %s129 = sphi 0, %s128
      %s143 = sphi 0, %s129
      %s147 = sphi 0, %s147
      %s149 = sphi 0, %s147
      %s150 = sphi 0, %s149
      %s164 = sphi 0, %s150
      %s168 = sphi 0, %s168
      %s170 = sphi 0, %s168
      %s171 = sphi 0, %s170
      %s185 = sphi 0, %s171
      %s191 = sphi 0, %s193
      %s194 = sphi 0, %s191
      %s195 = sphi 0, %s194
      %s211 = sphi 0, %s195
      %s217 = sphi 0, %s219
      %s220 = sphi 0, %s217
      %s221 = sphi 0, %s220
      %s237 = sphi 0, %s221
    $region4: #{tpu_custom_call.1} parent=1 // loop_header_branch
      %27 = sbr.rel (%p25) target = $region8
    $region5: #{tpu_custom_call.1} parent=1 // loop_body
      %s29 = ssub.s32 %s24, 1
      %s30 = ssub.s32 %s24, 2
      %s31 = sadd.s32 %s24, 1
      %s32 = ssub.s32 %s24, %s31
      %p33 = scmp.eq.s32.totalorder %s32, 0
      %s35 = sadd.s32 %s34, 1
      %s36 = scalar_select %p33, %s34, %s35
      %p39 = pneg %p33
      %p40 = scmp.eq.s32.totalorder %s24, 1
      %p41 = por %p39, %p40
      %p42 = scmp.ne.s32.totalorder %s34, %s37
      %p43 = scmp.eq.s32.totalorder %s24, 0
      %p44 = por %p42, %p43
      %p45 = scmp.ne.s32.totalorder %s34, %s37
      %p46 = scmp.eq.s32.totalorder %s29, 1
      %p47 = por %p45, %p46
      %p48 = scmp.ne.s32.totalorder %s37, %s38
      %p49 = scmp.eq.s32.totalorder %s29, 0
      %p50 = por %p48, %p49
      %p51 = scmp.ne.s32.totalorder %s37, %s38
      %p52 = scmp.eq.s32.totalorder %s30, 1
      %p53 = por %p51, %p52
      %p55 = scmp.ne.s32.totalorder %s38, %s54
      %p56 = scmp.eq.s32.totalorder %s30, 0
      %p57 = por %p55, %p56
      %s58 = ssub.s32 %s24, %s31
      %p59 = scmp.eq.s32.totalorder %s58, 0
      %s61 = sadd.s32 %s60, 1
      %s62 = scalar_select %p59, %s60, %s61
      %p65 = pneg %p59
      %p66 = scmp.eq.s32.totalorder %s24, 1
      %p67 = por %p65, %p66
      %p68 = scmp.ne.s32.totalorder %s60, %s63
      %p69 = scmp.eq.s32.totalorder %s24, 0
      %p70 = por %p68, %p69
      %p71 = scmp.ne.s32.totalorder %s60, %s63
      %p72 = scmp.eq.s32.totalorder %s29, 1
      %p73 = por %p71, %p72
      %p74 = scmp.ne.s32.totalorder %s63, %s64
      %p75 = scmp.eq.s32.totalorder %s29, 0
      %p76 = por %p74, %p75
      %p77 = scmp.ne.s32.totalorder %s63, %s64
      %p78 = scmp.eq.s32.totalorder %s30, 1
      %p79 = por %p77, %p78
      %p81 = scmp.ne.s32.totalorder %s64, %s80
      %p82 = scmp.eq.s32.totalorder %s30, 0
      %p83 = por %p81, %p82
      %s85 = sadd.s32 %s84, 1
      %p88 = scmp.eq.s32.totalorder %s24, 1
      %p89 = scmp.ne.s32.totalorder %s84, %s86
      %p90 = scmp.eq.s32.totalorder %s24, 0
      %p91 = por %p89, %p90
      %p92 = scmp.ne.s32.totalorder %s84, %s86
      %p93 = scmp.eq.s32.totalorder %s29, 1
      %p94 = por %p92, %p93
      %p95 = scmp.ne.s32.totalorder %s86, %s87
      %p96 = scmp.eq.s32.totalorder %s29, 0
      %p97 = por %p95, %p96
      %p98 = scmp.ne.s32.totalorder %s86, %s87
      %p99 = scmp.eq.s32.totalorder %s30, 1
      %p100 = por %p98, %p99
      %p102 = scmp.ne.s32.totalorder %s87, %s101
      %p103 = scmp.eq.s32.totalorder %s30, 0
      %p104 = por %p102, %p103
      %s106 = sadd.s32 %s105, 1
      %p109 = scmp.eq.s32.totalorder %s24, 1
      %p110 = scmp.ne.s32.totalorder %s105, %s107
      %p111 = scmp.eq.s32.totalorder %s24, 0
      %p112 = por %p110, %p111
      %p113 = scmp.ne.s32.totalorder %s105, %s107
      %p114 = scmp.eq.s32.totalorder %s29, 1
      %p115 = por %p113, %p114
      %p116 = scmp.ne.s32.totalorder %s107, %s108
      %p117 = scmp.eq.s32.totalorder %s29, 0
      %p118 = por %p116, %p117
      %p119 = scmp.ne.s32.totalorder %s107, %s108
      %p120 = scmp.eq.s32.totalorder %s30, 1
      %p121 = por %p119, %p120
      %p123 = scmp.ne.s32.totalorder %s108, %s122
      %p124 = scmp.eq.s32.totalorder %s30, 0
      %p125 = por %p123, %p124
      %s127 = sadd.s32 %s126, 1
      %p130 = scmp.eq.s32.totalorder %s24, 1
      %p131 = scmp.ne.s32.totalorder %s126, %s128
      %p132 = scmp.eq.s32.totalorder %s24, 0
      %p133 = por %p131, %p132
      %p134 = scmp.ne.s32.totalorder %s126, %s128
      %p135 = scmp.eq.s32.totalorder %s29, 1
      %p136 = por %p134, %p135
      %p137 = scmp.ne.s32.totalorder %s128, %s129
      %p138 = scmp.eq.s32.totalorder %s29, 0
      %p139 = por %p137, %p138
      %p140 = scmp.ne.s32.totalorder %s128, %s129
      %p141 = scmp.eq.s32.totalorder %s30, 1
      %p142 = por %p140, %p141
      %p144 = scmp.ne.s32.totalorder %s129, %s143
      %p145 = scmp.eq.s32.totalorder %s30, 0
      %p146 = por %p144, %p145
      %s148 = sadd.s32 %s147, 1
      %p151 = scmp.eq.s32.totalorder %s24, 1
      %p152 = scmp.ne.s32.totalorder %s147, %s149
      %p153 = scmp.eq.s32.totalorder %s24, 0
      %p154 = por %p152, %p153
      %p155 = scmp.ne.s32.totalorder %s147, %s149
      %p156 = scmp.eq.s32.totalorder %s29, 1
      %p157 = por %p155, %p156
      %p158 = scmp.ne.s32.totalorder %s149, %s150
      %p159 = scmp.eq.s32.totalorder %s29, 0
      %p160 = por %p158, %p159
      %p161 = scmp.ne.s32.totalorder %s149, %s150
      %p162 = scmp.eq.s32.totalorder %s30, 1
      %p163 = por %p161, %p162
      %p165 = scmp.ne.s32.totalorder %s150, %s164
      %p166 = scmp.eq.s32.totalorder %s30, 0
      %p167 = por %p165, %p166
      %s169 = sadd.s32 %s168, 1
      %p172 = scmp.eq.s32.totalorder %s24, 1
      %p173 = scmp.ne.s32.totalorder %s168, %s170
      %p174 = scmp.eq.s32.totalorder %s24, 0
      %p175 = por %p173, %p174
      %p176 = scmp.ne.s32.totalorder %s168, %s170
      %p177 = scmp.eq.s32.totalorder %s29, 1
      %p178 = por %p176, %p177
      %p179 = scmp.ne.s32.totalorder %s170, %s171
      %p180 = scmp.eq.s32.totalorder %s29, 0
      %p181 = por %p179, %p180
      %p182 = scmp.ne.s32.totalorder %s170, %s171
      %p183 = scmp.eq.s32.totalorder %s30, 1
      %p184 = por %p182, %p183
      %p186 = scmp.ne.s32.totalorder %s171, %s185
      %p187 = scmp.eq.s32.totalorder %s30, 0
      %p188 = por %p186, %p187
      %s189 = ssub.s32 %s24, %s31
      %p190 = scmp.eq.s32.totalorder %s189, 0
      %s192 = sadd.s32 %s191, 1
      %s193 = scalar_select %p190, %s191, %s192
      %p196 = pneg %p190
      %p197 = scmp.eq.s32.totalorder %s24, 1
      %p198 = por %p196, %p197
      %p199 = scmp.ne.s32.totalorder %s191, %s194
      %p200 = scmp.eq.s32.totalorder %s24, 0
      %p201 = por %p199, %p200
      %p202 = scmp.ne.s32.totalorder %s191, %s194
      %p203 = scmp.eq.s32.totalorder %s29, 1
      %p204 = por %p202, %p203
      %p205 = scmp.ne.s32.totalorder %s194, %s195
      %p206 = scmp.eq.s32.totalorder %s29, 0
      %p207 = por %p205, %p206
      %p208 = scmp.ne.s32.totalorder %s194, %s195
      %p209 = scmp.eq.s32.totalorder %s30, 1
      %p210 = por %p208, %p209
      %p212 = scmp.ne.s32.totalorder %s195, %s211
      %p213 = scmp.eq.s32.totalorder %s30, 0
      %p214 = por %p212, %p213
      %s215 = ssub.s32 %s24, %s31
      %p216 = scmp.eq.s32.totalorder %s215, 0
      %s218 = sadd.s32 %s217, 1
      %s219 = scalar_select %p216, %s217, %s218
      %p222 = pneg %p216
      %p223 = scmp.eq.s32.totalorder %s24, 1
      %p224 = por %p222, %p223
      %p225 = scmp.ne.s32.totalorder %s217, %s220
      %p226 = scmp.eq.s32.totalorder %s24, 0
      %p227 = por %p225, %p226
      %p228 = scmp.ne.s32.totalorder %s217, %s220
      %p229 = scmp.eq.s32.totalorder %s29, 1
      %p230 = por %p228, %p229
      %p231 = scmp.ne.s32.totalorder %s220, %s221
      %p232 = scmp.eq.s32.totalorder %s29, 0
      %p233 = por %p231, %p232
      %p234 = scmp.ne.s32.totalorder %s220, %s221
      %p235 = scmp.eq.s32.totalorder %s30, 1
      %p236 = por %p234, %p235
      %p238 = scmp.ne.s32.totalorder %s221, %s237
      %p239 = scmp.eq.s32.totalorder %s30, 0
      %p240 = por %p238, %p239
      %p241 = scmp.le.s32.totalorder 1, %s24
      %p242 = scmp.lt.s32.totalorder %s24, 3
      %p243 = pnand %p241, %p242
      %p244 = pneg %p243
      // Predicated region
      $region9: #{tpu_custom_call.1} parent=5 // pred_check
        _
      $region10: #{tpu_custom_call.1} parent=5 // pred_check_branch
        %246 = sbr.rel (%p243) target = $region12
      $region11: #{tpu_custom_call.1} parent=5 // pred_region
        %s247 = ssub.s32 %s24, 1
        // Predicated region
        $region13: #{tpu_custom_call.1} parent=11 // pred_check
          %p248 = pneg %p97
        $region14: #{tpu_custom_call.1} parent=11 // pred_check_branch
          %250 = sbr.rel (%p248) target = $region16
        $region15: #{tpu_custom_call.1} parent=11 // pred_region
          _
        $region16: #{tpu_custom_call.1} parent=11 // pred_fallthru
          _
        // Predicated region
        $region17: #{tpu_custom_call.1} parent=11 // pred_check
          %p251 = pneg %p118
        $region18: #{tpu_custom_call.1} parent=11 // pred_check_branch
          %253 = sbr.rel (%p251) target = $region20
        $region19: #{tpu_custom_call.1} parent=11 // pred_region
          _
        $region20: #{tpu_custom_call.1} parent=11 // pred_fallthru
          _
        // Predicated region
        $region21: #{tpu_custom_call.1} parent=11 // pred_check
          %p254 = pneg %p139
        $region22: #{tpu_custom_call.1} parent=11 // pred_check_branch
          %256 = sbr.rel (%p254) target = $region24
        $region23: #{tpu_custom_call.1} parent=11 // pred_region
          _
        $region24: #{tpu_custom_call.1} parent=11 // pred_fallthru
          _
        // Predicated region
        $region25: #{tpu_custom_call.1} parent=11 // pred_check
          %p257 = pneg %p160
        $region26: #{tpu_custom_call.1} parent=11 // pred_check_branch
          %259 = sbr.rel (%p257) target = $region28
        $region27: #{tpu_custom_call.1} parent=11 // pred_region
          _
        $region28: #{tpu_custom_call.1} parent=11 // pred_fallthru
          _
        // Predicated region
        $region29: #{tpu_custom_call.1} parent=11 // pred_check
          %p260 = pneg %p181
        $region30: #{tpu_custom_call.1} parent=11 // pred_check_branch
          %262 = sbr.rel (%p260) target = $region32
        $region31: #{tpu_custom_call.1} parent=11 // pred_region
          _
        $region32: #{tpu_custom_call.1} parent=11 // pred_fallthru
          _
      $region12: #{tpu_custom_call.1} parent=5 // pred_fallthru
        _
      %p263 = scmp.lt.s32.totalorder %s24, 2
      // Predicated region
      $region33: #{tpu_custom_call.1} parent=5 // pred_check
        %p264 = pneg %p263
      $region34: #{tpu_custom_call.1} parent=5 // pred_check_branch
        %266 = sbr.rel (%p264) target = $region36
      $region35: #{tpu_custom_call.1} parent=5 // pred_region
        // Predicated region
        $region37: #{tpu_custom_call.1} parent=35 // pred_check
          %p267 = pneg %p44
        $region38: #{tpu_custom_call.1} parent=35 // pred_check_branch
          %269 = sbr.rel (%p267) target = $region40
        $region39: #{tpu_custom_call.1} parent=35 // pred_region
          %s270 = sand.u32 %s34, 1
          %s271 = scalar_lea.sflag [#allocation3], %s270
          %s272 = sand.u32 %s34, 1
          %s273 = smul.addr %s272, 8
          %s274 = scalar_lea.vmem [#allocation2], %s273
          %s276 = ssub.s32 128, 128
          %277 = vsyncadd %s271, %s276
          %s278 = smul.addr %s24, 128
          %s279 = scalar_lea.hbm %s0, %s278
          %s281 = sshll.u32 %s274, 4
          %s282 = int_to_ptr.vmem [resolvable:$true] %s281
          %284 = dma.hbm_to_vmem [thread:$0]  %s279, 128, %s282, %s271
        $region40: #{tpu_custom_call.1} parent=35 // pred_fallthru
          _
        // Predicated region
        $region41: #{tpu_custom_call.1} parent=35 // pred_check
          %p285 = pneg %p70
        $region42: #{tpu_custom_call.1} parent=35 // pred_check_branch
          %287 = sbr.rel (%p285) target = $region44
        $region43: #{tpu_custom_call.1} parent=35 // pred_region
          %s288 = sand.u32 %s60, 1
          %s289 = scalar_lea.sflag [#allocation6], %s288
          %s290 = sand.u32 %s60, 1
          %s291 = smul.addr %s290, 8
          %s292 = scalar_lea.vmem [#allocation5], %s291
          %s294 = ssub.s32 128, 128
          %295 = vsyncadd %s289, %s294
          %s296 = smul.addr %s24, 128
          %s297 = scalar_lea.hbm %s1, %s296
          %s299 = sshll.u32 %s292, 4
          %s300 = int_to_ptr.vmem [resolvable:$true] %s299
          %302 = dma.hbm_to_vmem [thread:$0]  %s297, 128, %s300, %s289
        $region44: #{tpu_custom_call.1} parent=35 // pred_fallthru
          _
      $region36: #{tpu_custom_call.1} parent=5 // pred_fallthru
        _
      %p303 = scmp.le.s32.totalorder 1, %s24
      %p304 = scmp.lt.s32.totalorder %s24, 3
      %p305 = pnand %p303, %p304
      %p306 = pneg %p305
      // Predicated region
      $region45: #{tpu_custom_call.1} parent=5 // pred_check
        _
      $region46: #{tpu_custom_call.1} parent=5 // pred_check_branch
        %308 = sbr.rel (%p305) target = $region48
      $region47: #{tpu_custom_call.1} parent=5 // pred_region
        %s309 = ssub.s32 %s24, 1
        %s310 = sand.u32 %s37, 1
        %s311 = scalar_lea.sflag [#allocation3], %s310
        %s312 = sand.u32 %s37, 1
        %s313 = smul.addr %s312, 8
        %s314 = scalar_lea.vmem [#allocation2], %s313
        // Predicated region
        $region49: #{tpu_custom_call.1} parent=47 // pred_check
          %p315 = pneg %p50
        $region50: #{tpu_custom_call.1} parent=47 // pred_check_branch
          %317 = sbr.rel (%p315) target = $region52
        $region51: #{tpu_custom_call.1} parent=47 // pred_region
          %318 = dma.done %s311, 128
        $region52: #{tpu_custom_call.1} parent=47 // pred_fallthru
          _
        %s319 = sand.u32 %s63, 1
        %s320 = scalar_lea.sflag [#allocation6], %s319
        %s321 = sand.u32 %s63, 1
        %s322 = smul.addr %s321, 8
        %s323 = scalar_lea.vmem [#allocation5], %s322
        // Predicated region
        $region53: #{tpu_custom_call.1} parent=47 // pred_check
          %p324 = pneg %p76
        $region54: #{tpu_custom_call.1} parent=47 // pred_check_branch
          %326 = sbr.rel (%p324) target = $region56
        $region55: #{tpu_custom_call.1} parent=47 // pred_region
          %327 = dma.done %s320, 128
        $region56: #{tpu_custom_call.1} parent=47 // pred_fallthru
          _
        %s328 = sand.u32 %s37, 1
        %s329 = scalar_lea.sflag [#allocation3], %s328
        %s330 = sand.u32 %s37, 1
        %s331 = smul.addr %s330, 8
        %s332 = scalar_lea.vmem [#allocation2], %s331
        %p333 = pneg %p50
        %p334 = pneg %p47
        %s335 = sand.u32 %s63, 1
        %s336 = scalar_lea.sflag [#allocation6], %s335
        %s337 = sand.u32 %s63, 1
        %s338 = smul.addr %s337, 8
        %s339 = scalar_lea.vmem [#allocation5], %s338
        %p340 = pneg %p76
        %p341 = pneg %p73
        %p342 = pneg %p97
        %p343 = pneg %p94
        %p344 = pneg %p118
        %p345 = pneg %p115
        %p346 = pneg %p139
        %p347 = pneg %p136
        %p348 = pneg %p160
        %p349 = pneg %p157
        %p350 = pneg %p181
        %p351 = pneg %p178
        %p352 = pneg %p207
        %p353 = pneg %p204
        %s354 = sand.u32 %s194, 1
        %s355 = scalar_lea.sflag [#allocation4], %s354
        %s356 = sand.u32 %s194, 1
        %s357 = smul.addr %s356, 8
        %s358 = scalar_lea.vmem [#allocation7], %s357
        %p359 = pneg %p233
        %p360 = pneg %p230
        %s361 = sand.u32 %s220, 1
        %s362 = sand.u32 %s220, 1
        %s363 = smul.addr %s362, 64
        %s364 = scalar_lea.vmem [#allocation8], %s363
        %v365 = vld [vmem:[%s314] sm:$0xff]
        %v366 = vld [vmem:[%s323] sm:$0xff]
        %v367 = vld [vmem:[%s6] sm:$0xf]
        %v368 = vld [vmem:[%s2] sm:$0xff]
        %v369 = vld [vmem:[%s2 + $0x8] sm:$0xff]
        %v370 = vld [vmem:[%s2 + $0x10] sm:$0xff]
        %v371 = vld [vmem:[%s2 + $0x18] sm:$0xff]
        %vm372 = vcmask 261120
        %v374 = vsel %vm372, %v365, 0
        %376 = vmatprep.subr.mxu0 0.0
        %377 = vmatpush1.msra.mxu0 %v368
        %378 = vmatprep.subr.mxu0 0.0
        %379 = vmatpush1.msra.mxu0 %v369
        %380 = vmatprep.subr.mxu0 0.0
        %381 = vmatpush1.msra.mxu0 %v370
        %382 = vmatprep.subr.mxu0 0.0
        %383 = vmatpush1.msra.mxu0 %v371
        %384 = vmatprep.subr.mxu0 0.0
        %385 = vmatpush1.msra.mxu0 0.0
        %386 = vmatprep.subr.mxu0 0.0
        %387 = vmatpush1.msra.mxu0 0.0
        %388 = vmatprep.subr.mxu0 0.0
        %389 = vmatpush1.msra.mxu0 0.0
        %390 = vmatprep.subr.mxu0 0.0
        %391 = vmatpush1.msra.mxu0 0.0
        %392 = vmatprep.subr.mxu0 0.0
        %393 = vmatpush1.msra.mxu0 0.0
        %394 = vmatprep.subr.mxu0 0.0
        %395 = vmatpush1.msra.mxu0 0.0
        %396 = vmatprep.subr.mxu0 0.0
        %397 = vmatpush1.msra.mxu0 0.0
        %398 = vmatprep.subr.mxu0 0.0
        %399 = vmatpush1.msra.mxu0 0.0
        %400 = vmatprep.subr.mxu0 0.0
        %401 = vmatpush1.msra.mxu0 0.0
        %402 = vmatprep.subr.mxu0 0.0
        %403 = vmatpush1.msra.mxu0 0.0
        %404 = vmatprep.subr.mxu0 0.0
        %405 = vmatpush1.msra.mxu0 0.0
        %406 = vmatprep.subr.mxu0 0.0
        %407 = vmatpush1.msra.mxu0 0.0
        %408 = vmatprep.subr.mxu0 0.0
        %409 = vmatpush1.msra.mxu0 0.0
        %410 = vmatprep.subr.mxu0 0.0
        %411 = vmatpush1.msra.mxu0 0.0
        %412 = vmatprep.subr.mxu0 0.0
        %413 = vmatpush1.msra.mxu0 0.0
        %414 = vmatprep.subr.mxu0 0.0
        %415 = vmatpush1.msra.mxu0 0.0
        %416 = vmatprep.subr.mxu0 0.0
        %417 = vmatpush1.msra.mxu0 0.0
        %418 = vmatprep.subr.mxu0 0.0
        %419 = vmatpush1.msra.mxu0 0.0
        %420 = vmatprep.subr.mxu0 0.0
        %421 = vmatpush1.msra.mxu0 0.0
        %422 = vmatprep.subr.mxu0 0.0
        %423 = vmatpush1.msra.mxu0 0.0
        %424 = vmatprep.subr.mxu0 0.0
        %425 = vmatpush1.msra.mxu0 0.0
        %426 = vmatprep.subr.mxu0 0.0
        %427 = vmatpush1.msra.mxu0 0.0
        %428 = vmatprep.subr.mxu0 0.0
        %429 = vmatpush1.msra.mxu0 0.0
        %430 = vmatprep.subr.mxu0 0.0
        %431 = vmatpush1.msra.mxu0 0.0
        %432 = vmatprep.subr.mxu0 0.0
        %433 = vmatpush1.msra.mxu0 0.0
        %434 = vmatprep.subr.mxu0 0.0
        %435 = vmatpush1.msra.mxu0 0.0
        %436 = vmatprep.subr.mxu0 0.0
        %437 = vmatpush1.msra.mxu0 0.0
        %438 = vmatprep.subr.mxu0 0.0
        %439 = vmatpush1.msra.mxu0 0.0
        %440 = vmatprep.mubr.f32.mxu0 0.0
        %441 = vmatmul.mubr.f32.gmra.mrb[0].mxu0 %v374
        %v442 = vpop.f32.mrb[0].mxu0
        %v443 = vadd.f32 0.0, %v442
        %v444 = vpop.f32.mrb[0].mxu0
        %445 = vdwg.mxu0
        %447 = vrot.lane.b32.xlu0 %v443, 96
        %v448 = vpop.permute.xlu0 %447
        %vm449 = vcmask 64512
        %v450 = vsel %vm449, %v443, 0
        %v452 = vsel %vm449, %v448, 0
        %454 = vmatprep.subr.mxu0 0.0
        %455 = vmatpush1.xpose.msra.mxu0 %v452
        %456 = vmatprep.subr.mxu0 0.0
        %457 = vmatpush1.xpose.msra.mxu0 0.0
        %458 = vmatprep.subr.mxu0 0.0
        %459 = vmatpush1.xpose.msra.mxu0 0.0
        %460 = vmatprep.subr.mxu0 0.0
        %461 = vmatpush1.xpose.msra.mxu0 0.0
        %462 = vmatprep.subr.mxu0 0.0
        %463 = vmatpush1.xpose.msra.mxu0 0.0
        %464 = vmatprep.subr.mxu0 0.0
        %465 = vmatpush1.xpose.msra.mxu0 0.0
        %466 = vmatprep.subr.mxu0 0.0
        %467 = vmatpush1.xpose.msra.mxu0 0.0
        %468 = vmatprep.subr.mxu0 0.0
        %469 = vmatpush1.xpose.msra.mxu0 0.0
        %470 = vmatprep.subr.mxu0 0.0
        %471 = vmatpush1.xpose.msra.mxu0 0.0
        %472 = vmatprep.subr.mxu0 0.0
        %473 = vmatpush1.xpose.msra.mxu0 0.0
        %474 = vmatprep.subr.mxu0 0.0
        %475 = vmatpush1.xpose.msra.mxu0 0.0
        %476 = vmatprep.subr.mxu0 0.0
        %477 = vmatpush1.xpose.msra.mxu0 0.0
        %478 = vmatprep.subr.mxu0 0.0
        %479 = vmatpush1.xpose.msra.mxu0 0.0
        %480 = vmatprep.subr.mxu0 0.0
        %481 = vmatpush1.xpose.msra.mxu0 0.0
        %482 = vmatprep.subr.mxu0 0.0
        %483 = vmatpush1.xpose.msra.mxu0 0.0
        %484 = vmatprep.subr.mxu0 0.0
        %485 = vmatpush1.xpose.msra.mxu0 0.0
        %486 = vmatprep.subr.mxu0 0.0
        %487 = vmatpush1.xpose.msra.mxu0 0.0
        %488 = vmatprep.subr.mxu0 0.0
        %489 = vmatpush1.xpose.msra.mxu0 0.0
        %490 = vmatprep.subr.mxu0 0.0
        %491 = vmatpush1.xpose.msra.mxu0 0.0
        %492 = vmatprep.subr.mxu0 0.0
        %493 = vmatpush1.xpose.msra.mxu0 0.0
        %494 = vmatprep.subr.mxu0 0.0
        %495 = vmatpush1.xpose.msra.mxu0 0.0
        %496 = vmatprep.subr.mxu0 0.0
        %497 = vmatpush1.xpose.msra.mxu0 0.0
        %498 = vmatprep.subr.mxu0 0.0
        %499 = vmatpush1.xpose.msra.mxu0 0.0
        %500 = vmatprep.subr.mxu0 0.0
        %501 = vmatpush1.xpose.msra.mxu0 0.0
        %502 = vmatprep.subr.mxu0 0.0
        %503 = vmatpush1.xpose.msra.mxu0 0.0
        %504 = vmatprep.subr.mxu0 0.0
        %505 = vmatpush1.xpose.msra.mxu0 0.0
        %506 = vmatprep.subr.mxu0 0.0
        %507 = vmatpush1.xpose.msra.mxu0 0.0
        %508 = vmatprep.subr.mxu0 0.0
        %509 = vmatpush1.xpose.msra.mxu0 0.0
        %510 = vmatprep.subr.mxu0 0.0
        %511 = vmatpush1.xpose.msra.mxu0 0.0
        %512 = vmatprep.subr.mxu0 0.0
        %513 = vmatpush1.xpose.msra.mxu0 0.0
        %514 = vmatprep.subr.mxu0 0.0
        %515 = vmatpush1.xpose.msra.mxu0 0.0
        %516 = vmatprep.subr.mxu0 0.0
        %517 = vmatpush1.xpose.msra.mxu0 0.0
        %518 = vmatprep.mubr.f32.mxu0 0.0
        %519 = vmatmul.mubr.f32.gmra.mrb[0].mxu0 %v450
        %v520 = vpop.f32.mrb[0].mxu0
        %v521 = vadd.f32 0.0, %v520
        %v522 = vpop.f32.mrb[0].mxu0
        %523 = vdwg.mxu0
        %524 = vst.msk [vmem:[%s364] sm:$0xff] %vm449, %v521
        %v525 = vadd.f32 %v521, %v366
        %v526 = vsel %vm449, %v525, -inf
        %527 = vmax.xlane.f32.xlu0 %v526
        %v528 = vpop.xlane.xlu0 %527
        %v529 = vsub.f32 %v525, %v528
        %v530 = vmul.f32 %v529, 1.442695
        %v531 = vpow.pop %v530
        %v532 = vsel %vm449, %v531, 0.0
        %533 = vadd.xlane.f32.xlu0 %v532
        %v534 = vpop.xlane.xlu0 %533
        %v535 = vrcp.pop %v534
        %v536 = vmul.f32 %v531, %v535
        %537 = vrot.lane.b32.xlu0 %v443, 64
        %v538 = vpop.permute.xlu0 %537
        %v541 = vsel %vm449, %v536, 0
        %543 = vmatprep.subr.mxu0 0.0
        %544 = vmatpush1.msra.mxu0 %v538
        %545 = vmatprep.subr.mxu0 0.0
        %546 = vmatpush1.msra.mxu0 0.0
        %547 = vmatprep.subr.mxu0 0.0
        %548 = vmatpush1.msra.mxu0 0.0
        %549 = vmatprep.subr.mxu0 0.0
        %550 = vmatpush1.msra.mxu0 0.0
        %551 = vmatprep.subr.mxu0 0.0
        %552 = vmatpush1.msra.mxu0 0.0
        %553 = vmatprep.subr.mxu0 0.0
        %554 = vmatpush1.msra.mxu0 0.0
        %555 = vmatprep.subr.mxu0 0.0
        %556 = vmatpush1.msra.mxu0 0.0
        %557 = vmatprep.subr.mxu0 0.0
        %558 = vmatpush1.msra.mxu0 0.0
        %559 = vmatprep.subr.mxu0 0.0
        %560 = vmatpush1.msra.mxu0 0.0
        %561 = vmatprep.subr.mxu0 0.0
        %562 = vmatpush1.msra.mxu0 0.0
        %563 = vmatprep.subr.mxu0 0.0
        %564 = vmatpush1.msra.mxu0 0.0
        %565 = vmatprep.subr.mxu0 0.0
        %566 = vmatpush1.msra.mxu0 0.0
        %567 = vmatprep.subr.mxu0 0.0
        %568 = vmatpush1.msra.mxu0 0.0
        %569 = vmatprep.subr.mxu0 0.0
        %570 = vmatpush1.msra.mxu0 0.0
        %571 = vmatprep.subr.mxu0 0.0
        %572 = vmatpush1.msra.mxu0 0.0
        %573 = vmatprep.subr.mxu0 0.0
        %574 = vmatpush1.msra.mxu0 0.0
        %575 = vmatprep.subr.mxu0 0.0
        %576 = vmatpush1.msra.mxu0 0.0
        %577 = vmatprep.subr.mxu0 0.0
        %578 = vmatpush1.msra.mxu0 0.0
        %579 = vmatprep.subr.mxu0 0.0
        %580 = vmatpush1.msra.mxu0 0.0
        %581 = vmatprep.subr.mxu0 0.0
        %582 = vmatpush1.msra.mxu0 0.0
        %583 = vmatprep.subr.mxu0 0.0
        %584 = vmatpush1.msra.mxu0 0.0
        %585 = vmatprep.subr.mxu0 0.0
        %586 = vmatpush1.msra.mxu0 0.0
        %587 = vmatprep.subr.mxu0 0.0
        %588 = vmatpush1.msra.mxu0 0.0
        %589 = vmatprep.subr.mxu0 0.0
        %590 = vmatpush1.msra.mxu0 0.0
        %591 = vmatprep.subr.mxu0 0.0
        %592 = vmatpush1.msra.mxu0 0.0
        %593 = vmatprep.subr.mxu0 0.0
        %594 = vmatpush1.msra.mxu0 0.0
        %595 = vmatprep.subr.mxu0 0.0
        %596 = vmatpush1.msra.mxu0 0.0
        %597 = vmatprep.subr.mxu0 0.0
        %598 = vmatpush1.msra.mxu0 0.0
        %599 = vmatprep.subr.mxu0 0.0
        %600 = vmatpush1.msra.mxu0 0.0
        %601 = vmatprep.subr.mxu0 0.0
        %602 = vmatpush1.msra.mxu0 0.0
        %603 = vmatprep.subr.mxu0 0.0
        %604 = vmatpush1.msra.mxu0 0.0
        %605 = vmatprep.subr.mxu0 0.0
        %606 = vmatpush1.msra.mxu0 0.0
        %607 = vmatprep.mubr.f32.mxu0 0.0
        %608 = vmatmul.mubr.f32.gmra.mrb[0].mxu0 %v541
        %v609 = vpop.f32.mrb[0].mxu0
        %v610 = vadd.f32 0.0, %v609
        %v611 = vpop.f32.mrb[0].mxu0
        %612 = vdwg.mxu0
        %613 = vrot.lane.b32.xlu0 %v443, 120
        %v614 = vpop.permute.xlu0 %613
        %615 = vrot.lane.b32.xlu0 %v443, 88
        %v616 = vpop.permute.xlu0 %615
        %v617 = vsel %vm449, %v614, 0
        %v619 = vsel %vm449, %v616, 0
        %621 = vmatprep.subr.mxu0 0.0
        %622 = vmatpush1.xpose.msra.mxu0 %v619
        %623 = vmatprep.subr.mxu0 0.0
        %624 = vmatpush1.xpose.msra.mxu0 0.0
        %625 = vmatprep.subr.mxu0 0.0
        %626 = vmatpush1.xpose.msra.mxu0 0.0
        %627 = vmatprep.subr.mxu0 0.0
        %628 = vmatpush1.xpose.msra.mxu0 0.0
        %629 = vmatprep.subr.mxu0 0.0
        %630 = vmatpush1.xpose.msra.mxu0 0.0
        %631 = vmatprep.subr.mxu0 0.0
        %632 = vmatpush1.xpose.msra.mxu0 0.0
        %633 = vmatprep.subr.mxu0 0.0
        %634 = vmatpush1.xpose.msra.mxu0 0.0
        %635 = vmatprep.subr.mxu0 0.0
        %636 = vmatpush1.xpose.msra.mxu0 0.0
        %637 = vmatprep.subr.mxu0 0.0
        %638 = vmatpush1.xpose.msra.mxu0 0.0
        %639 = vmatprep.subr.mxu0 0.0
        %640 = vmatpush1.xpose.msra.mxu0 0.0
        %641 = vmatprep.subr.mxu0 0.0
        %642 = vmatpush1.xpose.msra.mxu0 0.0
        %643 = vmatprep.subr.mxu0 0.0
        %644 = vmatpush1.xpose.msra.mxu0 0.0
        %645 = vmatprep.subr.mxu0 0.0
        %646 = vmatpush1.xpose.msra.mxu0 0.0
        %647 = vmatprep.subr.mxu0 0.0
        %648 = vmatpush1.xpose.msra.mxu0 0.0
        %649 = vmatprep.subr.mxu0 0.0
        %650 = vmatpush1.xpose.msra.mxu0 0.0
        %651 = vmatprep.subr.mxu0 0.0
        %652 = vmatpush1.xpose.msra.mxu0 0.0
        %653 = vmatprep.subr.mxu0 0.0
        %654 = vmatpush1.xpose.msra.mxu0 0.0
        %655 = vmatprep.subr.mxu0 0.0
        %656 = vmatpush1.xpose.msra.mxu0 0.0
        %657 = vmatprep.subr.mxu0 0.0
        %658 = vmatpush1.xpose.msra.mxu0 0.0
        %659 = vmatprep.subr.mxu0 0.0
        %660 = vmatpush1.xpose.msra.mxu0 0.0
        %661 = vmatprep.subr.mxu0 0.0
        %662 = vmatpush1.xpose.msra.mxu0 0.0
        %663 = vmatprep.subr.mxu0 0.0
        %664 = vmatpush1.xpose.msra.mxu0 0.0
        %665 = vmatprep.subr.mxu0 0.0
        %666 = vmatpush1.xpose.msra.mxu0 0.0
        %667 = vmatprep.subr.mxu0 0.0
        %668 = vmatpush1.xpose.msra.mxu0 0.0
        %669 = vmatprep.subr.mxu0 0.0
        %670 = vmatpush1.xpose.msra.mxu0 0.0
        %671 = vmatprep.subr.mxu0 0.0
        %672 = vmatpush1.xpose.msra.mxu0 0.0
        %673 = vmatprep.subr.mxu0 0.0
        %674 = vmatpush1.xpose.msra.mxu0 0.0
        %675 = vmatprep.subr.mxu0 0.0
        %676 = vmatpush1.xpose.msra.mxu0 0.0
        %677 = vmatprep.subr.mxu0 0.0
        %678 = vmatpush1.xpose.msra.mxu0 0.0
        %679 = vmatprep.subr.mxu0 0.0
        %680 = vmatpush1.xpose.msra.mxu0 0.0
        %681 = vmatprep.subr.mxu0 0.0
        %682 = vmatpush1.xpose.msra.mxu0 0.0
        %683 = vmatprep.subr.mxu0 0.0
        %684 = vmatpush1.xpose.msra.mxu0 0.0
        %685 = vmatprep.mubr.f32.mxu0 0.0
        %686 = vmatmul.mubr.f32.gmra.mrb[0].mxu0 %v617
        %v687 = vpop.f32.mrb[0].mxu0
        %v688 = vadd.f32 0.0, %v687
        %v689 = vpop.f32.mrb[0].mxu0
        %690 = vdwg.mxu0
        %691 = vst.msk [vmem:[%s364 + $0x8] sm:$0xff] %vm449, %v688
        %v692 = vadd.f32 %v688, %v366
        %v693 = vsel %vm449, %v692, -inf
        %694 = vmax.xlane.f32.xlu0 %v693
        %v695 = vpop.xlane.xlu0 %694
        %v696 = vsub.f32 %v692, %v695
        %v697 = vmul.f32 %v696, 1.442695
        %v698 = vpow.pop %v697
        %v699 = vsel %vm449, %v698, 0.0
        %700 = vadd.xlane.f32.xlu0 %v699
        %v701 = vpop.xlane.xlu0 %700
        %v702 = vrcp.pop %v701
        %v703 = vmul.f32 %v698, %v702
        %704 = vrot.lane.b32.xlu0 %v443, 56
        %v705 = vpop.permute.xlu0 %704
        %v708 = vsel %vm449, %v703, 0
        %710 = vmatprep.subr.mxu0 0.0
        %711 = vmatpush1.msra.mxu0 %v705
        %712 = vmatprep.subr.mxu0 0.0
        %713 = vmatpush1.msra.mxu0 0.0
        %714 = vmatprep.subr.mxu0 0.0
        %715 = vmatpush1.msra.mxu0 0.0
        %716 = vmatprep.subr.mxu0 0.0
        %717 = vmatpush1.msra.mxu0 0.0
        %718 = vmatprep.subr.mxu0 0.0
        %719 = vmatpush1.msra.mxu0 0.0
        %720 = vmatprep.subr.mxu0 0.0
        %721 = vmatpush1.msra.mxu0 0.0
        %722 = vmatprep.subr.mxu0 0.0
        %723 = vmatpush1.msra.mxu0 0.0
        %724 = vmatprep.subr.mxu0 0.0
        %725 = vmatpush1.msra.mxu0 0.0
        %726 = vmatprep.subr.mxu0 0.0
        %727 = vmatpush1.msra.mxu0 0.0
        %728 = vmatprep.subr.mxu0 0.0
        %729 = vmatpush1.msra.mxu0 0.0
        %730 = vmatprep.subr.mxu0 0.0
        %731 = vmatpush1.msra.mxu0 0.0
        %732 = vmatprep.subr.mxu0 0.0
        %733 = vmatpush1.msra.mxu0 0.0
        %734 = vmatprep.subr.mxu0 0.0
        %735 = vmatpush1.msra.mxu0 0.0
        %736 = vmatprep.subr.mxu0 0.0
        %737 = vmatpush1.msra.mxu0 0.0
        %738 = vmatprep.subr.mxu0 0.0
        %739 = vmatpush1.msra.mxu0 0.0
        %740 = vmatprep.subr.mxu0 0.0
        %741 = vmatpush1.msra.mxu0 0.0
        %742 = vmatprep.subr.mxu0 0.0
        %743 = vmatpush1.msra.mxu0 0.0
        %744 = vmatprep.subr.mxu0 0.0
        %745 = vmatpush1.msra.mxu0 0.0
        %746 = vmatprep.subr.mxu0 0.0
        %747 = vmatpush1.msra.mxu0 0.0
        %748 = vmatprep.subr.mxu0 0.0
        %749 = vmatpush1.msra.mxu0 0.0
        %750 = vmatprep.subr.mxu0 0.0
        %751 = vmatpush1.msra.mxu0 0.0
        %752 = vmatprep.subr.mxu0 0.0
        %753 = vmatpush1.msra.mxu0 0.0
        %754 = vmatprep.subr.mxu0 0.0
        %755 = vmatpush1.msra.mxu0 0.0
        %756 = vmatprep.subr.mxu0 0.0
        %757 = vmatpush1.msra.mxu0 0.0
        %758 = vmatprep.subr.mxu0 0.0
        %759 = vmatpush1.msra.mxu0 0.0
        %760 = vmatprep.subr.mxu0 0.0
        %761 = vmatpush1.msra.mxu0 0.0
        %762 = vmatprep.subr.mxu0 0.0
        %763 = vmatpush1.msra.mxu0 0.0
        %764 = vmatprep.subr.mxu0 0.0
        %765 = vmatpush1.msra.mxu0 0.0
        %766 = vmatprep.subr.mxu0 0.0
        %767 = vmatpush1.msra.mxu0 0.0
        %768 = vmatprep.subr.mxu0 0.0
        %769 = vmatpush1.msra.mxu0 0.0
        %770 = vmatprep.subr.mxu0 0.0
        %771 = vmatpush1.msra.mxu0 0.0
        %772 = vmatprep.subr.mxu0 0.0
        %773 = vmatpush1.msra.mxu0 0.0
        %774 = vmatprep.mubr.f32.mxu0 0.0
        %775 = vmatmul.mubr.f32.gmra.mrb[0].mxu0 %v708
        %v776 = vpop.f32.mrb[0].mxu0
        %v777 = vadd.f32 0.0, %v776
        %v778 = vpop.f32.mrb[0].mxu0
        %779 = vdwg.mxu0
        %780 = vrot.lane.b32.xlu0 %v443, 112
        %v781 = vpop.permute.xlu0 %780
        %782 = vrot.lane.b32.xlu0 %v443, 80
        %v783 = vpop.permute.xlu0 %782
        %v784 = vsel %vm449, %v781, 0
        %v786 = vsel %vm449, %v783, 0
        %788 = vmatprep.subr.mxu0 0.0
        %789 = vmatpush1.xpose.msra.mxu0 %v786
        %790 = vmatprep.subr.mxu0 0.0
        %791 = vmatpush1.xpose.msra.mxu0 0.0
        %792 = vmatprep.subr.mxu0 0.0
        %793 = vmatpush1.xpose.msra.mxu0 0.0
        %794 = vmatprep.subr.mxu0 0.0
        %795 = vmatpush1.xpose.msra.mxu0 0.0
        %796 = vmatprep.subr.mxu0 0.0
        %797 = vmatpush1.xpose.msra.mxu0 0.0
        %798 = vmatprep.subr.mxu0 0.0
        %799 = vmatpush1.xpose.msra.mxu0 0.0
        %800 = vmatprep.subr.mxu0 0.0
        %801 = vmatpush1.xpose.msra.mxu0 0.0
        %802 = vmatprep.subr.mxu0 0.0
        %803 = vmatpush1.xpose.msra.mxu0 0.0
        %804 = vmatprep.subr.mxu0 0.0
        %805 = vmatpush1.xpose.msra.mxu0 0.0
        %806 = vmatprep.subr.mxu0 0.0
        %807 = vmatpush1.xpose.msra.mxu0 0.0
        %808 = vmatprep.subr.mxu0 0.0
        %809 = vmatpush1.xpose.msra.mxu0 0.0
        %810 = vmatprep.subr.mxu0 0.0
        %811 = vmatpush1.xpose.msra.mxu0 0.0
        %812 = vmatprep.subr.mxu0 0.0
        %813 = vmatpush1.xpose.msra.mxu0 0.0
        %814 = vmatprep.subr.mxu0 0.0
        %815 = vmatpush1.xpose.msra.mxu0 0.0
        %816 = vmatprep.subr.mxu0 0.0
        %817 = vmatpush1.xpose.msra.mxu0 0.0
        %818 = vmatprep.subr.mxu0 0.0
        %819 = vmatpush1.xpose.msra.mxu0 0.0
        %820 = vmatprep.subr.mxu0 0.0
        %821 = vmatpush1.xpose.msra.mxu0 0.0
        %822 = vmatprep.subr.mxu0 0.0
        %823 = vmatpush1.xpose.msra.mxu0 0.0
        %824 = vmatprep.subr.mxu0 0.0
        %825 = vmatpush1.xpose.msra.mxu0 0.0
        %826 = vmatprep.subr.mxu0 0.0
        %827 = vmatpush1.xpose.msra.mxu0 0.0
        %828 = vmatprep.subr.mxu0 0.0
        %829 = vmatpush1.xpose.msra.mxu0 0.0
        %830 = vmatprep.subr.mxu0 0.0
        %831 = vmatpush1.xpose.msra.mxu0 0.0
        %832 = vmatprep.subr.mxu0 0.0
        %833 = vmatpush1.xpose.msra.mxu0 0.0
        %834 = vmatprep.subr.mxu0 0.0
        %835 = vmatpush1.xpose.msra.mxu0 0.0
        %836 = vmatprep.subr.mxu0 0.0
        %837 = vmatpush1.xpose.msra.mxu0 0.0
        %838 = vmatprep.subr.mxu0 0.0
        %839 = vmatpush1.xpose.msra.mxu0 0.0
        %840 = vmatprep.subr.mxu0 0.0
        %841 = vmatpush1.xpose.msra.mxu0 0.0
        %842 = vmatprep.subr.mxu0 0.0
        %843 = vmatpush1.xpose.msra.mxu0 0.0
        %844 = vmatprep.subr.mxu0 0.0
        %845 = vmatpush1.xpose.msra.mxu0 0.0
        %846 = vmatprep.subr.mxu0 0.0
        %847 = vmatpush1.xpose.msra.mxu0 0.0
        %848 = vmatprep.subr.mxu0 0.0
        %849 = vmatpush1.xpose.msra.mxu0 0.0
        %850 = vmatprep.subr.mxu0 0.0
        %851 = vmatpush1.xpose.msra.mxu0 0.0
        %852 = vmatprep.mubr.f32.mxu0 0.0
        %853 = vmatmul.mubr.f32.gmra.mrb[0].mxu0 %v784
        %v854 = vpop.f32.mrb[0].mxu0
        %v855 = vadd.f32 0.0, %v854
        %v856 = vpop.f32.mrb[0].mxu0
        %857 = vdwg.mxu0
        %858 = vst.msk [vmem:[%s364 + $0x10] sm:$0xff] %vm449, %v855
        %v859 = vadd.f32 %v855, %v366
        %v860 = vsel %vm449, %v859, -inf
        %861 = vmax.xlane.f32.xlu0 %v860
        %v862 = vpop.xlane.xlu0 %861
        %v863 = vsub.f32 %v859, %v862
        %v864 = vmul.f32 %v863, 1.442695
        %v865 = vpow.pop %v864
        %v866 = vsel %vm449, %v865, 0.0
        %867 = vadd.xlane.f32.xlu0 %v866
        %v868 = vpop.xlane.xlu0 %867
        %v869 = vrcp.pop %v868
        %v870 = vmul.f32 %v865, %v869
        %871 = vrot.lane.b32.xlu0 %v443, 48
        %v872 = vpop.permute.xlu0 %871
        %v875 = vsel %vm449, %v870, 0
        %877 = vmatprep.subr.mxu0 0.0
        %878 = vmatpush1.msra.mxu0 %v872
        %879 = vmatprep.subr.mxu0 0.0
        %880 = vmatpush1.msra.mxu0 0.0
        %881 = vmatprep.subr.mxu0 0.0
        %882 = vmatpush1.msra.mxu0 0.0
        %883 = vmatprep.subr.mxu0 0.0
        %884 = vmatpush1.msra.mxu0 0.0
        %885 = vmatprep.subr.mxu0 0.0
        %886 = vmatpush1.msra.mxu0 0.0
        %887 = vmatprep.subr.mxu0 0.0
        %888 = vmatpush1.msra.mxu0 0.0
        %889 = vmatprep.subr.mxu0 0.0
        %890 = vmatpush1.msra.mxu0 0.0
        %891 = vmatprep.subr.mxu0 0.0
        %892 = vmatpush1.msra.mxu0 0.0
        %893 = vmatprep.subr.mxu0 0.0
        %894 = vmatpush1.msra.mxu0 0.0
        %895 = vmatprep.subr.mxu0 0.0
        %896 = vmatpush1.msra.mxu0 0.0
        %897 = vmatprep.subr.mxu0 0.0
        %898 = vmatpush1.msra.mxu0 0.0
        %899 = vmatprep.subr.mxu0 0.0
        %900 = vmatpush1.msra.mxu0 0.0
        %901 = vmatprep.subr.mxu0 0.0
        %902 = vmatpush1.msra.mxu0 0.0
        %903 = vmatprep.subr.mxu0 0.0
        %904 = vmatpush1.msra.mxu0 0.0
        %905 = vmatprep.subr.mxu0 0.0
        %906 = vmatpush1.msra.mxu0 0.0
        %907 = vmatprep.subr.mxu0 0.0
        %908 = vmatpush1.msra.mxu0 0.0
        %909 = vmatprep.subr.mxu0 0.0
        %910 = vmatpush1.msra.mxu0 0.0
        %911 = vmatprep.subr.mxu0 0.0
        %912 = vmatpush1.msra.mxu0 0.0
        %913 = vmatprep.subr.mxu0 0.0
        %914 = vmatpush1.msra.mxu0 0.0
        %915 = vmatprep.subr.mxu0 0.0
        %916 = vmatpush1.msra.mxu0 0.0
        %917 = vmatprep.subr.mxu0 0.0
        %918 = vmatpush1.msra.mxu0 0.0
        %919 = vmatprep.subr.mxu0 0.0
        %920 = vmatpush1.msra.mxu0 0.0
        %921 = vmatprep.subr.mxu0 0.0
        %922 = vmatpush1.msra.mxu0 0.0
        %923 = vmatprep.subr.mxu0 0.0
        %924 = vmatpush1.msra.mxu0 0.0
        %925 = vmatprep.subr.mxu0 0.0
        %926 = vmatpush1.msra.mxu0 0.0
        %927 = vmatprep.subr.mxu0 0.0
        %928 = vmatpush1.msra.mxu0 0.0
        %929 = vmatprep.subr.mxu0 0.0
        %930 = vmatpush1.msra.mxu0 0.0
        %931 = vmatprep.subr.mxu0 0.0
        %932 = vmatpush1.msra.mxu0 0.0
        %933 = vmatprep.subr.mxu0 0.0
        %934 = vmatpush1.msra.mxu0 0.0
        %935 = vmatprep.subr.mxu0 0.0
        %936 = vmatpush1.msra.mxu0 0.0
        %937 = vmatprep.subr.mxu0 0.0
        %938 = vmatpush1.msra.mxu0 0.0
        %939 = vmatprep.subr.mxu0 0.0
        %940 = vmatpush1.msra.mxu0 0.0
        %941 = vmatprep.mubr.f32.mxu0 0.0
        %942 = vmatmul.mubr.f32.gmra.mrb[0].mxu0 %v875
        %v943 = vpop.f32.mrb[0].mxu0
        %v944 = vadd.f32 0.0, %v943
        %v945 = vpop.f32.mrb[0].mxu0
        %946 = vdwg.mxu0
        %947 = vrot.lane.b32.xlu0 %v443, 104
        %v948 = vpop.permute.xlu0 %947
        %949 = vrot.lane.b32.xlu0 %v443, 72
        %v950 = vpop.permute.xlu0 %949
        %v951 = vsel %vm449, %v948, 0
        %v953 = vsel %vm449, %v950, 0
        %955 = vmatprep.subr.mxu0 0.0
        %956 = vmatpush1.xpose.msra.mxu0 %v953
        %957 = vmatprep.subr.mxu0 0.0
        %958 = vmatpush1.xpose.msra.mxu0 0.0
        %959 = vmatprep.subr.mxu0 0.0
        %960 = vmatpush1.xpose.msra.mxu0 0.0
        %961 = vmatprep.subr.mxu0 0.0
        %962 = vmatpush1.xpose.msra.mxu0 0.0
        %963 = vmatprep.subr.mxu0 0.0
        %964 = vmatpush1.xpose.msra.mxu0 0.0
        %965 = vmatprep.subr.mxu0 0.0
        %966 = vmatpush1.xpose.msra.mxu0 0.0
        %967 = vmatprep.subr.mxu0 0.0
        %968 = vmatpush1.xpose.msra.mxu0 0.0
        %969 = vmatprep.subr.mxu0 0.0
        %970 = vmatpush1.xpose.msra.mxu0 0.0
        %971 = vmatprep.subr.mxu0 0.0
        %972 = vmatpush1.xpose.msra.mxu0 0.0
        %973 = vmatprep.subr.mxu0 0.0
        %974 = vmatpush1.xpose.msra.mxu0 0.0
        %975 = vmatprep.subr.mxu0 0.0
        %976 = vmatpush1.xpose.msra.mxu0 0.0
        %977 = vmatprep.subr.mxu0 0.0
        %978 = vmatpush1.xpose.msra.mxu0 0.0
        %979 = vmatprep.subr.mxu0 0.0
        %980 = vmatpush1.xpose.msra.mxu0 0.0
        %981 = vmatprep.subr.mxu0 0.0
        %982 = vmatpush1.xpose.msra.mxu0 0.0
        %983 = vmatprep.subr.mxu0 0.0
        %984 = vmatpush1.xpose.msra.mxu0 0.0
        %985 = vmatprep.subr.mxu0 0.0
        %986 = vmatpush1.xpose.msra.mxu0 0.0
        %987 = vmatprep.subr.mxu0 0.0
        %988 = vmatpush1.xpose.msra.mxu0 0.0
        %989 = vmatprep.subr.mxu0 0.0
        %990 = vmatpush1.xpose.msra.mxu0 0.0
        %991 = vmatprep.subr.mxu0 0.0
        %992 = vmatpush1.xpose.msra.mxu0 0.0
        %993 = vmatprep.subr.mxu0 0.0
        %994 = vmatpush1.xpose.msra.mxu0 0.0
        %995 = vmatprep.subr.mxu0 0.0
        %996 = vmatpush1.xpose.msra.mxu0 0.0
        %997 = vmatprep.subr.mxu0 0.0
        %998 = vmatpush1.xpose.msra.mxu0 0.0
        %999 = vmatprep.subr.mxu0 0.0
        %1000 = vmatpush1.xpose.msra.mxu0 0.0
        %1001 = vmatprep.subr.mxu0 0.0
        %1002 = vmatpush1.xpose.msra.mxu0 0.0
        %1003 = vmatprep.subr.mxu0 0.0
        %1004 = vmatpush1.xpose.msra.mxu0 0.0
        %1005 = vmatprep.subr.mxu0 0.0
        %1006 = vmatpush1.xpose.msra.mxu0 0.0
        %1007 = vmatprep.subr.mxu0 0.0
        %1008 = vmatpush1.xpose.msra.mxu0 0.0
        %1009 = vmatprep.subr.mxu0 0.0
        %1010 = vmatpush1.xpose.msra.mxu0 0.0
        %1011 = vmatprep.subr.mxu0 0.0
        %1012 = vmatpush1.xpose.msra.mxu0 0.0
        %1013 = vmatprep.subr.mxu0 0.0
        %1014 = vmatpush1.xpose.msra.mxu0 0.0
        %1015 = vmatprep.subr.mxu0 0.0
        %1016 = vmatpush1.xpose.msra.mxu0 0.0
        %1017 = vmatprep.subr.mxu0 0.0
        %1018 = vmatpush1.xpose.msra.mxu0 0.0
        %1019 = vmatprep.mubr.f32.mxu0 0.0
        %1020 = vmatmul.mubr.f32.gmra.mrb[0].mxu0 %v951
        %v1021 = vpop.f32.mrb[0].mxu0
        %v1022 = vadd.f32 0.0, %v1021
        %v1023 = vpop.f32.mrb[0].mxu0
        %1024 = vdwg.mxu0
        %1025 = vst.msk [vmem:[%s364 + $0x18] sm:$0xff] %vm449, %v1022
        %v1026 = vadd.f32 %v1022, %v366
        %v1027 = vsel %vm449, %v1026, -inf
        %1028 = vmax.xlane.f32.xlu0 %v1027
        %v1029 = vpop.xlane.xlu0 %1028
        %v1030 = vsub.f32 %v1026, %v1029
        %v1031 = vmul.f32 %v1030, 1.442695
        %v1032 = vpow.pop %v1031
        %v1033 = vsel %vm449, %v1032, 0.0
        %1034 = vadd.xlane.f32.xlu0 %v1033
        %v1035 = vpop.xlane.xlu0 %1034
        %v1036 = vrcp.pop %v1035
        %v1037 = vmul.f32 %v1032, %v1036
        %1038 = vrot.lane.b32.xlu0 %v443, 40
        %v1039 = vpop.permute.xlu0 %1038
        %v1042 = vsel %vm449, %v1037, 0
        %1044 = vmatprep.subr.mxu0 0.0
        %1045 = vmatpush1.msra.mxu0 %v1039
        %1046 = vmatprep.subr.mxu0 0.0
        %1047 = vmatpush1.msra.mxu0 0.0
        %1048 = vmatprep.subr.mxu0 0.0
        %1049 = vmatpush1.msra.mxu0 0.0
        %1050 = vmatprep.subr.mxu0 0.0
        %1051 = vmatpush1.msra.mxu0 0.0
        %1052 = vmatprep.subr.mxu0 0.0
        %1053 = vmatpush1.msra.mxu0 0.0
        %1054 = vmatprep.subr.mxu0 0.0
        %1055 = vmatpush1.msra.mxu0 0.0
        %1056 = vmatprep.subr.mxu0 0.0
        %1057 = vmatpush1.msra.mxu0 0.0
        %1058 = vmatprep.subr.mxu0 0.0
        %1059 = vmatpush1.msra.mxu0 0.0
        %1060 = vmatprep.subr.mxu0 0.0
        %1061 = vmatpush1.msra.mxu0 0.0
        %1062 = vmatprep.subr.mxu0 0.0
        %1063 = vmatpush1.msra.mxu0 0.0
        %1064 = vmatprep.subr.mxu0 0.0
        %1065 = vmatpush1.msra.mxu0 0.0
        %1066 = vmatprep.subr.mxu0 0.0
        %1067 = vmatpush1.msra.mxu0 0.0
        %1068 = vmatprep.subr.mxu0 0.0
        %1069 = vmatpush1.msra.mxu0 0.0
        %1070 = vmatprep.subr.mxu0 0.0
        %1071 = vmatpush1.msra.mxu0 0.0
        %1072 = vmatprep.subr.mxu0 0.0
        %1073 = vmatpush1.msra.mxu0 0.0
        %1074 = vmatprep.subr.mxu0 0.0
        %1075 = vmatpush1.msra.mxu0 0.0
        %1076 = vmatprep.subr.mxu0 0.0
        %1077 = vmatpush1.msra.mxu0 0.0
        %1078 = vmatprep.subr.mxu0 0.0
        %1079 = vmatpush1.msra.mxu0 0.0
        %1080 = vmatprep.subr.mxu0 0.0
        %1081 = vmatpush1.msra.mxu0 0.0
        %1082 = vmatprep.subr.mxu0 0.0
        %1083 = vmatpush1.msra.mxu0 0.0
        %1084 = vmatprep.subr.mxu0 0.0
        %1085 = vmatpush1.msra.mxu0 0.0
        %1086 = vmatprep.subr.mxu0 0.0
        %1087 = vmatpush1.msra.mxu0 0.0
        %1088 = vmatprep.subr.mxu0 0.0
        %1089 = vmatpush1.msra.mxu0 0.0
        %1090 = vmatprep.subr.mxu0 0.0
        %1091 = vmatpush1.msra.mxu0 0.0
        %1092 = vmatprep.subr.mxu0 0.0
        %1093 = vmatpush1.msra.mxu0 0.0
        %1094 = vmatprep.subr.mxu0 0.0
        %1095 = vmatpush1.msra.mxu0 0.0
        %1096 = vmatprep.subr.mxu0 0.0
        %1097 = vmatpush1.msra.mxu0 0.0
        %1098 = vmatprep.subr.mxu0 0.0
        %1099 = vmatpush1.msra.mxu0 0.0
        %1100 = vmatprep.subr.mxu0 0.0
        %1101 = vmatpush1.msra.mxu0 0.0
        %1102 = vmatprep.subr.mxu0 0.0
        %1103 = vmatpush1.msra.mxu0 0.0
        %1104 = vmatprep.subr.mxu0 0.0
        %1105 = vmatpush1.msra.mxu0 0.0
        %1106 = vmatprep.subr.mxu0 0.0
        %1107 = vmatpush1.msra.mxu0 0.0
        %1108 = vmatprep.mubr.f32.mxu0 0.0
        %1109 = vmatmul.mubr.f32.gmra.mrb[0].mxu0 %v1042
        %v1110 = vpop.f32.mrb[0].mxu0
        %v1111 = vadd.f32 0.0, %v1110
        %v1112 = vpop.f32.mrb[0].mxu0
        %1113 = vdwg.mxu0
        %1115 = vrot.lane.b32.xlu0 %v777, 8
        %v1116 = vpop.permute.xlu0 %1115
        %1119 = vrot.lane.b32.xlu0 %v944, 16
        %v1120 = vpop.permute.xlu0 %1119
        %1123 = vrot.lane.b32.xlu0 %v1111, 24
        %v1124 = vpop.permute.xlu0 %1123
        %v1126 = vsel %vm449, %v610, %v1116
        %vm1127 = vcmask 130048
        %v1128 = vsel %vm1127, %v1126, %v1120
        %vm1129 = vcmask 195584
        %v1130 = vsel %vm1129, %v1128, %v1124
        %v1131 = vld [vmem:[%s3] sm:$0xff]
        %v1132 = vld [vmem:[%s3 + $0x8] sm:$0xff]
        %v1133 = vld [vmem:[%s3 + $0x10] sm:$0xff]
        %v1134 = vld [vmem:[%s3 + $0x18] sm:$0xff]
        %v1136 = vsel %vm372, %v1130, 0
        %1138 = vmatprep.subr.mxu0 0.0
        %1139 = vmatpush1.msra.mxu0 %v1131
        %1140 = vmatprep.subr.mxu0 0.0
        %1141 = vmatpush1.msra.mxu0 %v1132
        %1142 = vmatprep.subr.mxu0 0.0
        %1143 = vmatpush1.msra.mxu0 %v1133
        %1144 = vmatprep.subr.mxu0 0.0
        %1145 = vmatpush1.msra.mxu0 %v1134
        %1146 = vmatprep.subr.mxu0 0.0
        %1147 = vmatpush1.msra.mxu0 0.0
        %1148 = vmatprep.subr.mxu0 0.0
        %1149 = vmatpush1.msra.mxu0 0.0
        %1150 = vmatprep.subr.mxu0 0.0
        %1151 = vmatpush1.msra.mxu0 0.0
        %1152 = vmatprep.subr.mxu0 0.0
        %1153 = vmatpush1.msra.mxu0 0.0
        %1154 = vmatprep.subr.mxu0 0.0
        %1155 = vmatpush1.msra.mxu0 0.0
        %1156 = vmatprep.subr.mxu0 0.0
        %1157 = vmatpush1.msra.mxu0 0.0
        %1158 = vmatprep.subr.mxu0 0.0
        %1159 = vmatpush1.msra.mxu0 0.0
        %1160 = vmatprep.subr.mxu0 0.0
        %1161 = vmatpush1.msra.mxu0 0.0
        %1162 = vmatprep.subr.mxu0 0.0
        %1163 = vmatpush1.msra.mxu0 0.0
        %1164 = vmatprep.subr.mxu0 0.0
        %1165 = vmatpush1.msra.mxu0 0.0
        %1166 = vmatprep.subr.mxu0 0.0
        %1167 = vmatpush1.msra.mxu0 0.0
        %1168 = vmatprep.subr.mxu0 0.0
        %1169 = vmatpush1.msra.mxu0 0.0
        %1170 = vmatprep.subr.mxu0 0.0
        %1171 = vmatpush1.msra.mxu0 0.0
        %1172 = vmatprep.subr.mxu0 0.0
        %1173 = vmatpush1.msra.mxu0 0.0
        %1174 = vmatprep.subr.mxu0 0.0
        %1175 = vmatpush1.msra.mxu0 0.0
        %1176 = vmatprep.subr.mxu0 0.0
        %1177 = vmatpush1.msra.mxu0 0.0
        %1178 = vmatprep.subr.mxu0 0.0
        %1179 = vmatpush1.msra.mxu0 0.0
        %1180 = vmatprep.subr.mxu0 0.0
        %1181 = vmatpush1.msra.mxu0 0.0
        %1182 = vmatprep.subr.mxu0 0.0
        %1183 = vmatpush1.msra.mxu0 0.0
        %1184 = vmatprep.subr.mxu0 0.0
        %1185 = vmatpush1.msra.mxu0 0.0
        %1186 = vmatprep.subr.mxu0 0.0
        %1187 = vmatpush1.msra.mxu0 0.0
        %1188 = vmatprep.subr.mxu0 0.0
        %1189 = vmatpush1.msra.mxu0 0.0
        %1190 = vmatprep.subr.mxu0 0.0
        %1191 = vmatpush1.msra.mxu0 0.0
        %1192 = vmatprep.subr.mxu0 0.0
        %1193 = vmatpush1.msra.mxu0 0.0
        %1194 = vmatprep.subr.mxu0 0.0
        %1195 = vmatpush1.msra.mxu0 0.0
        %1196 = vmatprep.subr.mxu0 0.0
        %1197 = vmatpush1.msra.mxu0 0.0
        %1198 = vmatprep.subr.mxu0 0.0
        %1199 = vmatpush1.msra.mxu0 0.0
        %1200 = vmatprep.subr.mxu0 0.0
        %1201 = vmatpush1.msra.mxu0 0.0
        %1202 = vmatprep.mubr.f32.mxu0 0.0
        %1203 = vmatmul.mubr.f32.gmra.mrb[0].mxu0 %v1136
        %v1204 = vpop.f32.mrb[0].mxu0
        %v1205 = vadd.f32 %v365, %v1204
        %v1206 = vpop.f32.mrb[0].mxu0
        %1207 = vdwg.mxu0
        %v1208 = vsel %vm372, %v1205, 0.0
        %1209 = vadd.xlane.f32.xlu0 %v1208
        %v1210 = vpop.xlane.xlu0 %1209
        %v1211 = vrcp.pop 32.0
        %v1212 = vmul.f32 %v1210, %v1211
        %v1213 = vsub.f32 %v1205, %v1212
        %v1214 = vmul.f32 %v1213, %v1213
        %v1215 = vsel %vm372, %v1214, 0.0
        %1216 = vadd.xlane.f32.xlu0 %v1215
        %v1217 = vpop.xlane.xlu0 %1216
        %v1218 = vmul.f32 %v1217, %v1211
        %v1219 = vadd.f32 %v1218, 1e-05
        %v1220 = vrsqrt.pop %v1219
        %v1221 = vmul.f32 %v1213, %v1220
        %v1222 = vlaneseq
        %v1223 = vshrl.u32 %v1222, 7
        %v1224 = vsub.s32 0, %v1223
        %v1225 = vrot.slane %v367, %v1224
        %v1226 = vmul.f32 %v1221, %v1225
        %v1227 = vlaneseq
        %v1228 = vshrl.u32 %v1227, 7
        %v1229 = vsub.s32 1, %v1228
        %v1230 = vrot.slane %v367, %v1229
        %v1231 = vadd.f32 %v1226, %v1230
        %v1232 = vld [vmem:[%s4] sm:$0xff]
        %v1233 = vld [vmem:[%s4 + $0x8] sm:$0xff]
        %v1234 = vld [vmem:[%s4 + $0x10] sm:$0xff]
        %v1235 = vld [vmem:[%s4 + $0x18] sm:$0xff]
        %v1237 = vsel %vm372, %v1231, 0
        %1239 = vmatprep.subr.mxu0 0.0
        %1240 = vmatpush1.msra.mxu0 %v1232
        %1241 = vmatprep.subr.mxu0 0.0
        %1242 = vmatpush1.msra.mxu0 %v1233
        %1243 = vmatprep.subr.mxu0 0.0
        %1244 = vmatpush1.msra.mxu0 %v1234
        %1245 = vmatprep.subr.mxu0 0.0
        %1246 = vmatpush1.msra.mxu0 %v1235
        %1247 = vmatprep.subr.mxu0 0.0
        %1248 = vmatpush1.msra.mxu0 0.0
        %1249 = vmatprep.subr.mxu0 0.0
        %1250 = vmatpush1.msra.mxu0 0.0
        %1251 = vmatprep.subr.mxu0 0.0
        %1252 = vmatpush1.msra.mxu0 0.0
        %1253 = vmatprep.subr.mxu0 0.0
        %1254 = vmatpush1.msra.mxu0 0.0
        %1255 = vmatprep.subr.mxu0 0.0
        %1256 = vmatpush1.msra.mxu0 0.0
        %1257 = vmatprep.subr.mxu0 0.0
        %1258 = vmatpush1.msra.mxu0 0.0
        %1259 = vmatprep.subr.mxu0 0.0
        %1260 = vmatpush1.msra.mxu0 0.0
        %1261 = vmatprep.subr.mxu0 0.0
        %1262 = vmatpush1.msra.mxu0 0.0
        %1263 = vmatprep.subr.mxu0 0.0
        %1264 = vmatpush1.msra.mxu0 0.0
        %1265 = vmatprep.subr.mxu0 0.0
        %1266 = vmatpush1.msra.mxu0 0.0
        %1267 = vmatprep.subr.mxu0 0.0
        %1268 = vmatpush1.msra.mxu0 0.0
        %1269 = vmatprep.subr.mxu0 0.0
        %1270 = vmatpush1.msra.mxu0 0.0
        %1271 = vmatprep.subr.mxu0 0.0
        %1272 = vmatpush1.msra.mxu0 0.0
        %1273 = vmatprep.subr.mxu0 0.0
        %1274 = vmatpush1.msra.mxu0 0.0
        %1275 = vmatprep.subr.mxu0 0.0
        %1276 = vmatpush1.msra.mxu0 0.0
        %1277 = vmatprep.subr.mxu0 0.0
        %1278 = vmatpush1.msra.mxu0 0.0
        %1279 = vmatprep.subr.mxu0 0.0
        %1280 = vmatpush1.msra.mxu0 0.0
        %1281 = vmatprep.subr.mxu0 0.0
        %1282 = vmatpush1.msra.mxu0 0.0
        %1283 = vmatprep.subr.mxu0 0.0
        %1284 = vmatpush1.msra.mxu0 0.0
        %1285 = vmatprep.subr.mxu0 0.0
        %1286 = vmatpush1.msra.mxu0 0.0
        %1287 = vmatprep.subr.mxu0 0.0
        %1288 = vmatpush1.msra.mxu0 0.0
        %1289 = vmatprep.subr.mxu0 0.0
        %1290 = vmatpush1.msra.mxu0 0.0
        %1291 = vmatprep.subr.mxu0 0.0
        %1292 = vmatpush1.msra.mxu0 0.0
        %1293 = vmatprep.subr.mxu0 0.0
        %1294 = vmatpush1.msra.mxu0 0.0
        %1295 = vmatprep.subr.mxu0 0.0
        %1296 = vmatpush1.msra.mxu0 0.0
        %1297 = vmatprep.subr.mxu0 0.0
        %1298 = vmatpush1.msra.mxu0 0.0
        %1299 = vmatprep.subr.mxu0 0.0
        %1300 = vmatpush1.msra.mxu0 0.0
        %1301 = vmatprep.subr.mxu0 0.0
        %1302 = vmatpush1.msra.mxu0 0.0
        %1303 = vmatprep.mubr.f32.mxu0 0.0
        %1304 = vmatmul.mubr.f32.gmra.mrb[0].mxu0 %v1237
        %v1305 = vpop.f32.mrb[0].mxu0
        %v1306 = vadd.f32 0.0, %v1305
        %v1307 = vpop.f32.mrb[0].mxu0
        %1308 = vdwg.mxu0
        %v1309 = vmax.f32 %v1306, 0.0
        %v1310 = vld [vmem:[%s5] sm:$0xff]
        %v1311 = vld [vmem:[%s5 + $0x8] sm:$0xff]
        %v1312 = vld [vmem:[%s5 + $0x10] sm:$0xff]
        %v1313 = vld [vmem:[%s5 + $0x18] sm:$0xff]
        %v1314 = vld [vmem:[%s5 + $0x20] sm:$0xff]
        %v1315 = vld [vmem:[%s5 + $0x28] sm:$0xff]
        %v1316 = vld [vmem:[%s5 + $0x30] sm:$0xff]
        %v1317 = vld [vmem:[%s5 + $0x38] sm:$0xff]
        %vm1318 = vcmask 523264
        %v1320 = vsel %vm1318, %v1309, 0
        %1322 = vmatprep.subr.mxu0 0.0
        %1323 = vmatpush1.msra.mxu0 %v1310
        %1324 = vmatprep.subr.mxu0 0.0
        %1325 = vmatpush1.msra.mxu0 %v1311
        %1326 = vmatprep.subr.mxu0 0.0
        %1327 = vmatpush1.msra.mxu0 %v1312
        %1328 = vmatprep.subr.mxu0 0.0
        %1329 = vmatpush1.msra.mxu0 %v1313
        %1330 = vmatprep.subr.mxu0 0.0
        %1331 = vmatpush1.msra.mxu0 %v1314
        %1332 = vmatprep.subr.mxu0 0.0
        %1333 = vmatpush1.msra.mxu0 %v1315
        %1334 = vmatprep.subr.mxu0 0.0
        %1335 = vmatpush1.msra.mxu0 %v1316
        %1336 = vmatprep.subr.mxu0 0.0
        %1337 = vmatpush1.msra.mxu0 %v1317
        %1338 = vmatprep.subr.mxu0 0.0
        %1339 = vmatpush1.msra.mxu0 0.0
        %1340 = vmatprep.subr.mxu0 0.0
        %1341 = vmatpush1.msra.mxu0 0.0
        %1342 = vmatprep.subr.mxu0 0.0
        %1343 = vmatpush1.msra.mxu0 0.0
        %1344 = vmatprep.subr.mxu0 0.0
        %1345 = vmatpush1.msra.mxu0 0.0
        %1346 = vmatprep.subr.mxu0 0.0
        %1347 = vmatpush1.msra.mxu0 0.0
        %1348 = vmatprep.subr.mxu0 0.0
        %1349 = vmatpush1.msra.mxu0 0.0
        %1350 = vmatprep.subr.mxu0 0.0
        %1351 = vmatpush1.msra.mxu0 0.0
        %1352 = vmatprep.subr.mxu0 0.0
        %1353 = vmatpush1.msra.mxu0 0.0
        %1354 = vmatprep.subr.mxu0 0.0
        %1355 = vmatpush1.msra.mxu0 0.0
        %1356 = vmatprep.subr.mxu0 0.0
        %1357 = vmatpush1.msra.mxu0 0.0
        %1358 = vmatprep.subr.mxu0 0.0
        %1359 = vmatpush1.msra.mxu0 0.0
        %1360 = vmatprep.subr.mxu0 0.0
        %1361 = vmatpush1.msra.mxu0 0.0
        %1362 = vmatprep.subr.mxu0 0.0
        %1363 = vmatpush1.msra.mxu0 0.0
        %1364 = vmatprep.subr.mxu0 0.0
        %1365 = vmatpush1.msra.mxu0 0.0
        %1366 = vmatprep.subr.mxu0 0.0
        %1367 = vmatpush1.msra.mxu0 0.0
        %1368 = vmatprep.subr.mxu0 0.0
        %1369 = vmatpush1.msra.mxu0 0.0
        %1370 = vmatprep.subr.mxu0 0.0
        %1371 = vmatpush1.msra.mxu0 0.0
        %1372 = vmatprep.subr.mxu0 0.0
        %1373 = vmatpush1.msra.mxu0 0.0
        %1374 = vmatprep.subr.mxu0 0.0
        %1375 = vmatpush1.msra.mxu0 0.0
        %1376 = vmatprep.subr.mxu0 0.0
        %1377 = vmatpush1.msra.mxu0 0.0
        %1378 = vmatprep.subr.mxu0 0.0
        %1379 = vmatpush1.msra.mxu0 0.0
        %1380 = vmatprep.subr.mxu0 0.0
        %1381 = vmatpush1.msra.mxu0 0.0
        %1382 = vmatprep.subr.mxu0 0.0
        %1383 = vmatpush1.msra.mxu0 0.0
        %1384 = vmatprep.subr.mxu0 0.0
        %1385 = vmatpush1.msra.mxu0 0.0
        %1386 = vmatprep.mubr.f32.mxu0 0.0
        %1387 = vmatmul.mubr.f32.gmra.mrb[0].mxu0 %v1320
        %v1388 = vpop.f32.mrb[0].mxu0
        %v1389 = vadd.f32 %v1231, %v1388
        %v1390 = vpop.f32.mrb[0].mxu0
        %1391 = vdwg.mxu0
        %v1392 = vsel %vm372, %v1389, 0.0
        %1393 = vadd.xlane.f32.xlu0 %v1392
        %v1394 = vpop.xlane.xlu0 %1393
        %v1395 = vmul.f32 %v1394, %v1211
        %v1396 = vsub.f32 %v1389, %v1395
        %v1397 = vmul.f32 %v1396, %v1396
        %v1398 = vsel %vm372, %v1397, 0.0
        %1399 = vadd.xlane.f32.xlu0 %v1398
        %v1400 = vpop.xlane.xlu0 %1399
        %v1401 = vmul.f32 %v1400, %v1211
        %v1402 = vadd.f32 %v1401, 1e-05
        %v1403 = vrsqrt.pop %v1402
        %v1404 = vmul.f32 %v1396, %v1403
        %v1405 = vlaneseq
        %v1406 = vshrl.u32 %v1405, 7
        %v1407 = vsub.s32 2, %v1406
        %v1408 = vrot.slane %v367, %v1407
        %v1409 = vmul.f32 %v1404, %v1408
        %v1410 = vlaneseq
        %v1411 = vshrl.u32 %v1410, 7
        %v1412 = vsub.s32 3, %v1411
        %v1413 = vrot.slane %v367, %v1412
        %v1414 = vadd.f32 %v1409, %v1413
        %s1415 = scalar_lea.vmem %s6, 4
        %v1416 = vld [vmem:[%s1415] sm:$0xf]
        %s1417 = scalar_lea.vmem %s2, 32
        %v1418 = vld [vmem:[%s1417] sm:$0xff]
        %v1419 = vld [vmem:[%s1417 + $0x8] sm:$0xff]
        %v1420 = vld [vmem:[%s1417 + $0x10] sm:$0xff]
        %v1421 = vld [vmem:[%s1417 + $0x18] sm:$0xff]
        %v1423 = vsel %vm372, %v1414, 0
        %1425 = vmatprep.subr.mxu0 0.0
        %1426 = vmatpush1.msra.mxu0 %v1418
        %1427 = vmatprep.subr.mxu0 0.0
        %1428 = vmatpush1.msra.mxu0 %v1419
        %1429 = vmatprep.subr.mxu0 0.0
        %1430 = vmatpush1.msra.mxu0 %v1420
        %1431 = vmatprep.subr.mxu0 0.0
        %1432 = vmatpush1.msra.mxu0 %v1421
        %1433 = vmatprep.subr.mxu0 0.0
        %1434 = vmatpush1.msra.mxu0 0.0
        %1435 = vmatprep.subr.mxu0 0.0
        %1436 = vmatpush1.msra.mxu0 0.0
        %1437 = vmatprep.subr.mxu0 0.0
        %1438 = vmatpush1.msra.mxu0 0.0
        %1439 = vmatprep.subr.mxu0 0.0
        %1440 = vmatpush1.msra.mxu0 0.0
        %1441 = vmatprep.subr.mxu0 0.0
        %1442 = vmatpush1.msra.mxu0 0.0
        %1443 = vmatprep.subr.mxu0 0.0
        %1444 = vmatpush1.msra.mxu0 0.0
        %1445 = vmatprep.subr.mxu0 0.0
        %1446 = vmatpush1.msra.mxu0 0.0
        %1447 = vmatprep.subr.mxu0 0.0
        %1448 = vmatpush1.msra.mxu0 0.0
        %1449 = vmatprep.subr.mxu0 0.0
        %1450 = vmatpush1.msra.mxu0 0.0
        %1451 = vmatprep.subr.mxu0 0.0
        %1452 = vmatpush1.msra.mxu0 0.0
        %1453 = vmatprep.subr.mxu0 0.0
        %1454 = vmatpush1.msra.mxu0 0.0
        %1455 = vmatprep.subr.mxu0 0.0
        %1456 = vmatpush1.msra.mxu0 0.0
        %1457 = vmatprep.subr.mxu0 0.0
        %1458 = vmatpush1.msra.mxu0 0.0
        %1459 = vmatprep.subr.mxu0 0.0
        %1460 = vmatpush1.msra.mxu0 0.0
        %1461 = vmatprep.subr.mxu0 0.0
        %1462 = vmatpush1.msra.mxu0 0.0
        %1463 = vmatprep.subr.mxu0 0.0
        %1464 = vmatpush1.msra.mxu0 0.0
        %1465 = vmatprep.subr.mxu0 0.0
        %1466 = vmatpush1.msra.mxu0 0.0
        %1467 = vmatprep.subr.mxu0 0.0
        %1468 = vmatpush1.msra.mxu0 0.0
        %1469 = vmatprep.subr.mxu0 0.0
        %1470 = vmatpush1.msra.mxu0 0.0
        %1471 = vmatprep.subr.mxu0 0.0
        %1472 = vmatpush1.msra.mxu0 0.0
        %1473 = vmatprep.subr.mxu0 0.0
        %1474 = vmatpush1.msra.mxu0 0.0
        %1475 = vmatprep.subr.mxu0 0.0
        %1476 = vmatpush1.msra.mxu0 0.0
        %1477 = vmatprep.subr.mxu0 0.0
        %1478 = vmatpush1.msra.mxu0 0.0
        %1479 = vmatprep.subr.mxu0 0.0
        %1480 = vmatpush1.msra.mxu0 0.0
        %1481 = vmatprep.subr.mxu0 0.0
        %1482 = vmatpush1.msra.mxu0 0.0
        %1483 = vmatprep.subr.mxu0 0.0
        %1484 = vmatpush1.msra.mxu0 0.0
        %1485 = vmatprep.subr.mxu0 0.0
        %1486 = vmatpush1.msra.mxu0 0.0
        %1487 = vmatprep.subr.mxu0 0.0
        %1488 = vmatpush1.msra.mxu0 0.0
        %1489 = vmatprep.mubr.f32.mxu0 0.0
        %1490 = vmatmul.mubr.f32.gmra.mrb[0].mxu0 %v1423
        %v1491 = vpop.f32.mrb[0].mxu0
        %v1492 = vadd.f32 0.0, %v1491
        %v1493 = vpop.f32.mrb[0].mxu0
        %1494 = vdwg.mxu0
        %1496 = vrot.lane.b32.xlu0 %v1492, 96
        %v1497 = vpop.permute.xlu0 %1496
        %v1498 = vsel %vm449, %v1492, 0
        %v1500 = vsel %vm449, %v1497, 0
        %1502 = vmatprep.subr.mxu0 0.0
        %1503 = vmatpush1.xpose.msra.mxu0 %v1500
        %1504 = vmatprep.subr.mxu0 0.0
        %1505 = vmatpush1.xpose.msra.mxu0 0.0
        %1506 = vmatprep.subr.mxu0 0.0
        %1507 = vmatpush1.xpose.msra.mxu0 0.0
        %1508 = vmatprep.subr.mxu0 0.0
        %1509 = vmatpush1.xpose.msra.mxu0 0.0
        %1510 = vmatprep.subr.mxu0 0.0
        %1511 = vmatpush1.xpose.msra.mxu0 0.0
        %1512 = vmatprep.subr.mxu0 0.0
        %1513 = vmatpush1.xpose.msra.mxu0 0.0
        %1514 = vmatprep.subr.mxu0 0.0
        %1515 = vmatpush1.xpose.msra.mxu0 0.0
        %1516 = vmatprep.subr.mxu0 0.0
        %1517 = vmatpush1.xpose.msra.mxu0 0.0
        %1518 = vmatprep.subr.mxu0 0.0
        %1519 = vmatpush1.xpose.msra.mxu0 0.0
        %1520 = vmatprep.subr.mxu0 0.0
        %1521 = vmatpush1.xpose.msra.mxu0 0.0
        %1522 = vmatprep.subr.mxu0 0.0
        %1523 = vmatpush1.xpose.msra.mxu0 0.0
        %1524 = vmatprep.subr.mxu0 0.0
        %1525 = vmatpush1.xpose.msra.mxu0 0.0
        %1526 = vmatprep.subr.mxu0 0.0
        %1527 = vmatpush1.xpose.msra.mxu0 0.0
        %1528 = vmatprep.subr.mxu0 0.0
        %1529 = vmatpush1.xpose.msra.mxu0 0.0
        %1530 = vmatprep.subr.mxu0 0.0
        %1531 = vmatpush1.xpose.msra.mxu0 0.0
        %1532 = vmatprep.subr.mxu0 0.0
        %1533 = vmatpush1.xpose.msra.mxu0 0.0
        %1534 = vmatprep.subr.mxu0 0.0
        %1535 = vmatpush1.xpose.msra.mxu0 0.0
        %1536 = vmatprep.subr.mxu0 0.0
        %1537 = vmatpush1.xpose.msra.mxu0 0.0
        %1538 = vmatprep.subr.mxu0 0.0
        %1539 = vmatpush1.xpose.msra.mxu0 0.0
        %1540 = vmatprep.subr.mxu0 0.0
        %1541 = vmatpush1.xpose.msra.mxu0 0.0
        %1542 = vmatprep.subr.mxu0 0.0
        %1543 = vmatpush1.xpose.msra.mxu0 0.0
        %1544 = vmatprep.subr.mxu0 0.0
        %1545 = vmatpush1.xpose.msra.mxu0 0.0
        %1546 = vmatprep.subr.mxu0 0.0
        %1547 = vmatpush1.xpose.msra.mxu0 0.0
        %1548 = vmatprep.subr.mxu0 0.0
        %1549 = vmatpush1.xpose.msra.mxu0 0.0
        %1550 = vmatprep.subr.mxu0 0.0
        %1551 = vmatpush1.xpose.msra.mxu0 0.0
        %1552 = vmatprep.subr.mxu0 0.0
        %1553 = vmatpush1.xpose.msra.mxu0 0.0
        %1554 = vmatprep.subr.mxu0 0.0
        %1555 = vmatpush1.xpose.msra.mxu0 0.0
        %1556 = vmatprep.subr.mxu0 0.0
        %1557 = vmatpush1.xpose.msra.mxu0 0.0
        %1558 = vmatprep.subr.mxu0 0.0
        %1559 = vmatpush1.xpose.msra.mxu0 0.0
        %1560 = vmatprep.subr.mxu0 0.0
        %1561 = vmatpush1.xpose.msra.mxu0 0.0
        %1562 = vmatprep.subr.mxu0 0.0
        %1563 = vmatpush1.xpose.msra.mxu0 0.0
        %1564 = vmatprep.subr.mxu0 0.0
        %1565 = vmatpush1.xpose.msra.mxu0 0.0
        %1566 = vmatprep.mubr.f32.mxu0 0.0
        %1567 = vmatmul.mubr.f32.gmra.mrb[0].mxu0 %v1498
        %v1568 = vpop.f32.mrb[0].mxu0
        %v1569 = vadd.f32 0.0, %v1568
        %v1570 = vpop.f32.mrb[0].mxu0
        %1571 = vdwg.mxu0
        %s1572 = scalar_lea.vmem %s364, 32 [#allocation8]
        %1573 = vst.msk [vmem:[%s1572] sm:$0xff] %vm449, %v1569
        %v1574 = vadd.f32 %v1569, %v366
        %v1575 = vsel %vm449, %v1574, -inf
        %1576 = vmax.xlane.f32.xlu0 %v1575
        %v1577 = vpop.xlane.xlu0 %1576
        %v1578 = vsub.f32 %v1574, %v1577
        %v1579 = vmul.f32 %v1578, 1.442695
        %v1580 = vpow.pop %v1579
        %v1581 = vsel %vm449, %v1580, 0.0
        %1582 = vadd.xlane.f32.xlu0 %v1581
        %v1583 = vpop.xlane.xlu0 %1582
        %v1584 = vrcp.pop %v1583
        %v1585 = vmul.f32 %v1580, %v1584
        %1586 = vrot.lane.b32.xlu0 %v1492, 64
        %v1587 = vpop.permute.xlu0 %1586
        %v1590 = vsel %vm449, %v1585, 0
        %1592 = vmatprep.subr.mxu0 0.0
        %1593 = vmatpush1.msra.mxu0 %v1587
        %1594 = vmatprep.subr.mxu0 0.0
        %1595 = vmatpush1.msra.mxu0 0.0
        %1596 = vmatprep.subr.mxu0 0.0
        %1597 = vmatpush1.msra.mxu0 0.0
        %1598 = vmatprep.subr.mxu0 0.0
        %1599 = vmatpush1.msra.mxu0 0.0
        %1600 = vmatprep.subr.mxu0 0.0
        %1601 = vmatpush1.msra.mxu0 0.0
        %1602 = vmatprep.subr.mxu0 0.0
        %1603 = vmatpush1.msra.mxu0 0.0
        %1604 = vmatprep.subr.mxu0 0.0
        %1605 = vmatpush1.msra.mxu0 0.0
        %1606 = vmatprep.subr.mxu0 0.0
        %1607 = vmatpush1.msra.mxu0 0.0
        %1608 = vmatprep.subr.mxu0 0.0
        %1609 = vmatpush1.msra.mxu0 0.0
        %1610 = vmatprep.subr.mxu0 0.0
        %1611 = vmatpush1.msra.mxu0 0.0
        %1612 = vmatprep.subr.mxu0 0.0
        %1613 = vmatpush1.msra.mxu0 0.0
        %1614 = vmatprep.subr.mxu0 0.0
        %1615 = vmatpush1.msra.mxu0 0.0
        %1616 = vmatprep.subr.mxu0 0.0
        %1617 = vmatpush1.msra.mxu0 0.0
        %1618 = vmatprep.subr.mxu0 0.0
        %1619 = vmatpush1.msra.mxu0 0.0
        %1620 = vmatprep.subr.mxu0 0.0
        %1621 = vmatpush1.msra.mxu0 0.0
        %1622 = vmatprep.subr.mxu0 0.0
        %1623 = vmatpush1.msra.mxu0 0.0
        %1624 = vmatprep.subr.mxu0 0.0
        %1625 = vmatpush1.msra.mxu0 0.0
        %1626 = vmatprep.subr.mxu0 0.0
        %1627 = vmatpush1.msra.mxu0 0.0
        %1628 = vmatprep.subr.mxu0 0.0
        %1629 = vmatpush1.msra.mxu0 0.0
        %1630 = vmatprep.subr.mxu0 0.0
        %1631 = vmatpush1.msra.mxu0 0.0
        %1632 = vmatprep.subr.mxu0 0.0
        %1633 = vmatpush1.msra.mxu0 0.0
        %1634 = vmatprep.subr.mxu0 0.0
        %1635 = vmatpush1.msra.mxu0 0.0
        %1636 = vmatprep.subr.mxu0 0.0
        %1637 = vmatpush1.msra.mxu0 0.0
        %1638 = vmatprep.subr.mxu0 0.0
        %1639 = vmatpush1.msra.mxu0 0.0
        %1640 = vmatprep.subr.mxu0 0.0
        %1641 = vmatpush1.msra.mxu0 0.0
        %1642 = vmatprep.subr.mxu0 0.0
        %1643 = vmatpush1.msra.mxu0 0.0
        %1644 = vmatprep.subr.mxu0 0.0
        %1645 = vmatpush1.msra.mxu0 0.0
        %1646 = vmatprep.subr.mxu0 0.0
        %1647 = vmatpush1.msra.mxu0 0.0
        %1648 = vmatprep.subr.mxu0 0.0
        %1649 = vmatpush1.msra.mxu0 0.0
        %1650 = vmatprep.subr.mxu0 0.0
        %1651 = vmatpush1.msra.mxu0 0.0
        %1652 = vmatprep.subr.mxu0 0.0
        %1653 = vmatpush1.msra.mxu0 0.0
        %1654 = vmatprep.subr.mxu0 0.0
        %1655 = vmatpush1.msra.mxu0 0.0
        %1656 = vmatprep.mubr.f32.mxu0 0.0
        %1657 = vmatmul.mubr.f32.gmra.mrb[0].mxu0 %v1590
        %v1658 = vpop.f32.mrb[0].mxu0
        %v1659 = vadd.f32 0.0, %v1658
        %v1660 = vpop.f32.mrb[0].mxu0
        %1661 = vdwg.mxu0
        %1662 = vrot.lane.b32.xlu0 %v1492, 120
        %v1663 = vpop.permute.xlu0 %1662
        %1664 = vrot.lane.b32.xlu0 %v1492, 88
        %v1665 = vpop.permute.xlu0 %1664
        %v1666 = vsel %vm449, %v1663, 0
        %v1668 = vsel %vm449, %v1665, 0
        %1670 = vmatprep.subr.mxu0 0.0
        %1671 = vmatpush1.xpose.msra.mxu0 %v1668
        %1672 = vmatprep.subr.mxu0 0.0
        %1673 = vmatpush1.xpose.msra.mxu0 0.0
        %1674 = vmatprep.subr.mxu0 0.0
        %1675 = vmatpush1.xpose.msra.mxu0 0.0
        %1676 = vmatprep.subr.mxu0 0.0
        %1677 = vmatpush1.xpose.msra.mxu0 0.0
        %1678 = vmatprep.subr.mxu0 0.0
        %1679 = vmatpush1.xpose.msra.mxu0 0.0
        %1680 = vmatprep.subr.mxu0 0.0
        %1681 = vmatpush1.xpose.msra.mxu0 0.0
        %1682 = vmatprep.subr.mxu0 0.0
        %1683 = vmatpush1.xpose.msra.mxu0 0.0
        %1684 = vmatprep.subr.mxu0 0.0
        %1685 = vmatpush1.xpose.msra.mxu0 0.0
        %1686 = vmatprep.subr.mxu0 0.0
        %1687 = vmatpush1.xpose.msra.mxu0 0.0
        %1688 = vmatprep.subr.mxu0 0.0
        %1689 = vmatpush1.xpose.msra.mxu0 0.0
        %1690 = vmatprep.subr.mxu0 0.0
        %1691 = vmatpush1.xpose.msra.mxu0 0.0
        %1692 = vmatprep.subr.mxu0 0.0
        %1693 = vmatpush1.xpose.msra.mxu0 0.0
        %1694 = vmatprep.subr.mxu0 0.0
        %1695 = vmatpush1.xpose.msra.mxu0 0.0
        %1696 = vmatprep.subr.mxu0 0.0
        %1697 = vmatpush1.xpose.msra.mxu0 0.0
        %1698 = vmatprep.subr.mxu0 0.0
        %1699 = vmatpush1.xpose.msra.mxu0 0.0
        %1700 = vmatprep.subr.mxu0 0.0
        %1701 = vmatpush1.xpose.msra.mxu0 0.0
        %1702 = vmatprep.subr.mxu0 0.0
        %1703 = vmatpush1.xpose.msra.mxu0 0.0
        %1704 = vmatprep.subr.mxu0 0.0
        %1705 = vmatpush1.xpose.msra.mxu0 0.0
        %1706 = vmatprep.subr.mxu0 0.0
        %1707 = vmatpush1.xpose.msra.mxu0 0.0
        %1708 = vmatprep.subr.mxu0 0.0
        %1709 = vmatpush1.xpose.msra.mxu0 0.0
        %1710 = vmatprep.subr.mxu0 0.0
        %1711 = vmatpush1.xpose.msra.mxu0 0.0
        %1712 = vmatprep.subr.mxu0 0.0
        %1713 = vmatpush1.xpose.msra.mxu0 0.0
        %1714 = vmatprep.subr.mxu0 0.0
        %1715 = vmatpush1.xpose.msra.mxu0 0.0
        %1716 = vmatprep.subr.mxu0 0.0
        %1717 = vmatpush1.xpose.msra.mxu0 0.0
        %1718 = vmatprep.subr.mxu0 0.0
        %1719 = vmatpush1.xpose.msra.mxu0 0.0
        %1720 = vmatprep.subr.mxu0 0.0
        %1721 = vmatpush1.xpose.msra.mxu0 0.0
        %1722 = vmatprep.subr.mxu0 0.0
        %1723 = vmatpush1.xpose.msra.mxu0 0.0
        %1724 = vmatprep.subr.mxu0 0.0
        %1725 = vmatpush1.xpose.msra.mxu0 0.0
        %1726 = vmatprep.subr.mxu0 0.0
        %1727 = vmatpush1.xpose.msra.mxu0 0.0
        %1728 = vmatprep.subr.mxu0 0.0
        %1729 = vmatpush1.xpose.msra.mxu0 0.0
        %1730 = vmatprep.subr.mxu0 0.0
        %1731 = vmatpush1.xpose.msra.mxu0 0.0
        %1732 = vmatprep.subr.mxu0 0.0
        %1733 = vmatpush1.xpose.msra.mxu0 0.0
        %1734 = vmatprep.mubr.f32.mxu0 0.0
        %1735 = vmatmul.mubr.f32.gmra.mrb[0].mxu0 %v1666
        %v1736 = vpop.f32.mrb[0].mxu0
        %v1737 = vadd.f32 0.0, %v1736
        %v1738 = vpop.f32.mrb[0].mxu0
        %1739 = vdwg.mxu0
        %1740 = vst.msk [vmem:[%s1572 + $0x8] sm:$0xff] %vm449, %v1737
        %v1741 = vadd.f32 %v1737, %v366
        %v1742 = vsel %vm449, %v1741, -inf
        %1743 = vmax.xlane.f32.xlu0 %v1742
        %v1744 = vpop.xlane.xlu0 %1743
        %v1745 = vsub.f32 %v1741, %v1744
        %v1746 = vmul.f32 %v1745, 1.442695
        %v1747 = vpow.pop %v1746
        %v1748 = vsel %vm449, %v1747, 0.0
        %1749 = vadd.xlane.f32.xlu0 %v1748
        %v1750 = vpop.xlane.xlu0 %1749
        %v1751 = vrcp.pop %v1750
        %v1752 = vmul.f32 %v1747, %v1751
        %1753 = vrot.lane.b32.xlu0 %v1492, 56
        %v1754 = vpop.permute.xlu0 %1753
        %v1757 = vsel %vm449, %v1752, 0
        %1759 = vmatprep.subr.mxu0 0.0
        %1760 = vmatpush1.msra.mxu0 %v1754
        %1761 = vmatprep.subr.mxu0 0.0
        %1762 = vmatpush1.msra.mxu0 0.0
        %1763 = vmatprep.subr.mxu0 0.0
        %1764 = vmatpush1.msra.mxu0 0.0
        %1765 = vmatprep.subr.mxu0 0.0
        %1766 = vmatpush1.msra.mxu0 0.0
        %1767 = vmatprep.subr.mxu0 0.0
        %1768 = vmatpush1.msra.mxu0 0.0
        %1769 = vmatprep.subr.mxu0 0.0
        %1770 = vmatpush1.msra.mxu0 0.0
        %1771 = vmatprep.subr.mxu0 0.0
        %1772 = vmatpush1.msra.mxu0 0.0
        %1773 = vmatprep.subr.mxu0 0.0
        %1774 = vmatpush1.msra.mxu0 0.0
        %1775 = vmatprep.subr.mxu0 0.0
        %1776 = vmatpush1.msra.mxu0 0.0
        %1777 = vmatprep.subr.mxu0 0.0
        %1778 = vmatpush1.msra.mxu0 0.0
        %1779 = vmatprep.subr.mxu0 0.0
        %1780 = vmatpush1.msra.mxu0 0.0
        %1781 = vmatprep.subr.mxu0 0.0
        %1782 = vmatpush1.msra.mxu0 0.0
        %1783 = vmatprep.subr.mxu0 0.0
        %1784 = vmatpush1.msra.mxu0 0.0
        %1785 = vmatprep.subr.mxu0 0.0
        %1786 = vmatpush1.msra.mxu0 0.0
        %1787 = vmatprep.subr.mxu0 0.0
        %1788 = vmatpush1.msra.mxu0 0.0
        %1789 = vmatprep.subr.mxu0 0.0
        %1790 = vmatpush1.msra.mxu0 0.0
        %1791 = vmatprep.subr.mxu0 0.0
        %1792 = vmatpush1.msra.mxu0 0.0
        %1793 = vmatprep.subr.mxu0 0.0
        %1794 = vmatpush1.msra.mxu0 0.0
        %1795 = vmatprep.subr.mxu0 0.0
        %1796 = vmatpush1.msra.mxu0 0.0
        %1797 = vmatprep.subr.mxu0 0.0
        %1798 = vmatpush1.msra.mxu0 0.0
        %1799 = vmatprep.subr.mxu0 0.0
        %1800 = vmatpush1.msra.mxu0 0.0
        %1801 = vmatprep.subr.mxu0 0.0
        %1802 = vmatpush1.msra.mxu0 0.0
        %1803 = vmatprep.subr.mxu0 0.0
        %1804 = vmatpush1.msra.mxu0 0.0
        %1805 = vmatprep.subr.mxu0 0.0
        %1806 = vmatpush1.msra.mxu0 0.0
        %1807 = vmatprep.subr.mxu0 0.0
        %1808 = vmatpush1.msra.mxu0 0.0
        %1809 = vmatprep.subr.mxu0 0.0
        %1810 = vmatpush1.msra.mxu0 0.0
        %1811 = vmatprep.subr.mxu0 0.0
        %1812 = vmatpush1.msra.mxu0 0.0
        %1813 = vmatprep.subr.mxu0 0.0
        %1814 = vmatpush1.msra.mxu0 0.0
        %1815 = vmatprep.subr.mxu0 0.0
        %1816 = vmatpush1.msra.mxu0 0.0
        %1817 = vmatprep.subr.mxu0 0.0
        %1818 = vmatpush1.msra.mxu0 0.0
        %1819 = vmatprep.subr.mxu0 0.0
        %1820 = vmatpush1.msra.mxu0 0.0
        %1821 = vmatprep.subr.mxu0 0.0
        %1822 = vmatpush1.msra.mxu0 0.0
        %1823 = vmatprep.mubr.f32.mxu0 0.0
        %1824 = vmatmul.mubr.f32.gmra.mrb[0].mxu0 %v1757
        %v1825 = vpop.f32.mrb[0].mxu0
        %v1826 = vadd.f32 0.0, %v1825
        %v1827 = vpop.f32.mrb[0].mxu0
        %1828 = vdwg.mxu0
        %1829 = vrot.lane.b32.xlu0 %v1492, 112
        %v1830 = vpop.permute.xlu0 %1829
        %1831 = vrot.lane.b32.xlu0 %v1492, 80
        %v1832 = vpop.permute.xlu0 %1831
        %v1833 = vsel %vm449, %v1830, 0
        %v1835 = vsel %vm449, %v1832, 0
        %1837 = vmatprep.subr.mxu0 0.0
        %1838 = vmatpush1.xpose.msra.mxu0 %v1835
        %1839 = vmatprep.subr.mxu0 0.0
        %1840 = vmatpush1.xpose.msra.mxu0 0.0
        %1841 = vmatprep.subr.mxu0 0.0
        %1842 = vmatpush1.xpose.msra.mxu0 0.0
        %1843 = vmatprep.subr.mxu0 0.0
        %1844 = vmatpush1.xpose.msra.mxu0 0.0
        %1845 = vmatprep.subr.mxu0 0.0
        %1846 = vmatpush1.xpose.msra.mxu0 0.0
        %1847 = vmatprep.subr.mxu0 0.0
        %1848 = vmatpush1.xpose.msra.mxu0 0.0
        %1849 = vmatprep.subr.mxu0 0.0
        %1850 = vmatpush1.xpose.msra.mxu0 0.0
        %1851 = vmatprep.subr.mxu0 0.0
        %1852 = vmatpush1.xpose.msra.mxu0 0.0
        %1853 = vmatprep.subr.mxu0 0.0
        %1854 = vmatpush1.xpose.msra.mxu0 0.0
        %1855 = vmatprep.subr.mxu0 0.0
        %1856 = vmatpush1.xpose.msra.mxu0 0.0
        %1857 = vmatprep.subr.mxu0 0.0
        %1858 = vmatpush1.xpose.msra.mxu0 0.0
        %1859 = vmatprep.subr.mxu0 0.0
        %1860 = vmatpush1.xpose.msra.mxu0 0.0
        %1861 = vmatprep.subr.mxu0 0.0
        %1862 = vmatpush1.xpose.msra.mxu0 0.0
        %1863 = vmatprep.subr.mxu0 0.0
        %1864 = vmatpush1.xpose.msra.mxu0 0.0
        %1865 = vmatprep.subr.mxu0 0.0
        %1866 = vmatpush1.xpose.msra.mxu0 0.0
        %1867 = vmatprep.subr.mxu0 0.0
        %1868 = vmatpush1.xpose.msra.mxu0 0.0
        %1869 = vmatprep.subr.mxu0 0.0
        %1870 = vmatpush1.xpose.msra.mxu0 0.0
        %1871 = vmatprep.subr.mxu0 0.0
        %1872 = vmatpush1.xpose.msra.mxu0 0.0
        %1873 = vmatprep.subr.mxu0 0.0
        %1874 = vmatpush1.xpose.msra.mxu0 0.0
        %1875 = vmatprep.subr.mxu0 0.0
        %1876 = vmatpush1.xpose.msra.mxu0 0.0
        %1877 = vmatprep.subr.mxu0 0.0
        %1878 = vmatpush1.xpose.msra.mxu0 0.0
        %1879 = vmatprep.subr.mxu0 0.0
        %1880 = vmatpush1.xpose.msra.mxu0 0.0
        %1881 = vmatprep.subr.mxu0 0.0
        %1882 = vmatpush1.xpose.msra.mxu0 0.0
        %1883 = vmatprep.subr.mxu0 0.0
        %1884 = vmatpush1.xpose.msra.mxu0 0.0
        %1885 = vmatprep.subr.mxu0 0.0
        %1886 = vmatpush1.xpose.msra.mxu0 0.0
        %1887 = vmatprep.subr.mxu0 0.0
        %1888 = vmatpush1.xpose.msra.mxu0 0.0
        %1889 = vmatprep.subr.mxu0 0.0
        %1890 = vmatpush1.xpose.msra.mxu0 0.0
        %1891 = vmatprep.subr.mxu0 0.0
        %1892 = vmatpush1.xpose.msra.mxu0 0.0
        %1893 = vmatprep.subr.mxu0 0.0
        %1894 = vmatpush1.xpose.msra.mxu0 0.0
        %1895 = vmatprep.subr.mxu0 0.0
        %1896 = vmatpush1.xpose.msra.mxu0 0.0
        %1897 = vmatprep.subr.mxu0 0.0
        %1898 = vmatpush1.xpose.msra.mxu0 0.0
        %1899 = vmatprep.subr.mxu0 0.0
        %1900 = vmatpush1.xpose.msra.mxu0 0.0
        %1901 = vmatprep.mubr.f32.mxu0 0.0
        %1902 = vmatmul.mubr.f32.gmra.mrb[0].mxu0 %v1833
        %v1903 = vpop.f32.mrb[0].mxu0
        %v1904 = vadd.f32 0.0, %v1903
        %v1905 = vpop.f32.mrb[0].mxu0
        %1906 = vdwg.mxu0
        %1907 = vst.msk [vmem:[%s1572 + $0x10] sm:$0xff] %vm449, %v1904
        %v1908 = vadd.f32 %v1904, %v366
        %v1909 = vsel %vm449, %v1908, -inf
        %1910 = vmax.xlane.f32.xlu0 %v1909
        %v1911 = vpop.xlane.xlu0 %1910
        %v1912 = vsub.f32 %v1908, %v1911
        %v1913 = vmul.f32 %v1912, 1.442695
        %v1914 = vpow.pop %v1913
        %v1915 = vsel %vm449, %v1914, 0.0
        %1916 = vadd.xlane.f32.xlu0 %v1915
        %v1917 = vpop.xlane.xlu0 %1916
        %v1918 = vrcp.pop %v1917
        %v1919 = vmul.f32 %v1914, %v1918
        %1920 = vrot.lane.b32.xlu0 %v1492, 48
        %v1921 = vpop.permute.xlu0 %1920
        %v1924 = vsel %vm449, %v1919, 0
        %1926 = vmatprep.subr.mxu0 0.0
        %1927 = vmatpush1.msra.mxu0 %v1921
        %1928 = vmatprep.subr.mxu0 0.0
        %1929 = vmatpush1.msra.mxu0 0.0
        %1930 = vmatprep.subr.mxu0 0.0
        %1931 = vmatpush1.msra.mxu0 0.0
        %1932 = vmatprep.subr.mxu0 0.0
        %1933 = vmatpush1.msra.mxu0 0.0
        %1934 = vmatprep.subr.mxu0 0.0
        %1935 = vmatpush1.msra.mxu0 0.0
        %1936 = vmatprep.subr.mxu0 0.0
        %1937 = vmatpush1.msra.mxu0 0.0
        %1938 = vmatprep.subr.mxu0 0.0
        %1939 = vmatpush1.msra.mxu0 0.0
        %1940 = vmatprep.subr.mxu0 0.0
        %1941 = vmatpush1.msra.mxu0 0.0
        %1942 = vmatprep.subr.mxu0 0.0
        %1943 = vmatpush1.msra.mxu0 0.0
        %1944 = vmatprep.subr.mxu0 0.0
        %1945 = vmatpush1.msra.mxu0 0.0
        %1946 = vmatprep.subr.mxu0 0.0
        %1947 = vmatpush1.msra.mxu0 0.0
        %1948 = vmatprep.subr.mxu0 0.0
        %1949 = vmatpush1.msra.mxu0 0.0
        %1950 = vmatprep.subr.mxu0 0.0
        %1951 = vmatpush1.msra.mxu0 0.0
        %1952 = vmatprep.subr.mxu0 0.0
        %1953 = vmatpush1.msra.mxu0 0.0
        %1954 = vmatprep.subr.mxu0 0.0
        %1955 = vmatpush1.msra.mxu0 0.0
        %1956 = vmatprep.subr.mxu0 0.0
        %1957 = vmatpush1.msra.mxu0 0.0
        %1958 = vmatprep.subr.mxu0 0.0
        %1959 = vmatpush1.msra.mxu0 0.0
        %1960 = vmatprep.subr.mxu0 0.0
        %1961 = vmatpush1.msra.mxu0 0.0
        %1962 = vmatprep.subr.mxu0 0.0
        %1963 = vmatpush1.msra.mxu0 0.0
        %1964 = vmatprep.subr.mxu0 0.0
        %1965 = vmatpush1.msra.mxu0 0.0
        %1966 = vmatprep.subr.mxu0 0.0
        %1967 = vmatpush1.msra.mxu0 0.0
        %1968 = vmatprep.subr.mxu0 0.0
        %1969 = vmatpush1.msra.mxu0 0.0
        %1970 = vmatprep.subr.mxu0 0.0
        %1971 = vmatpush1.msra.mxu0 0.0
        %1972 = vmatprep.subr.mxu0 0.0
        %1973 = vmatpush1.msra.mxu0 0.0
        %1974 = vmatprep.subr.mxu0 0.0
        %1975 = vmatpush1.msra.mxu0 0.0
        %1976 = vmatprep.subr.mxu0 0.0
        %1977 = vmatpush1.msra.mxu0 0.0
        %1978 = vmatprep.subr.mxu0 0.0
        %1979 = vmatpush1.msra.mxu0 0.0
        %1980 = vmatprep.subr.mxu0 0.0
        %1981 = vmatpush1.msra.mxu0 0.0
        %1982 = vmatprep.subr.mxu0 0.0
        %1983 = vmatpush1.msra.mxu0 0.0
        %1984 = vmatprep.subr.mxu0 0.0
        %1985 = vmatpush1.msra.mxu0 0.0
        %1986 = vmatprep.subr.mxu0 0.0
        %1987 = vmatpush1.msra.mxu0 0.0
        %1988 = vmatprep.subr.mxu0 0.0
        %1989 = vmatpush1.msra.mxu0 0.0
        %1990 = vmatprep.mubr.f32.mxu0 0.0
        %1991 = vmatmul.mubr.f32.gmra.mrb[0].mxu0 %v1924
        %v1992 = vpop.f32.mrb[0].mxu0
        %v1993 = vadd.f32 0.0, %v1992
        %v1994 = vpop.f32.mrb[0].mxu0
        %1995 = vdwg.mxu0
        %1996 = vrot.lane.b32.xlu0 %v1492, 104
        %v1997 = vpop.permute.xlu0 %1996
        %1998 = vrot.lane.b32.xlu0 %v1492, 72
        %v1999 = vpop.permute.xlu0 %1998
        %v2000 = vsel %vm449, %v1997, 0
        %v2002 = vsel %vm449, %v1999, 0
        %2004 = vmatprep.subr.mxu0 0.0
        %2005 = vmatpush1.xpose.msra.mxu0 %v2002
        %2006 = vmatprep.subr.mxu0 0.0
        %2007 = vmatpush1.xpose.msra.mxu0 0.0
        %2008 = vmatprep.subr.mxu0 0.0
        %2009 = vmatpush1.xpose.msra.mxu0 0.0
        %2010 = vmatprep.subr.mxu0 0.0
        %2011 = vmatpush1.xpose.msra.mxu0 0.0
        %2012 = vmatprep.subr.mxu0 0.0
        %2013 = vmatpush1.xpose.msra.mxu0 0.0
        %2014 = vmatprep.subr.mxu0 0.0
        %2015 = vmatpush1.xpose.msra.mxu0 0.0
        %2016 = vmatprep.subr.mxu0 0.0
        %2017 = vmatpush1.xpose.msra.mxu0 0.0
        %2018 = vmatprep.subr.mxu0 0.0
        %2019 = vmatpush1.xpose.msra.mxu0 0.0
        %2020 = vmatprep.subr.mxu0 0.0
        %2021 = vmatpush1.xpose.msra.mxu0 0.0
        %2022 = vmatprep.subr.mxu0 0.0
        %2023 = vmatpush1.xpose.msra.mxu0 0.0
        %2024 = vmatprep.subr.mxu0 0.0
        %2025 = vmatpush1.xpose.msra.mxu0 0.0
        %2026 = vmatprep.subr.mxu0 0.0
        %2027 = vmatpush1.xpose.msra.mxu0 0.0
        %2028 = vmatprep.subr.mxu0 0.0
        %2029 = vmatpush1.xpose.msra.mxu0 0.0
        %2030 = vmatprep.subr.mxu0 0.0
        %2031 = vmatpush1.xpose.msra.mxu0 0.0
        %2032 = vmatprep.subr.mxu0 0.0
        %2033 = vmatpush1.xpose.msra.mxu0 0.0
        %2034 = vmatprep.subr.mxu0 0.0
        %2035 = vmatpush1.xpose.msra.mxu0 0.0
        %2036 = vmatprep.subr.mxu0 0.0
        %2037 = vmatpush1.xpose.msra.mxu0 0.0
        %2038 = vmatprep.subr.mxu0 0.0
        %2039 = vmatpush1.xpose.msra.mxu0 0.0
        %2040 = vmatprep.subr.mxu0 0.0
        %2041 = vmatpush1.xpose.msra.mxu0 0.0
        %2042 = vmatprep.subr.mxu0 0.0
        %2043 = vmatpush1.xpose.msra.mxu0 0.0
        %2044 = vmatprep.subr.mxu0 0.0
        %2045 = vmatpush1.xpose.msra.mxu0 0.0
        %2046 = vmatprep.subr.mxu0 0.0
        %2047 = vmatpush1.xpose.msra.mxu0 0.0
        %2048 = vmatprep.subr.mxu0 0.0
        %2049 = vmatpush1.xpose.msra.mxu0 0.0
        %2050 = vmatprep.subr.mxu0 0.0
        %2051 = vmatpush1.xpose.msra.mxu0 0.0
        %2052 = vmatprep.subr.mxu0 0.0
        %2053 = vmatpush1.xpose.msra.mxu0 0.0
        %2054 = vmatprep.subr.mxu0 0.0
        %2055 = vmatpush1.xpose.msra.mxu0 0.0
        %2056 = vmatprep.subr.mxu0 0.0
        %2057 = vmatpush1.xpose.msra.mxu0 0.0
        %2058 = vmatprep.subr.mxu0 0.0
        %2059 = vmatpush1.xpose.msra.mxu0 0.0
        %2060 = vmatprep.subr.mxu0 0.0
        %2061 = vmatpush1.xpose.msra.mxu0 0.0
        %2062 = vmatprep.subr.mxu0 0.0
        %2063 = vmatpush1.xpose.msra.mxu0 0.0
        %2064 = vmatprep.subr.mxu0 0.0
        %2065 = vmatpush1.xpose.msra.mxu0 0.0
        %2066 = vmatprep.subr.mxu0 0.0
        %2067 = vmatpush1.xpose.msra.mxu0 0.0
        %2068 = vmatprep.mubr.f32.mxu0 0.0
        %2069 = vmatmul.mubr.f32.gmra.mrb[0].mxu0 %v2000
        %v2070 = vpop.f32.mrb[0].mxu0
        %v2071 = vadd.f32 0.0, %v2070
        %v2072 = vpop.f32.mrb[0].mxu0
        %2073 = vdwg.mxu0
        %2074 = vst.msk [vmem:[%s1572 + $0x18] sm:$0xff] %vm449, %v2071
        %v2075 = vadd.f32 %v2071, %v366
        %v2076 = vsel %vm449, %v2075, -inf
        %2077 = vmax.xlane.f32.xlu0 %v2076
        %v2078 = vpop.xlane.xlu0 %2077
        %v2079 = vsub.f32 %v2075, %v2078
        %v2080 = vmul.f32 %v2079, 1.442695
        %v2081 = vpow.pop %v2080
        %v2082 = vsel %vm449, %v2081, 0.0
        %2083 = vadd.xlane.f32.xlu0 %v2082
        %v2084 = vpop.xlane.xlu0 %2083
        %v2085 = vrcp.pop %v2084
        %v2086 = vmul.f32 %v2081, %v2085
        %2087 = vrot.lane.b32.xlu0 %v1492, 40
        %v2088 = vpop.permute.xlu0 %2087
        %v2091 = vsel %vm449, %v2086, 0
        %2093 = vmatprep.subr.mxu0 0.0
        %2094 = vmatpush1.msra.mxu0 %v2088
        %2095 = vmatprep.subr.mxu0 0.0
        %2096 = vmatpush1.msra.mxu0 0.0
        %2097 = vmatprep.subr.mxu0 0.0
        %2098 = vmatpush1.msra.mxu0 0.0
        %2099 = vmatprep.subr.mxu0 0.0
        %2100 = vmatpush1.msra.mxu0 0.0
        %2101 = vmatprep.subr.mxu0 0.0
        %2102 = vmatpush1.msra.mxu0 0.0
        %2103 = vmatprep.subr.mxu0 0.0
        %2104 = vmatpush1.msra.mxu0 0.0
        %2105 = vmatprep.subr.mxu0 0.0
        %2106 = vmatpush1.msra.mxu0 0.0
        %2107 = vmatprep.subr.mxu0 0.0
        %2108 = vmatpush1.msra.mxu0 0.0
        %2109 = vmatprep.subr.mxu0 0.0
        %2110 = vmatpush1.msra.mxu0 0.0
        %2111 = vmatprep.subr.mxu0 0.0
        %2112 = vmatpush1.msra.mxu0 0.0
        %2113 = vmatprep.subr.mxu0 0.0
        %2114 = vmatpush1.msra.mxu0 0.0
        %2115 = vmatprep.subr.mxu0 0.0
        %2116 = vmatpush1.msra.mxu0 0.0
        %2117 = vmatprep.subr.mxu0 0.0
        %2118 = vmatpush1.msra.mxu0 0.0
        %2119 = vmatprep.subr.mxu0 0.0
        %2120 = vmatpush1.msra.mxu0 0.0
        %2121 = vmatprep.subr.mxu0 0.0
        %2122 = vmatpush1.msra.mxu0 0.0
        %2123 = vmatprep.subr.mxu0 0.0
        %2124 = vmatpush1.msra.mxu0 0.0
        %2125 = vmatprep.subr.mxu0 0.0
        %2126 = vmatpush1.msra.mxu0 0.0
        %2127 = vmatprep.subr.mxu0 0.0
        %2128 = vmatpush1.msra.mxu0 0.0
        %2129 = vmatprep.subr.mxu0 0.0
        %2130 = vmatpush1.msra.mxu0 0.0
        %2131 = vmatprep.subr.mxu0 0.0
        %2132 = vmatpush1.msra.mxu0 0.0
        %2133 = vmatprep.subr.mxu0 0.0
        %2134 = vmatpush1.msra.mxu0 0.0
        %2135 = vmatprep.subr.mxu0 0.0
        %2136 = vmatpush1.msra.mxu0 0.0
        %2137 = vmatprep.subr.mxu0 0.0
        %2138 = vmatpush1.msra.mxu0 0.0
        %2139 = vmatprep.subr.mxu0 0.0
        %2140 = vmatpush1.msra.mxu0 0.0
        %2141 = vmatprep.subr.mxu0 0.0
        %2142 = vmatpush1.msra.mxu0 0.0
        %2143 = vmatprep.subr.mxu0 0.0
        %2144 = vmatpush1.msra.mxu0 0.0
        %2145 = vmatprep.subr.mxu0 0.0
        %2146 = vmatpush1.msra.mxu0 0.0
        %2147 = vmatprep.subr.mxu0 0.0
        %2148 = vmatpush1.msra.mxu0 0.0
        %2149 = vmatprep.subr.mxu0 0.0
        %2150 = vmatpush1.msra.mxu0 0.0
        %2151 = vmatprep.subr.mxu0 0.0
        %2152 = vmatpush1.msra.mxu0 0.0
        %2153 = vmatprep.subr.mxu0 0.0
        %2154 = vmatpush1.msra.mxu0 0.0
        %2155 = vmatprep.subr.mxu0 0.0
        %2156 = vmatpush1.msra.mxu0 0.0
        %2157 = vmatprep.mubr.f32.mxu0 0.0
        %2158 = vmatmul.mubr.f32.gmra.mrb[0].mxu0 %v2091
        %v2159 = vpop.f32.mrb[0].mxu0
        %v2160 = vadd.f32 0.0, %v2159
        %v2161 = vpop.f32.mrb[0].mxu0
        %2162 = vdwg.mxu0
        %2164 = vrot.lane.b32.xlu0 %v1826, 8
        %v2165 = vpop.permute.xlu0 %2164
        %2168 = vrot.lane.b32.xlu0 %v1993, 16
        %v2169 = vpop.permute.xlu0 %2168
        %2172 = vrot.lane.b32.xlu0 %v2160, 24
        %v2173 = vpop.permute.xlu0 %2172
        %v2175 = vsel %vm449, %v1659, %v2165
        %v2176 = vsel %vm1127, %v2175, %v2169
        %v2177 = vsel %vm1129, %v2176, %v2173
        %s2178 = scalar_lea.vmem %s3, 32
        %v2179 = vld [vmem:[%s2178] sm:$0xff]
        %v2180 = vld [vmem:[%s2178 + $0x8] sm:$0xff]
        %v2181 = vld [vmem:[%s2178 + $0x10] sm:$0xff]
        %v2182 = vld [vmem:[%s2178 + $0x18] sm:$0xff]
        %v2184 = vsel %vm372, %v2177, 0
        %2186 = vmatprep.subr.mxu0 0.0
        %2187 = vmatpush1.msra.mxu0 %v2179
        %2188 = vmatprep.subr.mxu0 0.0
        %2189 = vmatpush1.msra.mxu0 %v2180
        %2190 = vmatprep.subr.mxu0 0.0
        %2191 = vmatpush1.msra.mxu0 %v2181
        %2192 = vmatprep.subr.mxu0 0.0
        %2193 = vmatpush1.msra.mxu0 %v2182
        %2194 = vmatprep.subr.mxu0 0.0
        %2195 = vmatpush1.msra.mxu0 0.0
        %2196 = vmatprep.subr.mxu0 0.0
        %2197 = vmatpush1.msra.mxu0 0.0
        %2198 = vmatprep.subr.mxu0 0.0
        %2199 = vmatpush1.msra.mxu0 0.0
        %2200 = vmatprep.subr.mxu0 0.0
        %2201 = vmatpush1.msra.mxu0 0.0
        %2202 = vmatprep.subr.mxu0 0.0
        %2203 = vmatpush1.msra.mxu0 0.0
        %2204 = vmatprep.subr.mxu0 0.0
        %2205 = vmatpush1.msra.mxu0 0.0
        %2206 = vmatprep.subr.mxu0 0.0
        %2207 = vmatpush1.msra.mxu0 0.0
        %2208 = vmatprep.subr.mxu0 0.0
        %2209 = vmatpush1.msra.mxu0 0.0
        %2210 = vmatprep.subr.mxu0 0.0
        %2211 = vmatpush1.msra.mxu0 0.0
        %2212 = vmatprep.subr.mxu0 0.0
        %2213 = vmatpush1.msra.mxu0 0.0
        %2214 = vmatprep.subr.mxu0 0.0
        %2215 = vmatpush1.msra.mxu0 0.0
        %2216 = vmatprep.subr.mxu0 0.0
        %2217 = vmatpush1.msra.mxu0 0.0
        %2218 = vmatprep.subr.mxu0 0.0
        %2219 = vmatpush1.msra.mxu0 0.0
        %2220 = vmatprep.subr.mxu0 0.0
        %2221 = vmatpush1.msra.mxu0 0.0
        %2222 = vmatprep.subr.mxu0 0.0
        %2223 = vmatpush1.msra.mxu0 0.0
        %2224 = vmatprep.subr.mxu0 0.0
        %2225 = vmatpush1.msra.mxu0 0.0
        %2226 = vmatprep.subr.mxu0 0.0
        %2227 = vmatpush1.msra.mxu0 0.0
        %2228 = vmatprep.subr.mxu0 0.0
        %2229 = vmatpush1.msra.mxu0 0.0
        %2230 = vmatprep.subr.mxu0 0.0
        %2231 = vmatpush1.msra.mxu0 0.0
        %2232 = vmatprep.subr.mxu0 0.0
        %2233 = vmatpush1.msra.mxu0 0.0
        %2234 = vmatprep.subr.mxu0 0.0
        %2235 = vmatpush1.msra.mxu0 0.0
        %2236 = vmatprep.subr.mxu0 0.0
        %2237 = vmatpush1.msra.mxu0 0.0
        %2238 = vmatprep.subr.mxu0 0.0
        %2239 = vmatpush1.msra.mxu0 0.0
        %2240 = vmatprep.subr.mxu0 0.0
        %2241 = vmatpush1.msra.mxu0 0.0
        %2242 = vmatprep.subr.mxu0 0.0
        %2243 = vmatpush1.msra.mxu0 0.0
        %2244 = vmatprep.subr.mxu0 0.0
        %2245 = vmatpush1.msra.mxu0 0.0
        %2246 = vmatprep.subr.mxu0 0.0
        %2247 = vmatpush1.msra.mxu0 0.0
        %2248 = vmatprep.subr.mxu0 0.0
        %2249 = vmatpush1.msra.mxu0 0.0
        %2250 = vmatprep.mubr.f32.mxu0 0.0
        %2251 = vmatmul.mubr.f32.gmra.mrb[0].mxu0 %v2184
        %v2252 = vpop.f32.mrb[0].mxu0
        %v2253 = vadd.f32 %v1414, %v2252
        %v2254 = vpop.f32.mrb[0].mxu0
        %2255 = vdwg.mxu0
        %v2256 = vsel %vm372, %v2253, 0.0
        %2257 = vadd.xlane.f32.xlu0 %v2256
        %v2258 = vpop.xlane.xlu0 %2257
        %v2259 = vmul.f32 %v2258, %v1211
        %v2260 = vsub.f32 %v2253, %v2259
        %v2261 = vmul.f32 %v2260, %v2260
        %v2262 = vsel %vm372, %v2261, 0.0
        %2263 = vadd.xlane.f32.xlu0 %v2262
        %v2264 = vpop.xlane.xlu0 %2263
        %v2265 = vmul.f32 %v2264, %v1211
        %v2266 = vadd.f32 %v2265, 1e-05
        %v2267 = vrsqrt.pop %v2266
        %v2268 = vmul.f32 %v2260, %v2267
        %v2269 = vlaneseq
        %v2270 = vshrl.u32 %v2269, 7
        %v2271 = vsub.s32 0, %v2270
        %v2272 = vrot.slane %v1416, %v2271
        %v2273 = vmul.f32 %v2268, %v2272
        %v2274 = vlaneseq
        %v2275 = vshrl.u32 %v2274, 7
        %v2276 = vsub.s32 1, %v2275
        %v2277 = vrot.slane %v1416, %v2276
        %v2278 = vadd.f32 %v2273, %v2277
        %s2279 = scalar_lea.vmem %s4, 32
        %v2280 = vld [vmem:[%s2279] sm:$0xff]
        %v2281 = vld [vmem:[%s2279 + $0x8] sm:$0xff]
        %v2282 = vld [vmem:[%s2279 + $0x10] sm:$0xff]
        %v2283 = vld [vmem:[%s2279 + $0x18] sm:$0xff]
        %v2285 = vsel %vm372, %v2278, 0
        %2287 = vmatprep.subr.mxu0 0.0
        %2288 = vmatpush1.msra.mxu0 %v2280
        %2289 = vmatprep.subr.mxu0 0.0
        %2290 = vmatpush1.msra.mxu0 %v2281
        %2291 = vmatprep.subr.mxu0 0.0
        %2292 = vmatpush1.msra.mxu0 %v2282
        %2293 = vmatprep.subr.mxu0 0.0
        %2294 = vmatpush1.msra.mxu0 %v2283
        %2295 = vmatprep.subr.mxu0 0.0
        %2296 = vmatpush1.msra.mxu0 0.0
        %2297 = vmatprep.subr.mxu0 0.0
        %2298 = vmatpush1.msra.mxu0 0.0
        %2299 = vmatprep.subr.mxu0 0.0
        %2300 = vmatpush1.msra.mxu0 0.0
        %2301 = vmatprep.subr.mxu0 0.0
        %2302 = vmatpush1.msra.mxu0 0.0
        %2303 = vmatprep.subr.mxu0 0.0
        %2304 = vmatpush1.msra.mxu0 0.0
        %2305 = vmatprep.subr.mxu0 0.0
        %2306 = vmatpush1.msra.mxu0 0.0
        %2307 = vmatprep.subr.mxu0 0.0
        %2308 = vmatpush1.msra.mxu0 0.0
        %2309 = vmatprep.subr.mxu0 0.0
        %2310 = vmatpush1.msra.mxu0 0.0
        %2311 = vmatprep.subr.mxu0 0.0
        %2312 = vmatpush1.msra.mxu0 0.0
        %2313 = vmatprep.subr.mxu0 0.0
        %2314 = vmatpush1.msra.mxu0 0.0
        %2315 = vmatprep.subr.mxu0 0.0
        %2316 = vmatpush1.msra.mxu0 0.0
        %2317 = vmatprep.subr.mxu0 0.0
        %2318 = vmatpush1.msra.mxu0 0.0
        %2319 = vmatprep.subr.mxu0 0.0
        %2320 = vmatpush1.msra.mxu0 0.0
        %2321 = vmatprep.subr.mxu0 0.0
        %2322 = vmatpush1.msra.mxu0 0.0
        %2323 = vmatprep.subr.mxu0 0.0
        %2324 = vmatpush1.msra.mxu0 0.0
        %2325 = vmatprep.subr.mxu0 0.0
        %2326 = vmatpush1.msra.mxu0 0.0
        %2327 = vmatprep.subr.mxu0 0.0
        %2328 = vmatpush1.msra.mxu0 0.0
        %2329 = vmatprep.subr.mxu0 0.0
        %2330 = vmatpush1.msra.mxu0 0.0
        %2331 = vmatprep.subr.mxu0 0.0
        %2332 = vmatpush1.msra.mxu0 0.0
        %2333 = vmatprep.subr.mxu0 0.0
        %2334 = vmatpush1.msra.mxu0 0.0
        %2335 = vmatprep.subr.mxu0 0.0
        %2336 = vmatpush1.msra.mxu0 0.0
        %2337 = vmatprep.subr.mxu0 0.0
        %2338 = vmatpush1.msra.mxu0 0.0
        %2339 = vmatprep.subr.mxu0 0.0
        %2340 = vmatpush1.msra.mxu0 0.0
        %2341 = vmatprep.subr.mxu0 0.0
        %2342 = vmatpush1.msra.mxu0 0.0
        %2343 = vmatprep.subr.mxu0 0.0
        %2344 = vmatpush1.msra.mxu0 0.0
        %2345 = vmatprep.subr.mxu0 0.0
        %2346 = vmatpush1.msra.mxu0 0.0
        %2347 = vmatprep.subr.mxu0 0.0
        %2348 = vmatpush1.msra.mxu0 0.0
        %2349 = vmatprep.subr.mxu0 0.0
        %2350 = vmatpush1.msra.mxu0 0.0
        %2351 = vmatprep.mubr.f32.mxu0 0.0
        %2352 = vmatmul.mubr.f32.gmra.mrb[0].mxu0 %v2285
        %v2353 = vpop.f32.mrb[0].mxu0
        %v2354 = vadd.f32 0.0, %v2353
        %v2355 = vpop.f32.mrb[0].mxu0
        %2356 = vdwg.mxu0
        %v2357 = vmax.f32 %v2354, 0.0
        %s2358 = scalar_lea.vmem %s5, 64
        %v2359 = vld [vmem:[%s2358] sm:$0xff]
        %v2360 = vld [vmem:[%s2358 + $0x8] sm:$0xff]
        %v2361 = vld [vmem:[%s2358 + $0x10] sm:$0xff]
        %v2362 = vld [vmem:[%s2358 + $0x18] sm:$0xff]
        %v2363 = vld [vmem:[%s2358 + $0x20] sm:$0xff]
        %v2364 = vld [vmem:[%s2358 + $0x28] sm:$0xff]
        %v2365 = vld [vmem:[%s2358 + $0x30] sm:$0xff]
        %v2366 = vld [vmem:[%s2358 + $0x38] sm:$0xff]
        %v2368 = vsel %vm1318, %v2357, 0
        %2370 = vmatprep.subr.mxu0 0.0
        %2371 = vmatpush1.msra.mxu0 %v2359
        %2372 = vmatprep.subr.mxu0 0.0
        %2373 = vmatpush1.msra.mxu0 %v2360
        %2374 = vmatprep.subr.mxu0 0.0
        %2375 = vmatpush1.msra.mxu0 %v2361
        %2376 = vmatprep.subr.mxu0 0.0
        %2377 = vmatpush1.msra.mxu0 %v2362
        %2378 = vmatprep.subr.mxu0 0.0
        %2379 = vmatpush1.msra.mxu0 %v2363
        %2380 = vmatprep.subr.mxu0 0.0
        %2381 = vmatpush1.msra.mxu0 %v2364
        %2382 = vmatprep.subr.mxu0 0.0
        %2383 = vmatpush1.msra.mxu0 %v2365
        %2384 = vmatprep.subr.mxu0 0.0
        %2385 = vmatpush1.msra.mxu0 %v2366
        %2386 = vmatprep.subr.mxu0 0.0
        %2387 = vmatpush1.msra.mxu0 0.0
        %2388 = vmatprep.subr.mxu0 0.0
        %2389 = vmatpush1.msra.mxu0 0.0
        %2390 = vmatprep.subr.mxu0 0.0
        %2391 = vmatpush1.msra.mxu0 0.0
        %2392 = vmatprep.subr.mxu0 0.0
        %2393 = vmatpush1.msra.mxu0 0.0
        %2394 = vmatprep.subr.mxu0 0.0
        %2395 = vmatpush1.msra.mxu0 0.0
        %2396 = vmatprep.subr.mxu0 0.0
        %2397 = vmatpush1.msra.mxu0 0.0
        %2398 = vmatprep.subr.mxu0 0.0
        %2399 = vmatpush1.msra.mxu0 0.0
        %2400 = vmatprep.subr.mxu0 0.0
        %2401 = vmatpush1.msra.mxu0 0.0
        %2402 = vmatprep.subr.mxu0 0.0
        %2403 = vmatpush1.msra.mxu0 0.0
        %2404 = vmatprep.subr.mxu0 0.0
        %2405 = vmatpush1.msra.mxu0 0.0
        %2406 = vmatprep.subr.mxu0 0.0
        %2407 = vmatpush1.msra.mxu0 0.0
        %2408 = vmatprep.subr.mxu0 0.0
        %2409 = vmatpush1.msra.mxu0 0.0
        %2410 = vmatprep.subr.mxu0 0.0
        %2411 = vmatpush1.msra.mxu0 0.0
        %2412 = vmatprep.subr.mxu0 0.0
        %2413 = vmatpush1.msra.mxu0 0.0
        %2414 = vmatprep.subr.mxu0 0.0
        %2415 = vmatpush1.msra.mxu0 0.0
        %2416 = vmatprep.subr.mxu0 0.0
        %2417 = vmatpush1.msra.mxu0 0.0
        %2418 = vmatprep.subr.mxu0 0.0
        %2419 = vmatpush1.msra.mxu0 0.0
        %2420 = vmatprep.subr.mxu0 0.0
        %2421 = vmatpush1.msra.mxu0 0.0
        %2422 = vmatprep.subr.mxu0 0.0
        %2423 = vmatpush1.msra.mxu0 0.0
        %2424 = vmatprep.subr.mxu0 0.0
        %2425 = vmatpush1.msra.mxu0 0.0
        %2426 = vmatprep.subr.mxu0 0.0
        %2427 = vmatpush1.msra.mxu0 0.0
        %2428 = vmatprep.subr.mxu0 0.0
        %2429 = vmatpush1.msra.mxu0 0.0
        %2430 = vmatprep.subr.mxu0 0.0
        %2431 = vmatpush1.msra.mxu0 0.0
        %2432 = vmatprep.subr.mxu0 0.0
        %2433 = vmatpush1.msra.mxu0 0.0
        %2434 = vmatprep.mubr.f32.mxu0 0.0
        %2435 = vmatmul.mubr.f32.gmra.mrb[0].mxu0 %v2368
        %v2436 = vpop.f32.mrb[0].mxu0
        %v2437 = vadd.f32 %v2278, %v2436
        %v2438 = vpop.f32.mrb[0].mxu0
        %2439 = vdwg.mxu0
        %v2440 = vsel %vm372, %v2437, 0.0
        %2441 = vadd.xlane.f32.xlu0 %v2440
        %v2442 = vpop.xlane.xlu0 %2441
        %v2443 = vmul.f32 %v2442, %v1211
        %v2444 = vsub.f32 %v2437, %v2443
        %v2445 = vmul.f32 %v2444, %v2444
        %v2446 = vsel %vm372, %v2445, 0.0
        %2447 = vadd.xlane.f32.xlu0 %v2446
        %v2448 = vpop.xlane.xlu0 %2447
        %v2449 = vmul.f32 %v2448, %v1211
        %v2450 = vadd.f32 %v2449, 1e-05
        %v2451 = vrsqrt.pop %v2450
        %v2452 = vmul.f32 %v2444, %v2451
        %v2453 = vlaneseq
        %v2454 = vshrl.u32 %v2453, 7
        %v2455 = vsub.s32 2, %v2454
        %v2456 = vrot.slane %v1416, %v2455
        %v2457 = vmul.f32 %v2452, %v2456
        %v2458 = vlaneseq
        %v2459 = vshrl.u32 %v2458, 7
        %v2460 = vsub.s32 3, %v2459
        %v2461 = vrot.slane %v1416, %v2460
        %v2462 = vadd.f32 %v2457, %v2461
        %2463 = vst.msk [vmem:[%s358] sm:$0xff] %vm372, %v2462
        %s2464 = sand.u32 %s194, 1
        %s2465 = scalar_lea.sflag [#allocation4], %s2464
        %s2466 = sand.u32 %s194, 1
        %s2467 = smul.addr %s2466, 8
        %s2468 = scalar_lea.vmem [#allocation7], %s2467
        %s2469 = sand.u32 %s220, 1
        %s2470 = sand.u32 %s220, 1
        %s2471 = smul.addr %s2470, 64
        %s2472 = scalar_lea.vmem [#allocation8], %s2471
        // Predicated region
        $region57: #{tpu_custom_call.1} parent=47 // pred_check
          %p2473 = pneg %p204
        $region58: #{tpu_custom_call.1} parent=47 // pred_check_branch
          %2475 = sbr.rel (%p2473) target = $region60
        $region59: #{tpu_custom_call.1} parent=47 // pred_region
          %s2477 = ssub.s32 128, 128
          %2478 = vsyncadd %s2465, %s2477
          %s2479 = smul.addr %s29, 128
          %s2480 = scalar_lea.hbm %s7, %s2479
          %s2482 = sshll.u32 %s2468, 4
          %s2483 = int_to_ptr.vmem [resolvable:$true] %s2482
          %2485 = dma.vmem_to_hbm [thread:$0]  %s2483, 128, %s2480, %s2465
        $region60: #{tpu_custom_call.1} parent=47 // pred_fallthru
          _
        // Predicated region
        $region61: #{tpu_custom_call.1} parent=47 // pred_check
          %p2486 = pneg %p230
        $region62: #{tpu_custom_call.1} parent=47 // pred_check_branch
          %2488 = sbr.rel (%p2486) target = $region64
        $region63: #{tpu_custom_call.1} parent=47 // pred_region
          %s2489 = smul.addr %s29, 4
          %s2490 = smul.addr %s2489, 8
          %s2491 = scalar_lea.vmem %s8, %s2490
          // Predicated region
          $region65: #{tpu_custom_call.1} parent=63 // pred_check
            _
          $region66: #{tpu_custom_call.1} parent=63 // pred_check_branch
            %2493 = sbr.rel (0) target = $region68
          $region67: #{tpu_custom_call.1} parent=63 // pred_region
            // Predicated region
            $region69: #{tpu_custom_call.1} parent=67 // pred_check
              _
            $region70: #{tpu_custom_call.1} parent=67 // pred_check_branch
              %2495 = sbr.rel (0) target = $region72
            $region71: #{tpu_custom_call.1} parent=67 // pred_region
              // Predicated region
              $region84: #{tpu_custom_call.1} parent=71 // pred_check
                _
              $region85: #{tpu_custom_call.1} parent=71 // pred_check_branch
                %2524 = sbr.rel (0) target = $region87
              $region86: #{tpu_custom_call.1} parent=71 // pred_region
                loop: start=0, step=1, limit=1
                $region88: #{tpu_custom_call.1} parent=86 // loop_pre_header
                  _
                $region89: #{tpu_custom_call.1} parent=86 // loop_header
                  %s2526 = sphi 0, %s2530
                  %p2527 = scmp.ge.s32.totalorder %s2526, 1
                  %s2531 = sphi %s2472, %s2472
                  %s2532 = sphi %s2491, %s2491
                $region90: #{tpu_custom_call.1} parent=86 // loop_header_branch
                  %2529 = sbr.rel (%p2527) target = $region94
                $region91: #{tpu_custom_call.1} parent=86 // loop_body
                  %v2533 = vld [vmem:[%s2531] sm:$0xff]
                  %2534 = vst [vmem:[%s2532] sm:$0xff] %v2533
                  %v2535 = vld [vmem:[%s2531 + $0x8] sm:$0xff]
                  %2536 = vst [vmem:[%s2532 + $0x8] sm:$0xff] %v2535
                  %v2537 = vld [vmem:[%s2531 + $0x10] sm:$0xff]
                  %2538 = vst [vmem:[%s2532 + $0x10] sm:$0xff] %v2537
                  %v2539 = vld [vmem:[%s2531 + $0x18] sm:$0xff]
                  %2540 = vst [vmem:[%s2532 + $0x18] sm:$0xff] %v2539
                  %v2541 = vld [vmem:[%s2531 + $0x20] sm:$0xff]
                  %2542 = vst [vmem:[%s2532 + $0x40] sm:$0xff] %v2541
                  %v2543 = vld [vmem:[%s2531 + $0x28] sm:$0xff]
                  %2544 = vst [vmem:[%s2532 + $0x48] sm:$0xff] %v2543
                  %v2545 = vld [vmem:[%s2531 + $0x30] sm:$0xff]
                  %2546 = vst [vmem:[%s2532 + $0x50] sm:$0xff] %v2545
                  %v2547 = vld [vmem:[%s2531 + $0x38] sm:$0xff]
                  %2548 = vst [vmem:[%s2532 + $0x58] sm:$0xff] %v2547
                $region92: #{tpu_custom_call.1} parent=86 // loop_footer
                  %s2530 = sadd.s32 1, %s2526
                $region93: #{tpu_custom_call.1} parent=86 // loop_footer_branch
                  %2525 = sbr.rel target = $region89
                $region94: #{tpu_custom_call.1} parent=86 // loop_exit
                  _
              $region87: #{tpu_custom_call.1} parent=71 // pred_fallthru
                _
              // Predicated region
              $region95: #{tpu_custom_call.1} parent=71 // pred_check
                _
              $region96: #{tpu_custom_call.1} parent=71 // pred_check_branch
                %2550 = sbr.rel target = $region98
              $region97: #{tpu_custom_call.1} parent=71 // pred_region
                _
              $region98: #{tpu_custom_call.1} parent=71 // pred_fallthru
                _
            $region72: #{tpu_custom_call.1} parent=67 // pred_fallthru
              _
            // Predicated region
            $region73: #{tpu_custom_call.1} parent=67 // pred_check
              _
            $region74: #{tpu_custom_call.1} parent=67 // pred_check_branch
              %2497 = sbr.rel target = $region76
            $region75: #{tpu_custom_call.1} parent=67 // pred_region
              loop: start=0, step=1, limit=1
              $region77: #{tpu_custom_call.1} parent=75 // loop_pre_header
                _
              $region78: #{tpu_custom_call.1} parent=75 // loop_header
                %s2500 = sphi 0, %s2504
                %p2501 = scmp.ge.s32.totalorder %s2500, 1
                %s2505 = sphi %s2472, %s2472
                %s2506 = sphi %s2491, %s2491
              $region79: #{tpu_custom_call.1} parent=75 // loop_header_branch
                %2503 = sbr.rel (%p2501) target = $region83
              $region80: #{tpu_custom_call.1} parent=75 // loop_body
                %v2507 = vld [vmem:[%s2505] sm:$0xff]
                %2508 = vst [vmem:[%s2506] sm:$0xff] %v2507
                %v2509 = vld [vmem:[%s2505 + $0x8] sm:$0xff]
                %2510 = vst [vmem:[%s2506 + $0x8] sm:$0xff] %v2509
                %v2511 = vld [vmem:[%s2505 + $0x10] sm:$0xff]
                %2512 = vst [vmem:[%s2506 + $0x10] sm:$0xff] %v2511
                %v2513 = vld [vmem:[%s2505 + $0x18] sm:$0xff]
                %2514 = vst [vmem:[%s2506 + $0x18] sm:$0xff] %v2513
                %v2515 = vld [vmem:[%s2505 + $0x20] sm:$0xff]
                %2516 = vst [vmem:[%s2506 + $0x40] sm:$0xff] %v2515
                %v2517 = vld [vmem:[%s2505 + $0x28] sm:$0xff]
                %2518 = vst [vmem:[%s2506 + $0x48] sm:$0xff] %v2517
                %v2519 = vld [vmem:[%s2505 + $0x30] sm:$0xff]
                %2520 = vst [vmem:[%s2506 + $0x50] sm:$0xff] %v2519
                %v2521 = vld [vmem:[%s2505 + $0x38] sm:$0xff]
                %2522 = vst [vmem:[%s2506 + $0x58] sm:$0xff] %v2521
              $region81: #{tpu_custom_call.1} parent=75 // loop_footer
                %s2504 = sadd.s32 1, %s2500
              $region82: #{tpu_custom_call.1} parent=75 // loop_footer_branch
                %2499 = sbr.rel target = $region78
              $region83: #{tpu_custom_call.1} parent=75 // loop_exit
                _
            $region76: #{tpu_custom_call.1} parent=67 // pred_fallthru
              _
          $region68: #{tpu_custom_call.1} parent=63 // pred_fallthru
            _
          %2551 = vnop
        $region64: #{tpu_custom_call.1} parent=47 // pred_fallthru
          _
      $region48: #{tpu_custom_call.1} parent=5 // pred_fallthru
        _
      %p2552 = scmp.le.s32.totalorder 2, %s24
      // Predicated region
      $region99: #{tpu_custom_call.1} parent=5 // pred_check
        %p2553 = pneg %p2552
      $region100: #{tpu_custom_call.1} parent=5 // pred_check_branch
        %2555 = sbr.rel (%p2553) target = $region102
      $region101: #{tpu_custom_call.1} parent=5 // pred_region
        %s2556 = ssub.s32 %s24, 2
        // Predicated region
        $region103: #{tpu_custom_call.1} parent=101 // pred_check
          %p2557 = pneg %p210
        $region104: #{tpu_custom_call.1} parent=101 // pred_check_branch
          %2559 = sbr.rel (%p2557) target = $region106
        $region105: #{tpu_custom_call.1} parent=101 // pred_region
          %s2560 = sand.u32 %s195, 1
          %s2561 = scalar_lea.sflag [#allocation4], %s2560
          %s2562 = sand.u32 %s195, 1
          %s2563 = smul.addr %s2562, 8
          %s2564 = scalar_lea.vmem [#allocation7], %s2563
          %2565 = dma.done %s2561, 128
        $region106: #{tpu_custom_call.1} parent=101 // pred_fallthru
          _
        // Predicated region
        $region107: #{tpu_custom_call.1} parent=101 // pred_check
          %p2566 = pneg %p236
        $region108: #{tpu_custom_call.1} parent=101 // pred_check_branch
          %2568 = sbr.rel (%p2566) target = $region110
        $region109: #{tpu_custom_call.1} parent=101 // pred_region
          %s2569 = sand.u32 %s221, 1
          %s2570 = sand.u32 %s221, 1
          %s2571 = smul.addr %s2570, 64
          %s2572 = scalar_lea.vmem [#allocation8], %s2571
        $region110: #{tpu_custom_call.1} parent=101 // pred_fallthru
          _
      $region102: #{tpu_custom_call.1} parent=5 // pred_fallthru
        _
    $region6: #{tpu_custom_call.1} parent=1 // loop_footer
      %s28 = sadd.s32 1, %s24
    $region7: #{tpu_custom_call.1} parent=1 // loop_footer_branch
      %23 = sbr.rel target = $region3
    $region8: #{tpu_custom_call.1} parent=1 // loop_exit
      _
    %2573 = vsyncpa [#allocation3], 1
    %s2574 = scalar_lea.sflag [#allocation3], 1
    %2575 = vsyncpa %s2574, 1
    %2576 = vsyncpa [#allocation6], 1
    %s2577 = scalar_lea.sflag [#allocation6], 1
    %2578 = vsyncpa %s2577, 1
    %2579 = vsyncpa [#allocation4], 1
    %s2580 = scalar_lea.sflag [#allocation4], 1
    %2581 = vsyncpa %s2580, 1

</llo_original>
